<compile_context>
chip_gen: v6e
topology: v6e:2x2x1
jax: 0.10.0
libtpu: 0.0.40
codegen_flags: <defaults>
</compile_context>

<pallas_src>
import functools
from collections import namedtuple

import jax
import jax.numpy as jnp
from jax.experimental import pallas as pl
from jax.experimental.pallas import tpu as pltpu

LossOutput = namedtuple(
    "LossOutput",
    ["loss", "x_reconstruct", "acts1", "l2_loss", "l1_loss", "l0_norm",
     "acts2", "l1_loss_W", "x_reconstruct2", "l0_norm_1", "l0_norm_2"],
)

_N_PART_LANES = 128  # lane-dense partials block (only lanes 0..5 used)


def _sae_kernel(x_ref, we1_ref, we2_ref, wd1_ref, wd2_ref,
                be1_ref, be2_ref, bd1_ref, bd2_ref,
                xr1_ref, xr2_ref, a1_ref, a2_ref, part_ref,
                *, compute_dtype):
    x = x_ref[...].astype(jnp.float32)                       # [TB, D]
    b_dec1 = bd1_ref[...].astype(jnp.float32)                # [1, D]
    b_dec2 = bd2_ref[...].astype(jnp.float32)                # [1, D]

    # x_cent = x - (b_dec1 + b_dec2) / 2
    x_cent = x - (b_dec1 + b_dec2) * 0.5

    # MXU matmuls: LHS cast once to the (possibly bf16) weight dtype,
    # accumulation always f32.  Element-wise math stays f32.
    acts1 = jnp.maximum(
        jnp.dot(x_cent.astype(compute_dtype), we1_ref[...],
                preferred_element_type=jnp.float32)
        + be1_ref[...].astype(jnp.float32), 0.0)             # [TB, H1]
    acts1_c = acts1.astype(compute_dtype)                    # single cast, reused
    acts2 = jnp.maximum(
        jnp.dot(acts1_c, we2_ref[...],
                preferred_element_type=jnp.float32)
        + be2_ref[...].astype(jnp.float32), 0.0)             # [TB, H2]
    xr1 = jnp.dot(acts1_c, wd1_ref[...],
                  preferred_element_type=jnp.float32) + b_dec1   # [TB, D]
    xr2 = jnp.dot(acts2.astype(compute_dtype), wd2_ref[...],
                  preferred_element_type=jnp.float32) + b_dec2   # [TB, D]

    a1_ref[...] = acts1.astype(a1_ref.dtype)
    a2_ref[...] = acts2.astype(a2_ref.dtype)
    xr1_ref[...] = xr1.astype(xr1_ref.dtype)
    xr2_ref[...] = xr2.astype(xr2_ref.dtype)

    # Per-tile partial reductions (raw sums; finalized in the wrapper so the
    # batch grid axis can stay "parallel").
    partials = (
        jnp.sum((xr1 - x) ** 2),                                 # lane 0: sum sq 1
        jnp.sum((xr2 - x) ** 2),                                 # lane 1: sum sq 2
        jnp.sum(jnp.abs(acts1)),                                 # lane 2: |acts1|
        jnp.sum(jnp.abs(acts2)),                                 # lane 3: |acts2|
        jnp.sum((acts1 > 0.0).astype(jnp.float32)),              # lane 4: l0 count 1
        jnp.sum((acts2 > 0.0).astype(jnp.float32)),              # lane 5: l0 count 2
    )
    lane = jax.lax.broadcasted_iota(jnp.int32, (1, 1, _N_PART_LANES), 2)
    out = jnp.zeros((1, 1, _N_PART_LANES), jnp.float32)
    for idx, val in enumerate(partials):
        out = out + jnp.where(lane == idx, val, 0.0)
    part_ref[...] = out


def _pick_batch_tile(batch):
    for t in (256, 128, 64, 32, 16, 8):
        if batch % t == 0:
            return t
    return batch  # odd batch: single full-batch block (full-dim block is legal)


def autoencoder_forward(x, params, *, l1_coeff, l1_coeff_w, fraction=1.0,
                        weight_dtype=None, batch_tile=None):
    """AutoEncoder forward pass as a batch-gridded Pallas kernel."""
    W_enc1, W_enc2, W_dec1, W_dec2, b_enc1, b_enc2, b_dec1, b_dec2 = params
    B, D = x.shape
    H1 = W_enc1.shape[1]
    H2 = W_enc2.shape[1]

    if weight_dtype is None:
        weight_dtype = W_enc1.dtype
    weight_dtype = jnp.dtype(weight_dtype)

    # Weights (the dominant HBM/VMEM traffic at small batch) optionally in bf16.
    we1 = W_enc1.astype(weight_dtype)
    we2 = W_enc2.astype(weight_dtype)
    wd1 = W_dec1.astype(weight_dtype)
    wd2 = W_dec2.astype(weight_dtype)

    TB = batch_tile if batch_tile is not None else _pick_batch_tile(B)
    assert B % TB == 0, f"batch {B} must be divisible by batch tile {TB}"
    nt = B // TB

    kernel = functools.partial(_sae_kernel, compute_dtype=weight_dtype)

    in_specs = [
        pl.BlockSpec((TB, D), lambda i: (i, 0)),     # x          (streamed)
        pl.BlockSpec((D, H1), lambda i: (0, 0)),     # W_enc1     (resident)
        pl.BlockSpec((H1, H2), lambda i: (0, 0)),    # W_enc2     (resident)
        pl.BlockSpec((H1, D), lambda i: (0, 0)),     # W_dec1     (resident)
        pl.BlockSpec((H2, D), lambda i: (0, 0)),     # W_dec2     (resident)
        pl.BlockSpec((1, H1), lambda i: (0, 0)),     # b_enc1
        pl.BlockSpec((1, H2), lambda i: (0, 0)),     # b_enc2
        pl.BlockSpec((1, D), lambda i: (0, 0)),      # b_dec1
        pl.BlockSpec((1, D), lambda i: (0, 0)),      # b_dec2
    ]
    out_specs = (
        pl.BlockSpec((TB, D), lambda i: (i, 0)),                   # x_reconstruct
        pl.BlockSpec((TB, D), lambda i: (i, 0)),                   # x_reconstruct2
        pl.BlockSpec((TB, H1), lambda i: (i, 0)),                  # acts1
        pl.BlockSpec((TB, H2), lambda i: (i, 0)),                  # acts2
        pl.BlockSpec((1, 1, _N_PART_LANES), lambda i: (i, 0, 0)),  # loss partials
    )
    out_shapes = (
        jax.ShapeDtypeStruct((B, D), jnp.float32),
        jax.ShapeDtypeStruct((B, D), jnp.float32),
        jax.ShapeDtypeStruct((B, H1), jnp.float32),
        jax.ShapeDtypeStruct((B, H2), jnp.float32),
        jax.ShapeDtypeStruct((nt, 1, _N_PART_LANES), jnp.float32),
    )

    # VMEM budget: resident weights/biases (x2 buffers to be conservative)
    # + double-buffered per-tile arrays, with headroom.  Floor at 32 MiB,
    # cap at 64 MiB so the same request is legal on v5e/v6e AND v7x (64 MiB
    # physical VMEM per TensorCore).
    w_itemsize = weight_dtype.itemsize
    w_elems = D * H1 + H1 * H2 + H1 * D + H2 * D
    b_elems = H1 + H2 + 2 * D
    tile_elems = TB * (3 * D + H1 + H2) + _N_PART_LANES
    vmem_est = 2 * (w_elems + b_elems) * w_itemsize + 2 * tile_elems * 4
    vmem_limit = int(min(64 * (1 << 20), max(2 * vmem_est, 32 * (1 << 20))))

    flops = 2 * B * (D * H1 + H1 * H2 + H1 * D + H2 * D)
    bytes_accessed = ((w_elems + b_elems) * w_itemsize
                      + B * D * x.dtype.itemsize
                      + 4 * (2 * B * D + B * H1 + B * H2 + nt * _N_PART_LANES))
    cost = pl.CostEstimate(flops=flops, transcendentals=0,
                           bytes_accessed=int(bytes_accessed))

    xr1, xr2, acts1, acts2, parts = pl.pallas_call(
        kernel,
        out_shape=out_shapes,
        grid=(nt,),
        in_specs=in_specs,
        out_specs=out_specs,
        compiler_params=pltpu.CompilerParams(
            dimension_semantics=("parallel",),
            vmem_limit_bytes=vmem_limit),
        cost_estimate=cost,
    )(
        x, we1, we2, wd1, wd2,
        b_enc1.reshape(1, -1), b_enc2.reshape(1, -1),
        b_dec1.reshape(1, -1), b_dec2.reshape(1, -1),
    )

    # Finalize scalar losses from per-tile partials (global batch B, not per-tile).
    p = jnp.sum(parts, axis=(0, 1))            # (128,)
    sum_sq1, sum_sq2 = p[0], p[1]
    sum_abs1, sum_abs2 = p[2], p[3]
    cnt1, cnt2 = p[4], p[5]

    inv_b = 1.0 / B
    l2_loss_1 = sum_sq1 * inv_b
    l2_loss_2 = sum_sq2 * inv_b
    l2_loss = (l2_loss_1 + l2_loss_2) * 0.5
    l1_loss_1 = l1_coeff * sum_abs1 * fraction
    l1_loss_2 = l1_coeff * sum_abs2 * fraction
    l1_loss = (l1_loss_1 + l1_loss_2) * 0.5
    # Hoisted out of the per-batch-tile kernel (depends only on the weights).
    l1_loss_W = l1_coeff_w * jnp.sum(jnp.abs(W_enc2.astype(jnp.float32))) * fraction
    l0_norm_1 = cnt1 * inv_b
    l0_norm_2 = cnt2 * inv_b
    l0_norm = (l0_norm_1 + l0_norm_2) * 0.5
    loss = l2_loss + l1_loss + l1_loss_W

    return LossOutput(
        loss=loss, x_reconstruct=xr1, acts1=acts1, l2_loss=l2_loss,
        l1_loss=l1_loss, l0_norm=l0_norm, acts2=acts2, l1_loss_W=l1_loss_W,
        x_reconstruct2=xr2, l0_norm_1=l0_norm_1, l0_norm_2=l0_norm_2,
    )


def init_params(key, act_size, dict_size, dtype=jnp.float32):
    """Deterministic init matching the module's parameter shapes."""
    d_hidden1 = dict_size
    d_hidden2 = dict_size // 4
    k1, k2, k3, k4 = jax.random.split(key, 4)

    def kaiming(k, fan_in, shape):
        bound = (6.0 / fan_in) ** 0.5
        return jax.random.uniform(k, shape, dtype, minval=-bound, maxval=bound)

    W_enc1 = kaiming(k1, act_size, (act_size, d_hidden1))
    W_enc2 = kaiming(k2, d_hidden1, (d_hidden1, d_hidden2))
    W_dec1 = kaiming(k3, d_hidden1, (d_hidden1, act_size))
    W_dec2 = kaiming(k4, d_hidden2, (d_hidden2, act_size))
    W_dec1 = W_dec1 / jnp.linalg.norm(W_dec1, axis=-1, keepdims=True)
    W_dec2 = W_dec2 / jnp.linalg.norm(W_dec2, axis=-1, keepdims=True)
    b_enc1 = jnp.zeros((d_hidden1,), dtype)
    b_enc2 = jnp.zeros((d_hidden2,), dtype)
    b_dec1 = jnp.zeros((act_size,), dtype)
    b_dec2 = jnp.zeros((act_size,), dtype)
    return (W_enc1, W_enc2, W_dec1, W_dec2, b_enc1, b_enc2, b_dec1, b_dec2)


def reference_forward(x, params, *, l1_coeff, l1_coeff_w, fraction=1.0,
                      weight_dtype=None):
    """Pure-JAX reference mirroring the PyTorch forward (for validation)."""
    W_enc1, W_enc2, W_dec1, W_dec2, b_enc1, b_enc2, b_dec1, b_dec2 = params
    if weight_dtype is not None:
        wd = jnp.dtype(weight_dtype)
        we1, we2, wde1, wde2 = (W_enc1.astype(wd), W_enc2.astype(wd),
                                W_dec1.astype(wd), W_dec2.astype(wd))
    else:
        we1, we2, wde1, wde2 = W_enc1, W_enc2, W_dec1, W_dec2
    x_cent = x - (b_dec1 + b_dec2) / 2
    acts1 = jax.nn.relu(jnp.dot(x_cent.astype(we1.dtype), we1,
                                preferred_element_type=jnp.float32) + b_enc1)
    acts2 = jax.nn.relu(jnp.dot(acts1.astype(we2.dtype), we2,
                                preferred_element_type=jnp.float32) + b_enc2)
    xr1 = jnp.dot(acts1.astype(wde1.dtype), wde1,
                  preferred_element_type=jnp.float32) + b_dec1
    xr2 = jnp.dot(acts2.astype(wde2.dtype), wde2,
                  preferred_element_type=jnp.float32) + b_dec2
    l2_1 = jnp.mean(jnp.sum((xr1 - x) ** 2, axis=-1))
    l2_2 = jnp.mean(jnp.sum((xr2 - x) ** 2, axis=-1))
    l2 = (l2_1 + l2_2) / 2
    l1 = (l1_coeff * jnp.sum(jnp.abs(acts1)) * fraction
          + l1_coeff * jnp.sum(jnp.abs(acts2)) * fraction) / 2
    l1_W = l1_coeff_w * jnp.sum(jnp.abs(W_enc2.astype(jnp.float32))) * fraction
    l0_1 = jnp.sum(acts1 > 0) / x.shape[0]
    l0_2 = jnp.sum(acts2 > 0) / x.shape[0]
    loss = l2 + l1 + l1_W
    return loss, xr1, xr2, acts1, acts2, l2, l1, l1_W, l0_1, l0_2


if __name__ == "__main__":
    # Small shapes consistent with the module:
    #   act_size=128, dict_size=512 -> d_hidden1=512, d_hidden2=128
    #   batch=512 -> two grid steps of 256 rows (exercises the batch pipeline)
    ACT_SIZE = 128
    DICT_SIZE = 512
    BATCH = 512
    L1_COEFF = 0.002
    L1_COEFF_W = 0.002

    key = jax.random.PRNGKey(0)
    k_x, k_p = jax.random.split(key)
    x = jax.random.normal(k_x, (BATCH, ACT_SIZE), jnp.float32)
    params = init_params(k_p, ACT_SIZE, DICT_SIZE)

    # ---- f32 weights: tight validation against the pure-JAX reference ----
    out = autoencoder_forward(x, params, l1_coeff=L1_COEFF,
                              l1_coeff_w=L1_COEFF_W, fraction=1.0)
    jax.block_until_ready(out)

    (r_loss, r_xr1, r_xr2, r_a1, r_a2,
     r_l2, r_l1, r_l1w, r_l0_1, r_l0_2) = reference_forward(
        x, params, l1_coeff=L1_COEFF, l1_coeff_w=L1_COEFF_W, fraction=1.0)

    assert jnp.allclose(out.x_reconstruct, r_xr1, rtol=1e-5, atol=1e-5)
    assert jnp.allclose(out.x_reconstruct2, r_xr2, rtol=1e-5, atol=1e-5)
    assert jnp.allclose(out.acts1, r_a1, rtol=1e-5, atol=1e-5)
    assert jnp.allclose(out.acts2, r_a2, rtol=1e-5, atol=1e-5)
    assert jnp.allclose(out.loss, r_loss, rtol=1e-4, atol=1e-4)
    assert jnp.allclose(out.l2_loss, r_l2, rtol=1e-4, atol=1e-4)
    assert jnp.allclose(out.l1_loss, r_l1, rtol=1e-4, atol=1e-4)
    assert jnp.allclose(out.l1_loss_W, r_l1w, rtol=1e-4, atol=1e-4)
    assert jnp.allclose(out.l0_norm_1, r_l0_1, rtol=1e-3, atol=1e-2)
    assert jnp.allclose(out.l0_norm_2, r_l0_2, rtol=1e-3, atol=1e-2)

    # ---- bf16 weights (performance config): half the weight HBM/VMEM
    #      traffic, 2x MXU rate; f32 accumulation; looser tolerance. ----
    out_bf16 = autoencoder_forward(x, params, l1_coeff=L1_COEFF,
                                   l1_coeff_w=L1_COEFF_W, fraction=1.0,
                                   weight_dtype=jnp.bfloat16)
    jax.block_until_ready(out_bf16)
    ref_bf16 = reference_forward(x, params, l1_coeff=L1_COEFF,
                                 l1_coeff_w=L1_COEFF_W, fraction=1.0,
                                 weight_dtype=jnp.bfloat16)
    assert jnp.allclose(out_bf16.loss, ref_bf16[0], rtol=2e-2, atol=2e-2)
    assert jnp.allclose(out_bf16.x_reconstruct, ref_bf16[1], rtol=2e-2, atol=2e-2)
    assert jnp.allclose(out_bf16.x_reconstruct2, ref_bf16[2], rtol=2e-2, atol=2e-2)

    print("KERNEL_OK")
</pallas_src>

<mosaic_0001>
module attributes {stable_mosaic.version = 11 : i64} {
  func.func @_sae_kernel(%arg0: i32, %arg1: memref<256x128xf32, #tpu.memory_space<vmem>>, %arg2: memref<128x512xf32, #tpu.memory_space<vmem>>, %arg3: memref<512x128xf32, #tpu.memory_space<vmem>>, %arg4: memref<512x128xf32, #tpu.memory_space<vmem>>, %arg5: memref<128x128xf32, #tpu.memory_space<vmem>>, %arg6: memref<1x512xf32, #tpu.memory_space<vmem>>, %arg7: memref<1x128xf32, #tpu.memory_space<vmem>>, %arg8: memref<1x128xf32, #tpu.memory_space<vmem>>, %arg9: memref<1x128xf32, #tpu.memory_space<vmem>>, %arg10: memref<256x128xf32, #tpu.memory_space<vmem>>, %arg11: memref<256x128xf32, #tpu.memory_space<vmem>>, %arg12: memref<256x512xf32, #tpu.memory_space<vmem>>, %arg13: memref<256x128xf32, #tpu.memory_space<vmem>>, %arg14: memref<1x1x128xf32, #tpu.memory_space<vmem>>) attributes {dimension_semantics = [#tpu.dimension_semantics<parallel>], iteration_bounds = array<i64: 2>, scalar_prefetch = 0 : i64, scratch_operands = 0 : i64, tpu.core_type = #tpu.core_type<tc>, window_params = [{transform_indices = @transform_0, window_bounds = array<i64: 256, 128>}, {pipeline_mode = #tpu.pipeline_mode<synchronous>, transform_indices = @transform_1, window_bounds = array<i64: 128, 512>}, {pipeline_mode = #tpu.pipeline_mode<synchronous>, transform_indices = @transform_2, window_bounds = array<i64: 512, 128>}, {pipeline_mode = #tpu.pipeline_mode<synchronous>, transform_indices = @transform_3, window_bounds = array<i64: 512, 128>}, {pipeline_mode = #tpu.pipeline_mode<synchronous>, transform_indices = @transform_4, window_bounds = array<i64: 128, 128>}, {pipeline_mode = #tpu.pipeline_mode<synchronous>, transform_indices = @transform_5, window_bounds = array<i64: 1, 512>}, {pipeline_mode = #tpu.pipeline_mode<synchronous>, transform_indices = @transform_6, window_bounds = array<i64: 1, 128>}, {pipeline_mode = #tpu.pipeline_mode<synchronous>, transform_indices = @transform_7, window_bounds = array<i64: 1, 128>}, {pipeline_mode = #tpu.pipeline_mode<synchronous>, transform_indices = @transform_8, window_bounds = array<i64: 1, 128>}, {transform_indices = @transform_9, window_bounds = array<i64: 256, 128>}, {transform_indices = @transform_10, window_bounds = array<i64: 256, 128>}, {transform_indices = @transform_11, window_bounds = array<i64: 256, 512>}, {transform_indices = @transform_12, window_bounds = array<i64: 256, 128>}, {transform_indices = @transform_13, window_bounds = array<i64: 1, 1, 128>}]} {
    %c0 = arith.constant 0 : index
    %c0_0 = arith.constant 0 : index
    %0 = vector.load %arg1[%c0, %c0_0] : memref<256x128xf32, #tpu.memory_space<vmem>>, vector<256x128xf32>
    %c0_1 = arith.constant 0 : index
    %c0_2 = arith.constant 0 : index
    %1 = vector.load %arg8[%c0_1, %c0_2] : memref<1x128xf32, #tpu.memory_space<vmem>>, vector<1x128xf32>
    %c0_3 = arith.constant 0 : index
    %c0_4 = arith.constant 0 : index
    %2 = vector.load %arg9[%c0_3, %c0_4] : memref<1x128xf32, #tpu.memory_space<vmem>>, vector<1x128xf32>
    %3 = arith.addf %1, %2 : vector<1x128xf32>
    %cst = arith.constant 5.000000e-01 : f32
    %4 = vector.broadcast %cst : f32 to vector<1x128xf32>
    %5 = arith.mulf %3, %4 : vector<1x128xf32>
    %6 = vector.broadcast %5 : vector<1x128xf32> to vector<256x128xf32>
    %7 = arith.subf %0, %6 : vector<256x128xf32>
    %c0_5 = arith.constant 0 : index
    %c0_6 = arith.constant 0 : index
    %8 = vector.load %arg2[%c0_5, %c0_6] : memref<128x512xf32, #tpu.memory_space<vmem>>, vector<128x512xf32>
    %cst_7 = arith.constant dense<0.000000e+00> : vector<256x512xf32>
    %9 = tpu.matmul %7, %8, %cst_7 {dimension_numbers = #tpu.dot_dimension_numbers<[1], [0], [0], [1], [0, 0, 1, 1], [], []>} : vector<256x128xf32>, vector<128x512xf32>, vector<256x512xf32> -> vector<256x512xf32>
    %c0_8 = arith.constant 0 : index
    %c0_9 = arith.constant 0 : index
    %10 = vector.load %arg6[%c0_8, %c0_9] : memref<1x512xf32, #tpu.memory_space<vmem>>, vector<1x512xf32>
    %11 = vector.broadcast %10 : vector<1x512xf32> to vector<256x512xf32>
    %12 = arith.addf %9, %11 : vector<256x512xf32>
    %cst_10 = arith.constant 0.000000e+00 : f32
    %13 = vector.broadcast %cst_10 : f32 to vector<256x512xf32>
    %14 = arith.maximumf %12, %13 : vector<256x512xf32>
    %c0_11 = arith.constant 0 : index
    %c0_12 = arith.constant 0 : index
    %15 = vector.load %arg3[%c0_11, %c0_12] : memref<512x128xf32, #tpu.memory_space<vmem>>, vector<512x128xf32>
    %cst_13 = arith.constant dense<0.000000e+00> : vector<256x128xf32>
    %16 = tpu.matmul %14, %15, %cst_13 {dimension_numbers = #tpu.dot_dimension_numbers<[1], [0], [0], [1], [0, 0, 1, 1], [], []>} : vector<256x512xf32>, vector<512x128xf32>, vector<256x128xf32> -> vector<256x128xf32>
    %c0_14 = arith.constant 0 : index
    %c0_15 = arith.constant 0 : index
    %17 = vector.load %arg7[%c0_14, %c0_15] : memref<1x128xf32, #tpu.memory_space<vmem>>, vector<1x128xf32>
    %18 = vector.broadcast %17 : vector<1x128xf32> to vector<256x128xf32>
    %19 = arith.addf %16, %18 : vector<256x128xf32>
    %cst_16 = arith.constant 0.000000e+00 : f32
    %20 = vector.broadcast %cst_16 : f32 to vector<256x128xf32>
    %21 = arith.maximumf %19, %20 : vector<256x128xf32>
    %c0_17 = arith.constant 0 : index
    %c0_18 = arith.constant 0 : index
    %22 = vector.load %arg4[%c0_17, %c0_18] : memref<512x128xf32, #tpu.memory_space<vmem>>, vector<512x128xf32>
    %cst_19 = arith.constant dense<0.000000e+00> : vector<256x128xf32>
    %23 = tpu.matmul %14, %22, %cst_19 {dimension_numbers = #tpu.dot_dimension_numbers<[1], [0], [0], [1], [0, 0, 1, 1], [], []>} : vector<256x512xf32>, vector<512x128xf32>, vector<256x128xf32> -> vector<256x128xf32>
    %24 = vector.broadcast %1 : vector<1x128xf32> to vector<256x128xf32>
    %25 = arith.addf %23, %24 : vector<256x128xf32>
    %c0_20 = arith.constant 0 : index
    %c0_21 = arith.constant 0 : index
    %26 = vector.load %arg5[%c0_20, %c0_21] : memref<128x128xf32, #tpu.memory_space<vmem>>, vector<128x128xf32>
    %cst_22 = arith.constant dense<0.000000e+00> : vector<256x128xf32>
    %27 = tpu.matmul %21, %26, %cst_22 {dimension_numbers = #tpu.dot_dimension_numbers<[1], [0], [0], [1], [0, 0, 1, 1], [], []>} : vector<256x128xf32>, vector<128x128xf32>, vector<256x128xf32> -> vector<256x128xf32>
    %28 = vector.broadcast %2 : vector<1x128xf32> to vector<256x128xf32>
    %29 = arith.addf %27, %28 : vector<256x128xf32>
    %c0_23 = arith.constant 0 : index
    %c0_24 = arith.constant 0 : index
    %30 = vector.load %arg12[%c0_23, %c0_24] : memref<256x512xf32, #tpu.memory_space<vmem>>, vector<256x512xf32>
    tpu.vector_store %arg12[%c0_23, %c0_24], %14 {strides = array<i32>} : memref<256x512xf32, #tpu.memory_space<vmem>>, vector<256x512xf32>,
    %c0_25 = arith.constant 0 : index
    %c0_26 = arith.constant 0 : index
    %31 = vector.load %arg13[%c0_25, %c0_26] : memref<256x128xf32, #tpu.memory_space<vmem>>, vector<256x128xf32>
    tpu.vector_store %arg13[%c0_25, %c0_26], %21 {strides = array<i32>} : memref<256x128xf32, #tpu.memory_space<vmem>>, vector<256x128xf32>,
    %c0_27 = arith.constant 0 : index
    %c0_28 = arith.constant 0 : index
    %32 = vector.load %arg10[%c0_27, %c0_28] : memref<256x128xf32, #tpu.memory_space<vmem>>, vector<256x128xf32>
    tpu.vector_store %arg10[%c0_27, %c0_28], %25 {strides = array<i32>} : memref<256x128xf32, #tpu.memory_space<vmem>>, vector<256x128xf32>,
    %c0_29 = arith.constant 0 : index
    %c0_30 = arith.constant 0 : index
    %33 = vector.load %arg11[%c0_29, %c0_30] : memref<256x128xf32, #tpu.memory_space<vmem>>, vector<256x128xf32>
    tpu.vector_store %arg11[%c0_29, %c0_30], %29 {strides = array<i32>} : memref<256x128xf32, #tpu.memory_space<vmem>>, vector<256x128xf32>,
    %34 = arith.subf %25, %0 : vector<256x128xf32>
    %35 = arith.mulf %34, %34 : vector<256x128xf32>
    %36 = vector.shape_cast %35 : vector<256x128xf32> to vector<1x256x128xf32>
    %cst_31 = arith.constant dense<0.000000e+00> : vector<1xf32>
    %37 = vector.multi_reduction <add>, %36, %cst_31 [1, 2] : vector<1x256x128xf32> to vector<1xf32>
    %38 = vector.shape_cast %37 : vector<1xf32> to vector<1x1x1xf32>
    %39 = vector.extract %38[0, 0, 0] : f32 from vector<1x1x1xf32>
    %40 = arith.subf %29, %0 : vector<256x128xf32>
    %41 = arith.mulf %40, %40 : vector<256x128xf32>
    %42 = vector.shape_cast %41 : vector<256x128xf32> to vector<1x256x128xf32>
    %cst_32 = arith.constant dense<0.000000e+00> : vector<1xf32>
    %43 = vector.multi_reduction <add>, %42, %cst_32 [1, 2] : vector<1x256x128xf32> to vector<1xf32>
    %44 = vector.shape_cast %43 : vector<1xf32> to vector<1x1x1xf32>
    %45 = vector.extract %44[0, 0, 0] : f32 from vector<1x1x1xf32>
    %46 = math.absf %14 : vector<256x512xf32>
    %47 = vector.shape_cast %46 : vector<256x512xf32> to vector<1x256x512xf32>
    %cst_33 = arith.constant dense<0.000000e+00> : vector<1xf32>
    %48 = vector.multi_reduction <add>, %47, %cst_33 [1, 2] : vector<1x256x512xf32> to vector<1xf32>
    %49 = vector.shape_cast %48 : vector<1xf32> to vector<1x1x1xf32>
    %50 = vector.extract %49[0, 0, 0] : f32 from vector<1x1x1xf32>
    %51 = math.absf %21 : vector<256x128xf32>
    %52 = vector.shape_cast %51 : vector<256x128xf32> to vector<1x256x128xf32>
    %cst_34 = arith.constant dense<0.000000e+00> : vector<1xf32>
    %53 = vector.multi_reduction <add>, %52, %cst_34 [1, 2] : vector<1x256x128xf32> to vector<1xf32>
    %54 = vector.shape_cast %53 : vector<1xf32> to vector<1x1x1xf32>
    %55 = vector.extract %54[0, 0, 0] : f32 from vector<1x1x1xf32>
    %cst_35 = arith.constant 0.000000e+00 : f32
    %56 = vector.broadcast %cst_35 : f32 to vector<256x512xf32>
    %57 = arith.cmpf ogt, %14, %56 : vector<256x512xf32>
    %58 = arith.extui %57 : vector<256x512xi1> to vector<256x512xi32>
    %59 = arith.sitofp %58 : vector<256x512xi32> to vector<256x512xf32>
    %60 = vector.shape_cast %59 : vector<256x512xf32> to vector<1x256x512xf32>
    %cst_36 = arith.constant dense<0.000000e+00> : vector<1xf32>
    %61 = vector.multi_reduction <add>, %60, %cst_36 [1, 2] : vector<1x256x512xf32> to vector<1xf32>
    %62 = vector.shape_cast %61 : vector<1xf32> to vector<1x1x1xf32>
    %63 = vector.extract %62[0, 0, 0] : f32 from vector<1x1x1xf32>
    %cst_37 = arith.constant 0.000000e+00 : f32
    %64 = vector.broadcast %cst_37 : f32 to vector<256x128xf32>
    %65 = arith.cmpf ogt, %21, %64 : vector<256x128xf32>
    %66 = arith.extui %65 : vector<256x128xi1> to vector<256x128xi32>
    %67 = arith.sitofp %66 : vector<256x128xi32> to vector<256x128xf32>
    %68 = vector.shape_cast %67 : vector<256x128xf32> to vector<1x256x128xf32>
    %cst_38 = arith.constant dense<0.000000e+00> : vector<1xf32>
    %69 = vector.multi_reduction <add>, %68, %cst_38 [1, 2] : vector<1x256x128xf32> to vector<1xf32>
    %70 = vector.shape_cast %69 : vector<1xf32> to vector<1x1x1xf32>
    %71 = vector.extract %70[0, 0, 0] : f32 from vector<1x1x1xf32>
    %72 = tpu.iota {dimensions = array<i32: 2>} : vector<1x1x128xi32>
    %cst_39 = arith.constant 0.000000e+00 : f32
    %73 = vector.broadcast %cst_39 : f32 to vector<1x1x128xf32>
    %c0_i32 = arith.constant 0 : i32
    %74 = vector.broadcast %c0_i32 : i32 to vector<1x1x128xi32>
    %75 = arith.cmpi eq, %72, %74 : vector<1x1x128xi32>
    %cst_40 = arith.constant 0.000000e+00 : f32
    %76 = vector.broadcast %39 : f32 to vector<1x1x128xf32>
    %77 = vector.broadcast %cst_40 : f32 to vector<1x1x128xf32>
    %78 = arith.select %75, %76, %77 : vector<1x1x128xi1>, vector<1x1x128xf32>
    %79 = arith.addf %73, %78 : vector<1x1x128xf32>
    %c1_i32 = arith.constant 1 : i32
    %80 = vector.broadcast %c1_i32 : i32 to vector<1x1x128xi32>
    %81 = arith.cmpi eq, %72, %80 : vector<1x1x128xi32>
    %cst_41 = arith.constant 0.000000e+00 : f32
    %82 = vector.broadcast %45 : f32 to vector<1x1x128xf32>
    %83 = vector.broadcast %cst_41 : f32 to vector<1x1x128xf32>
    %84 = arith.select %81, %82, %83 : vector<1x1x128xi1>, vector<1x1x128xf32>
    %85 = arith.addf %79, %84 : vector<1x1x128xf32>
    %c2_i32 = arith.constant 2 : i32
    %86 = vector.broadcast %c2_i32 : i32 to vector<1x1x128xi32>
    %87 = arith.cmpi eq, %72, %86 : vector<1x1x128xi32>
    %cst_42 = arith.constant 0.000000e+00 : f32
    %88 = vector.broadcast %50 : f32 to vector<1x1x128xf32>
    %89 = vector.broadcast %cst_42 : f32 to vector<1x1x128xf32>
    %90 = arith.select %87, %88, %89 : vector<1x1x128xi1>, vector<1x1x128xf32>
    %91 = arith.addf %85, %90 : vector<1x1x128xf32>
    %c3_i32 = arith.constant 3 : i32
    %92 = vector.broadcast %c3_i32 : i32 to vector<1x1x128xi32>
    %93 = arith.cmpi eq, %72, %92 : vector<1x1x128xi32>
    %cst_43 = arith.constant 0.000000e+00 : f32
    %94 = vector.broadcast %55 : f32 to vector<1x1x128xf32>
    %95 = vector.broadcast %cst_43 : f32 to vector<1x1x128xf32>
    %96 = arith.select %93, %94, %95 : vector<1x1x128xi1>, vector<1x1x128xf32>
    %97 = arith.addf %91, %96 : vector<1x1x128xf32>
    %c4_i32 = arith.constant 4 : i32
    %98 = vector.broadcast %c4_i32 : i32 to vector<1x1x128xi32>
    %99 = arith.cmpi eq, %72, %98 : vector<1x1x128xi32>
    %cst_44 = arith.constant 0.000000e+00 : f32
    %100 = vector.broadcast %63 : f32 to vector<1x1x128xf32>
    %101 = vector.broadcast %cst_44 : f32 to vector<1x1x128xf32>
    %102 = arith.select %99, %100, %101 : vector<1x1x128xi1>, vector<1x1x128xf32>
    %103 = arith.addf %97, %102 : vector<1x1x128xf32>
    %c5_i32 = arith.constant 5 : i32
    %104 = vector.broadcast %c5_i32 : i32 to vector<1x1x128xi32>
    %105 = arith.cmpi eq, %72, %104 : vector<1x1x128xi32>
    %cst_45 = arith.constant 0.000000e+00 : f32
    %106 = vector.broadcast %71 : f32 to vector<1x1x128xf32>
    %107 = vector.broadcast %cst_45 : f32 to vector<1x1x128xf32>
    %108 = arith.select %105, %106, %107 : vector<1x1x128xi1>, vector<1x1x128xf32>
    %109 = arith.addf %103, %108 : vector<1x1x128xf32>
    %c0_46 = arith.constant 0 : index
    %c0_47 = arith.constant 0 : index
    %c0_48 = arith.constant 0 : index
    %110 = vector.load %arg14[%c0_46, %c0_47, %c0_48] : memref<1x1x128xf32, #tpu.memory_space<vmem>>, vector<1x1x128xf32>
    tpu.vector_store %arg14[%c0_46, %c0_47, %c0_48], %109 {strides = array<i32>} : memref<1x1x128xf32, #tpu.memory_space<vmem>>, vector<1x1x128xf32>,
    return
  }
  func.func @transform_0(%arg0: i32) -> (i32, i32) {
    %c0_i32 = arith.constant 0 : i32
    %c0_i32_0 = arith.constant 0 : i32
    return %arg0, %c0_i32 : i32, i32
  }
  func.func @transform_1(%arg0: i32) -> (i32, i32) {
    %c0_i32 = arith.constant 0 : i32
    %c0_i32_0 = arith.constant 0 : i32
    %c0_i32_1 = arith.constant 0 : i32
    return %c0_i32, %c0_i32_0 : i32, i32
  }
  func.func @transform_2(%arg0: i32) -> (i32, i32) {
    %c0_i32 = arith.constant 0 : i32
    %c0_i32_0 = arith.constant 0 : i32
    %c0_i32_1 = arith.constant 0 : i32
    return %c0_i32, %c0_i32_0 : i32, i32
  }
  func.func @transform_3(%arg0: i32) -> (i32, i32) {
    %c0_i32 = arith.constant 0 : i32
    %c0_i32_0 = arith.constant 0 : i32
    %c0_i32_1 = arith.constant 0 : i32
    return %c0_i32, %c0_i32_0 : i32, i32
  }
  func.func @transform_4(%arg0: i32) -> (i32, i32) {
    %c0_i32 = arith.constant 0 : i32
    %c0_i32_0 = arith.constant 0 : i32
    %c0_i32_1 = arith.constant 0 : i32
    return %c0_i32, %c0_i32_0 : i32, i32
  }
  func.func @transform_5(%arg0: i32) -> (i32, i32) {
    %c0_i32 = arith.constant 0 : i32
    %c0_i32_0 = arith.constant 0 : i32
    %c0_i32_1 = arith.constant 0 : i32
    return %c0_i32, %c0_i32_0 : i32, i32
  }
  func.func @transform_6(%arg0: i32) -> (i32, i32) {
    %c0_i32 = arith.constant 0 : i32
    %c0_i32_0 = arith.constant 0 : i32
    %c0_i32_1 = arith.constant 0 : i32
    return %c0_i32, %c0_i32_0 : i32, i32
  }
  func.func @transform_7(%arg0: i32) -> (i32, i32) {
    %c0_i32 = arith.constant 0 : i32
    %c0_i32_0 = arith.constant 0 : i32
    %c0_i32_1 = arith.constant 0 : i32
    return %c0_i32, %c0_i32_0 : i32, i32
  }
  func.func @transform_8(%arg0: i32) -> (i32, i32) {
    %c0_i32 = arith.constant 0 : i32
    %c0_i32_0 = arith.constant 0 : i32
    %c0_i32_1 = arith.constant 0 : i32
    return %c0_i32, %c0_i32_0 : i32, i32
  }
  func.func @transform_9(%arg0: i32) -> (i32, i32) {
    %c0_i32 = arith.constant 0 : i32
    %c0_i32_0 = arith.constant 0 : i32
    return %arg0, %c0_i32 : i32, i32
  }
  func.func @transform_10(%arg0: i32) -> (i32, i32) {
    %c0_i32 = arith.constant 0 : i32
    %c0_i32_0 = arith.constant 0 : i32
    return %arg0, %c0_i32 : i32, i32
  }
  func.func @transform_11(%arg0: i32) -> (i32, i32) {
    %c0_i32 = arith.constant 0 : i32
    %c0_i32_0 = arith.constant 0 : i32
    return %arg0, %c0_i32 : i32, i32
  }
  func.func @transform_12(%arg0: i32) -> (i32, i32) {
    %c0_i32 = arith.constant 0 : i32
    %c0_i32_0 = arith.constant 0 : i32
    return %arg0, %c0_i32 : i32, i32
  }
  func.func @transform_13(%arg0: i32) -> (i32, i32, i32) {
    %c0_i32 = arith.constant 0 : i32
    %c0_i32_0 = arith.constant 0 : i32
    %c0_i32_1 = arith.constant 0 : i32
    return %arg0, %c0_i32, %c0_i32_0 : i32, i32, i32
  }
}

</mosaic_0001>

<llo_original>
// kernel: tpu_custom_call.1
$region0: #{tpu_custom_call.1}
  #allocation0 [shape = 'u32[]', space=smem, size = 0x4, offset = 0x4, fixed_abs, tag = 'smem constant byte address 0x4 - core index']
  #allocation1 [shape = 'u32[144,128]{1,0:T(1,128)}', space=vmem, size = 0x12000, scoped, tag = 'internal scratch']
  %s0 = inlined_call_operand.hbm [shape: f32[512,128], index: 0, kind: input, shape index: {}]
  %s1 = inlined_call_operand.hbm [shape: f32[128,512], index: 1, kind: input, shape index: {}]
  %s2 = inlined_call_operand.hbm [shape: f32[512,128], index: 2, kind: input, shape index: {}]
  %s3 = inlined_call_operand.hbm [shape: f32[512,128], index: 3, kind: input, shape index: {}]
  %s4 = inlined_call_operand.hbm [shape: f32[128,128], index: 4, kind: input, shape index: {}]
  %s5 = inlined_call_operand.vmem [shape: f32[1,512], index: 5, kind: input, shape index: {}]
  %s6 = inlined_call_operand.vmem [shape: f32[1,128], index: 6, kind: input, shape index: {}]
  %s7 = inlined_call_operand.vmem [shape: f32[1,128], index: 7, kind: input, shape index: {}]
  %s8 = inlined_call_operand.vmem [shape: f32[1,128], index: 8, kind: input, shape index: {}]
  %s9 = inlined_call_operand.hbm [shape: f32[512,128], index: 9, kind: output, shape index: {0}]
  %s10 = inlined_call_operand.hbm [shape: f32[512,128], index: 10, kind: output, shape index: {1}]
  %s11 = inlined_call_operand.hbm [shape: f32[512,512], index: 11, kind: output, shape index: {2}]
  %s12 = inlined_call_operand.hbm [shape: f32[512,128], index: 12, kind: output, shape index: {3}]
  %s13 = inlined_call_operand.hbm [shape: f32[2,1,128], index: 13, kind: output, shape index: {4}]
  %14 = xla_tuple %s9, %s10, %s11, %s12, %s13
  %s15 = sld [smem:[#allocation0]]
  $region121: #{tpu_custom_call.1} parent=0
    _
  %s17 = ssub.s32 1, %s15
  %s18 = scalar_select 0, %s17, %s15
  $region1: #{tpu_custom_call.1} parent=0
    #allocation2 [shape = 'u8[262144]{0}', space=vmem, size = 0x40000, scoped, tag = 'input window, operand 0']
    #allocation3 [shape = 's32[2]{0}', space=sflag, size = 0x8, scoped, tag = 'scoped memory for tpu_custom_call.1']
    #allocation4 [shape = 's32[2]{0}', space=sflag, size = 0x8, scoped, tag = 'scoped memory for tpu_custom_call.1']
    #allocation5 [shape = 'u8[262144]{0}', space=vmem, size = 0x40000, scoped, tag = 'input window, operand 1, single buffered']
    #allocation6 [shape = 's32[1]{0}', space=sflag, size = 0x4, scoped, tag = 'scoped memory for tpu_custom_call.1']
    #allocation7 [shape = 'u8[262144]{0}', space=vmem, size = 0x40000, scoped, tag = 'input window, operand 2, single buffered']
    #allocation8 [shape = 'u8[262144]{0}', space=vmem, size = 0x40000, scoped, tag = 'input window, operand 3, single buffered']
    #allocation9 [shape = 's32[1]{0}', space=sflag, size = 0x4, scoped, tag = 'scoped memory for tpu_custom_call.1']
    #allocation10 [shape = 'u8[65536]{0}', space=vmem, size = 0x10000, scoped, tag = 'input window, operand 4, single buffered']
    #allocation11 [shape = 'u8[262144]{0}', space=vmem, size = 0x40000, scoped, tag = 'output window, operand 0']
    #allocation12 [shape = 'u8[262144]{0}', space=vmem, size = 0x40000, scoped, tag = 'output window, operand 1']
    #allocation13 [shape = 's32[2]{0}', space=sflag, size = 0x8, scoped, tag = 'scoped memory for tpu_custom_call.1']
    #allocation14 [shape = 'u8[1048576]{0}', space=vmem, size = 0x100000, scoped, tag = 'output window, operand 2']
    #allocation15 [shape = 'u8[262144]{0}', space=vmem, size = 0x40000, scoped, tag = 'output window, operand 3']
    #allocation16 [shape = 's32[2]{0}', space=sflag, size = 0x8, scoped, tag = 'scoped memory for tpu_custom_call.1']
    #allocation17 [shape = 'u8[1024]{0}', space=vmem, size = 0x400, scoped, tag = 'output window, operand 4']
    %19 = vsyncpa [#allocation3], 0
    %s20 = scalar_lea.sflag [#allocation3], 1
    %21 = vsyncpa %s20, 0
    %22 = vsyncpa [#allocation6], 0
    %23 = vsyncpa [#allocation9], 0
    %24 = vsyncpa [#allocation4], 0
    %s25 = scalar_lea.sflag [#allocation4], 1
    %26 = vsyncpa %s25, 0
    %27 = vsyncpa [#allocation13], 0
    %s28 = scalar_lea.sflag [#allocation13], 1
    %29 = vsyncpa %s28, 0
    %30 = vsyncpa [#allocation16], 0
    %s31 = scalar_lea.sflag [#allocation16], 1
    %32 = vsyncpa %s31, 0
    loop: start=0, step=1, limit=4
    $region2: #{tpu_custom_call.1} parent=1 // loop_pre_header
      _
    $region3: #{tpu_custom_call.1} parent=1 // loop_header
      %s34 = sphi 0, %s38
      %p35 = scmp.ge.s32.totalorder %s34, 4
      %s44 = sphi 0, %s46
      %s47 = sphi 0, %s44
      %s48 = sphi 0, %s47
      %s64 = sphi 0, %s48
      %s68 = sphi 0, %s68
      %s70 = sphi 0, %s68
      %s71 = sphi 0, %s70
      %s85 = sphi 0, %s71
      %s89 = sphi 0, %s89
      %s91 = sphi 0, %s89
      %s92 = sphi 0, %s91
      %s106 = sphi 0, %s92
      %s110 = sphi 0, %s110
      %s112 = sphi 0, %s110
      %s113 = sphi 0, %s112
      %s127 = sphi 0, %s113
      %s131 = sphi 0, %s131
      %s133 = sphi 0, %s131
      %s134 = sphi 0, %s133
      %s148 = sphi 0, %s134
      %s152 = sphi 0, %s152
      %s154 = sphi 0, %s152
      %s155 = sphi 0, %s154
      %s169 = sphi 0, %s155
      %s173 = sphi 0, %s173
      %s175 = sphi 0, %s173
      %s176 = sphi 0, %s175
      %s190 = sphi 0, %s176
      %s194 = sphi 0, %s194
      %s196 = sphi 0, %s194
      %s197 = sphi 0, %s196
      %s211 = sphi 0, %s197
      %s215 = sphi 0, %s215
      %s217 = sphi 0, %s215
      %s218 = sphi 0, %s217
      %s232 = sphi 0, %s218
      %s238 = sphi 0, %s240
      %s241 = sphi 0, %s238
      %s242 = sphi 0, %s241
      %s258 = sphi 0, %s242
      %s264 = sphi 0, %s266
      %s267 = sphi 0, %s264
      %s268 = sphi 0, %s267
      %s284 = sphi 0, %s268
      %s290 = sphi 0, %s292
      %s293 = sphi 0, %s290
      %s294 = sphi 0, %s293
      %s310 = sphi 0, %s294
      %s316 = sphi 0, %s318
      %s319 = sphi 0, %s316
      %s320 = sphi 0, %s319
      %s336 = sphi 0, %s320
      %s342 = sphi 0, %s344
      %s345 = sphi 0, %s342
      %s346 = sphi 0, %s345
      %s362 = sphi 0, %s346
    $region4: #{tpu_custom_call.1} parent=1 // loop_header_branch
      %37 = sbr.rel (%p35) target = $region8
    $region5: #{tpu_custom_call.1} parent=1 // loop_body
      %s39 = ssub.s32 %s34, 1
      %s40 = ssub.s32 %s34, 2
      %s41 = sadd.s32 %s34, 1
      %s42 = ssub.s32 %s34, %s41
      %p43 = scmp.eq.s32.totalorder %s42, 0
      %s45 = sadd.s32 %s44, 1
      %s46 = scalar_select %p43, %s44, %s45
      %p49 = pneg %p43
      %p50 = scmp.eq.s32.totalorder %s34, 1
      %p51 = por %p49, %p50
      %p52 = scmp.ne.s32.totalorder %s44, %s47
      %p53 = scmp.eq.s32.totalorder %s34, 0
      %p54 = por %p52, %p53
      %p55 = scmp.ne.s32.totalorder %s44, %s47
      %p56 = scmp.eq.s32.totalorder %s39, 1
      %p57 = por %p55, %p56
      %p58 = scmp.ne.s32.totalorder %s47, %s48
      %p59 = scmp.eq.s32.totalorder %s39, 0
      %p60 = por %p58, %p59
      %p61 = scmp.ne.s32.totalorder %s47, %s48
      %p62 = scmp.eq.s32.totalorder %s40, 1
      %p63 = por %p61, %p62
      %p65 = scmp.ne.s32.totalorder %s48, %s64
      %p66 = scmp.eq.s32.totalorder %s40, 0
      %p67 = por %p65, %p66
      %s69 = sadd.s32 %s68, 1
      %p72 = scmp.eq.s32.totalorder %s34, 1
      %p73 = scmp.ne.s32.totalorder %s68, %s70
      %p74 = scmp.eq.s32.totalorder %s34, 0
      %p75 = por %p73, %p74
      %p76 = scmp.ne.s32.totalorder %s68, %s70
      %p77 = scmp.eq.s32.totalorder %s39, 1
      %p78 = por %p76, %p77
      %p79 = scmp.ne.s32.totalorder %s70, %s71
      %p80 = scmp.eq.s32.totalorder %s39, 0
      %p81 = por %p79, %p80
      %p82 = scmp.ne.s32.totalorder %s70, %s71
      %p83 = scmp.eq.s32.totalorder %s40, 1
      %p84 = por %p82, %p83
      %p86 = scmp.ne.s32.totalorder %s71, %s85
      %p87 = scmp.eq.s32.totalorder %s40, 0
      %p88 = por %p86, %p87
      %s90 = sadd.s32 %s89, 1
      %p93 = scmp.eq.s32.totalorder %s34, 1
      %p94 = scmp.ne.s32.totalorder %s89, %s91
      %p95 = scmp.eq.s32.totalorder %s34, 0
      %p96 = por %p94, %p95
      %p97 = scmp.ne.s32.totalorder %s89, %s91
      %p98 = scmp.eq.s32.totalorder %s39, 1
      %p99 = por %p97, %p98
      %p100 = scmp.ne.s32.totalorder %s91, %s92
      %p101 = scmp.eq.s32.totalorder %s39, 0
      %p102 = por %p100, %p101
      %p103 = scmp.ne.s32.totalorder %s91, %s92
      %p104 = scmp.eq.s32.totalorder %s40, 1
      %p105 = por %p103, %p104
      %p107 = scmp.ne.s32.totalorder %s92, %s106
      %p108 = scmp.eq.s32.totalorder %s40, 0
      %p109 = por %p107, %p108
      %s111 = sadd.s32 %s110, 1
      %p114 = scmp.eq.s32.totalorder %s34, 1
      %p115 = scmp.ne.s32.totalorder %s110, %s112
      %p116 = scmp.eq.s32.totalorder %s34, 0
      %p117 = por %p115, %p116
      %p118 = scmp.ne.s32.totalorder %s110, %s112
      %p119 = scmp.eq.s32.totalorder %s39, 1
      %p120 = por %p118, %p119
      %p121 = scmp.ne.s32.totalorder %s112, %s113
      %p122 = scmp.eq.s32.totalorder %s39, 0
      %p123 = por %p121, %p122
      %p124 = scmp.ne.s32.totalorder %s112, %s113
      %p125 = scmp.eq.s32.totalorder %s40, 1
      %p126 = por %p124, %p125
      %p128 = scmp.ne.s32.totalorder %s113, %s127
      %p129 = scmp.eq.s32.totalorder %s40, 0
      %p130 = por %p128, %p129
      %s132 = sadd.s32 %s131, 1
      %p135 = scmp.eq.s32.totalorder %s34, 1
      %p136 = scmp.ne.s32.totalorder %s131, %s133
      %p137 = scmp.eq.s32.totalorder %s34, 0
      %p138 = por %p136, %p137
      %p139 = scmp.ne.s32.totalorder %s131, %s133
      %p140 = scmp.eq.s32.totalorder %s39, 1
      %p141 = por %p139, %p140
      %p142 = scmp.ne.s32.totalorder %s133, %s134
      %p143 = scmp.eq.s32.totalorder %s39, 0
      %p144 = por %p142, %p143
      %p145 = scmp.ne.s32.totalorder %s133, %s134
      %p146 = scmp.eq.s32.totalorder %s40, 1
      %p147 = por %p145, %p146
      %p149 = scmp.ne.s32.totalorder %s134, %s148
      %p150 = scmp.eq.s32.totalorder %s40, 0
      %p151 = por %p149, %p150
      %s153 = sadd.s32 %s152, 1
      %p156 = scmp.eq.s32.totalorder %s34, 1
      %p157 = scmp.ne.s32.totalorder %s152, %s154
      %p158 = scmp.eq.s32.totalorder %s34, 0
      %p159 = por %p157, %p158
      %p160 = scmp.ne.s32.totalorder %s152, %s154
      %p161 = scmp.eq.s32.totalorder %s39, 1
      %p162 = por %p160, %p161
      %p163 = scmp.ne.s32.totalorder %s154, %s155
      %p164 = scmp.eq.s32.totalorder %s39, 0
      %p165 = por %p163, %p164
      %p166 = scmp.ne.s32.totalorder %s154, %s155
      %p167 = scmp.eq.s32.totalorder %s40, 1
      %p168 = por %p166, %p167
      %p170 = scmp.ne.s32.totalorder %s155, %s169
      %p171 = scmp.eq.s32.totalorder %s40, 0
      %p172 = por %p170, %p171
      %s174 = sadd.s32 %s173, 1
      %p177 = scmp.eq.s32.totalorder %s34, 1
      %p178 = scmp.ne.s32.totalorder %s173, %s175
      %p179 = scmp.eq.s32.totalorder %s34, 0
      %p180 = por %p178, %p179
      %p181 = scmp.ne.s32.totalorder %s173, %s175
      %p182 = scmp.eq.s32.totalorder %s39, 1
      %p183 = por %p181, %p182
      %p184 = scmp.ne.s32.totalorder %s175, %s176
      %p185 = scmp.eq.s32.totalorder %s39, 0
      %p186 = por %p184, %p185
      %p187 = scmp.ne.s32.totalorder %s175, %s176
      %p188 = scmp.eq.s32.totalorder %s40, 1
      %p189 = por %p187, %p188
      %p191 = scmp.ne.s32.totalorder %s176, %s190
      %p192 = scmp.eq.s32.totalorder %s40, 0
      %p193 = por %p191, %p192
      %s195 = sadd.s32 %s194, 1
      %p198 = scmp.eq.s32.totalorder %s34, 1
      %p199 = scmp.ne.s32.totalorder %s194, %s196
      %p200 = scmp.eq.s32.totalorder %s34, 0
      %p201 = por %p199, %p200
      %p202 = scmp.ne.s32.totalorder %s194, %s196
      %p203 = scmp.eq.s32.totalorder %s39, 1
      %p204 = por %p202, %p203
      %p205 = scmp.ne.s32.totalorder %s196, %s197
      %p206 = scmp.eq.s32.totalorder %s39, 0
      %p207 = por %p205, %p206
      %p208 = scmp.ne.s32.totalorder %s196, %s197
      %p209 = scmp.eq.s32.totalorder %s40, 1
      %p210 = por %p208, %p209
      %p212 = scmp.ne.s32.totalorder %s197, %s211
      %p213 = scmp.eq.s32.totalorder %s40, 0
      %p214 = por %p212, %p213
      %s216 = sadd.s32 %s215, 1
      %p219 = scmp.eq.s32.totalorder %s34, 1
      %p220 = scmp.ne.s32.totalorder %s215, %s217
      %p221 = scmp.eq.s32.totalorder %s34, 0
      %p222 = por %p220, %p221
      %p223 = scmp.ne.s32.totalorder %s215, %s217
      %p224 = scmp.eq.s32.totalorder %s39, 1
      %p225 = por %p223, %p224
      %p226 = scmp.ne.s32.totalorder %s217, %s218
      %p227 = scmp.eq.s32.totalorder %s39, 0
      %p228 = por %p226, %p227
      %p229 = scmp.ne.s32.totalorder %s217, %s218
      %p230 = scmp.eq.s32.totalorder %s40, 1
      %p231 = por %p229, %p230
      %p233 = scmp.ne.s32.totalorder %s218, %s232
      %p234 = scmp.eq.s32.totalorder %s40, 0
      %p235 = por %p233, %p234
      %s236 = ssub.s32 %s34, %s41
      %p237 = scmp.eq.s32.totalorder %s236, 0
      %s239 = sadd.s32 %s238, 1
      %s240 = scalar_select %p237, %s238, %s239
      %p243 = pneg %p237
      %p244 = scmp.eq.s32.totalorder %s34, 1
      %p245 = por %p243, %p244
      %p246 = scmp.ne.s32.totalorder %s238, %s241
      %p247 = scmp.eq.s32.totalorder %s34, 0
      %p248 = por %p246, %p247
      %p249 = scmp.ne.s32.totalorder %s238, %s241
      %p250 = scmp.eq.s32.totalorder %s39, 1
      %p251 = por %p249, %p250
      %p252 = scmp.ne.s32.totalorder %s241, %s242
      %p253 = scmp.eq.s32.totalorder %s39, 0
      %p254 = por %p252, %p253
      %p255 = scmp.ne.s32.totalorder %s241, %s242
      %p256 = scmp.eq.s32.totalorder %s40, 1
      %p257 = por %p255, %p256
      %p259 = scmp.ne.s32.totalorder %s242, %s258
      %p260 = scmp.eq.s32.totalorder %s40, 0
      %p261 = por %p259, %p260
      %s262 = ssub.s32 %s34, %s41
      %p263 = scmp.eq.s32.totalorder %s262, 0
      %s265 = sadd.s32 %s264, 1
      %s266 = scalar_select %p263, %s264, %s265
      %p269 = pneg %p263
      %p270 = scmp.eq.s32.totalorder %s34, 1
      %p271 = por %p269, %p270
      %p272 = scmp.ne.s32.totalorder %s264, %s267
      %p273 = scmp.eq.s32.totalorder %s34, 0
      %p274 = por %p272, %p273
      %p275 = scmp.ne.s32.totalorder %s264, %s267
      %p276 = scmp.eq.s32.totalorder %s39, 1
      %p277 = por %p275, %p276
      %p278 = scmp.ne.s32.totalorder %s267, %s268
      %p279 = scmp.eq.s32.totalorder %s39, 0
      %p280 = por %p278, %p279
      %p281 = scmp.ne.s32.totalorder %s267, %s268
      %p282 = scmp.eq.s32.totalorder %s40, 1
      %p283 = por %p281, %p282
      %p285 = scmp.ne.s32.totalorder %s268, %s284
      %p286 = scmp.eq.s32.totalorder %s40, 0
      %p287 = por %p285, %p286
      %s288 = ssub.s32 %s34, %s41
      %p289 = scmp.eq.s32.totalorder %s288, 0
      %s291 = sadd.s32 %s290, 1
      %s292 = scalar_select %p289, %s290, %s291
      %p295 = pneg %p289
      %p296 = scmp.eq.s32.totalorder %s34, 1
      %p297 = por %p295, %p296
      %p298 = scmp.ne.s32.totalorder %s290, %s293
      %p299 = scmp.eq.s32.totalorder %s34, 0
      %p300 = por %p298, %p299
      %p301 = scmp.ne.s32.totalorder %s290, %s293
      %p302 = scmp.eq.s32.totalorder %s39, 1
      %p303 = por %p301, %p302
      %p304 = scmp.ne.s32.totalorder %s293, %s294
      %p305 = scmp.eq.s32.totalorder %s39, 0
      %p306 = por %p304, %p305
      %p307 = scmp.ne.s32.totalorder %s293, %s294
      %p308 = scmp.eq.s32.totalorder %s40, 1
      %p309 = por %p307, %p308
      %p311 = scmp.ne.s32.totalorder %s294, %s310
      %p312 = scmp.eq.s32.totalorder %s40, 0
      %p313 = por %p311, %p312
      %s314 = ssub.s32 %s34, %s41
      %p315 = scmp.eq.s32.totalorder %s314, 0
      %s317 = sadd.s32 %s316, 1
      %s318 = scalar_select %p315, %s316, %s317
      %p321 = pneg %p315
      %p322 = scmp.eq.s32.totalorder %s34, 1
      %p323 = por %p321, %p322
      %p324 = scmp.ne.s32.totalorder %s316, %s319
      %p325 = scmp.eq.s32.totalorder %s34, 0
      %p326 = por %p324, %p325
      %p327 = scmp.ne.s32.totalorder %s316, %s319
      %p328 = scmp.eq.s32.totalorder %s39, 1
      %p329 = por %p327, %p328
      %p330 = scmp.ne.s32.totalorder %s319, %s320
      %p331 = scmp.eq.s32.totalorder %s39, 0
      %p332 = por %p330, %p331
      %p333 = scmp.ne.s32.totalorder %s319, %s320
      %p334 = scmp.eq.s32.totalorder %s40, 1
      %p335 = por %p333, %p334
      %p337 = scmp.ne.s32.totalorder %s320, %s336
      %p338 = scmp.eq.s32.totalorder %s40, 0
      %p339 = por %p337, %p338
      %s340 = ssub.s32 %s34, %s41
      %p341 = scmp.eq.s32.totalorder %s340, 0
      %s343 = sadd.s32 %s342, 1
      %s344 = scalar_select %p341, %s342, %s343
      %p347 = pneg %p341
      %p348 = scmp.eq.s32.totalorder %s34, 1
      %p349 = por %p347, %p348
      %p350 = scmp.ne.s32.totalorder %s342, %s345
      %p351 = scmp.eq.s32.totalorder %s34, 0
      %p352 = por %p350, %p351
      %p353 = scmp.ne.s32.totalorder %s342, %s345
      %p354 = scmp.eq.s32.totalorder %s39, 1
      %p355 = por %p353, %p354
      %p356 = scmp.ne.s32.totalorder %s345, %s346
      %p357 = scmp.eq.s32.totalorder %s39, 0
      %p358 = por %p356, %p357
      %p359 = scmp.ne.s32.totalorder %s345, %s346
      %p360 = scmp.eq.s32.totalorder %s40, 1
      %p361 = por %p359, %p360
      %p363 = scmp.ne.s32.totalorder %s346, %s362
      %p364 = scmp.eq.s32.totalorder %s40, 0
      %p365 = por %p363, %p364
      %p366 = scmp.le.s32.totalorder 1, %s34
      %p367 = scmp.lt.s32.totalorder %s34, 3
      %p368 = pnand %p366, %p367
      %p369 = pneg %p368
      // Predicated region
      $region9: #{tpu_custom_call.1} parent=5 // pred_check
        _
      $region10: #{tpu_custom_call.1} parent=5 // pred_check_branch
        %371 = sbr.rel (%p368) target = $region12
      $region11: #{tpu_custom_call.1} parent=5 // pred_region
        %s372 = ssub.s32 %s34, 1
        // Predicated region
        $region13: #{tpu_custom_call.1} parent=11 // pred_check
          %p373 = pneg %p81
        $region14: #{tpu_custom_call.1} parent=11 // pred_check_branch
          %375 = sbr.rel (%p373) target = $region16
        $region15: #{tpu_custom_call.1} parent=11 // pred_region
          %s377 = ssub.s32 8192, 8192
          %378 = vsyncadd [#allocation6], %s377
          %s379 = sshll.u32 [#allocation5], 4
          %s380 = int_to_ptr.vmem [resolvable:$true] %s379
          %385 = dma.hbm_to_vmem [thread:$0]  %s1, 8192, %s380, [#allocation6], 512, 512, 32
        $region16: #{tpu_custom_call.1} parent=11 // pred_fallthru
          _
        // Predicated region
        $region17: #{tpu_custom_call.1} parent=11 // pred_check
          %p386 = pneg %p102
        $region18: #{tpu_custom_call.1} parent=11 // pred_check_branch
          %388 = sbr.rel (%p386) target = $region20
        $region19: #{tpu_custom_call.1} parent=11 // pred_region
          %s390 = ssub.s32 8192, 8192
          %391 = vsyncadd [#allocation6], %s390
          %s392 = sshll.u32 [#allocation7], 4
          %s393 = int_to_ptr.vmem [resolvable:$true] %s392
          %398 = dma.hbm_to_vmem [thread:$0]  %s2, 8192, %s393, [#allocation6], 128, 128, 8
        $region20: #{tpu_custom_call.1} parent=11 // pred_fallthru
          _
        // Predicated region
        $region21: #{tpu_custom_call.1} parent=11 // pred_check
          %p399 = pneg %p123
        $region22: #{tpu_custom_call.1} parent=11 // pred_check_branch
          %401 = sbr.rel (%p399) target = $region24
        $region23: #{tpu_custom_call.1} parent=11 // pred_region
          %s403 = ssub.s32 8192, 8192
          %404 = vsyncadd [#allocation9], %s403
          %s405 = sshll.u32 [#allocation8], 4
          %s406 = int_to_ptr.vmem [resolvable:$true] %s405
          %411 = dma.hbm_to_vmem [thread:$0]  %s3, 8192, %s406, [#allocation9], 128, 128, 8
        $region24: #{tpu_custom_call.1} parent=11 // pred_fallthru
          _
        // Predicated region
        $region25: #{tpu_custom_call.1} parent=11 // pred_check
          %p412 = pneg %p144
        $region26: #{tpu_custom_call.1} parent=11 // pred_check_branch
          %414 = sbr.rel (%p412) target = $region28
        $region27: #{tpu_custom_call.1} parent=11 // pred_region
          %s416 = ssub.s32 2048, 2048
          %417 = vsyncadd [#allocation9], %s416
          %s418 = sshll.u32 [#allocation10], 4
          %s419 = int_to_ptr.vmem [resolvable:$true] %s418
          %424 = dma.hbm_to_vmem [thread:$0]  %s4, 2048, %s419, [#allocation9], 128, 128, 8
        $region28: #{tpu_custom_call.1} parent=11 // pred_fallthru
          _
        // Predicated region
        $region29: #{tpu_custom_call.1} parent=11 // pred_check
          %p425 = pneg %p165
        $region30: #{tpu_custom_call.1} parent=11 // pred_check_branch
          %427 = sbr.rel (%p425) target = $region32
        $region31: #{tpu_custom_call.1} parent=11 // pred_region
          _
        $region32: #{tpu_custom_call.1} parent=11 // pred_fallthru
          _
        // Predicated region
        $region33: #{tpu_custom_call.1} parent=11 // pred_check
          %p428 = pneg %p186
        $region34: #{tpu_custom_call.1} parent=11 // pred_check_branch
          %430 = sbr.rel (%p428) target = $region36
        $region35: #{tpu_custom_call.1} parent=11 // pred_region
          _
        $region36: #{tpu_custom_call.1} parent=11 // pred_fallthru
          _
        // Predicated region
        $region37: #{tpu_custom_call.1} parent=11 // pred_check
          %p431 = pneg %p207
        $region38: #{tpu_custom_call.1} parent=11 // pred_check_branch
          %433 = sbr.rel (%p431) target = $region40
        $region39: #{tpu_custom_call.1} parent=11 // pred_region
          _
        $region40: #{tpu_custom_call.1} parent=11 // pred_fallthru
          _
        // Predicated region
        $region41: #{tpu_custom_call.1} parent=11 // pred_check
          %p434 = pneg %p228
        $region42: #{tpu_custom_call.1} parent=11 // pred_check_branch
          %436 = sbr.rel (%p434) target = $region44
        $region43: #{tpu_custom_call.1} parent=11 // pred_region
          _
        $region44: #{tpu_custom_call.1} parent=11 // pred_fallthru
          _
      $region12: #{tpu_custom_call.1} parent=5 // pred_fallthru
        _
      %p437 = scmp.lt.s32.totalorder %s34, 2
      // Predicated region
      $region45: #{tpu_custom_call.1} parent=5 // pred_check
        %p438 = pneg %p437
      $region46: #{tpu_custom_call.1} parent=5 // pred_check_branch
        %440 = sbr.rel (%p438) target = $region48
      $region47: #{tpu_custom_call.1} parent=5 // pred_region
        // Predicated region
        $region49: #{tpu_custom_call.1} parent=47 // pred_check
          %p441 = pneg %p54
        $region50: #{tpu_custom_call.1} parent=47 // pred_check_branch
          %443 = sbr.rel (%p441) target = $region52
        $region51: #{tpu_custom_call.1} parent=47 // pred_region
          %s444 = sand.u32 %s44, 1
          %s445 = scalar_lea.sflag [#allocation3], %s444
          %s446 = sand.u32 %s44, 1
          %s447 = smul.addr %s446, 256
          %s448 = scalar_lea.vmem [#allocation2], %s447
          %s449 = smul.u32 32, %s34
          %s451 = ssub.s32 4096, 4096
          %452 = vsyncadd %s445, %s451
          %s453 = smul.addr %s449, 128
          %s454 = scalar_lea.hbm %s0, %s453
          %s455 = sshll.u32 %s448, 4
          %s456 = int_to_ptr.vmem [resolvable:$true] %s455
          %461 = dma.hbm_to_vmem [thread:$0]  %s454, 4096, %s456, %s445, 128, 128, 8
        $region52: #{tpu_custom_call.1} parent=47 // pred_fallthru
          _
      $region48: #{tpu_custom_call.1} parent=5 // pred_fallthru
        _
      %p462 = scmp.le.s32.totalorder 1, %s34
      %p463 = scmp.lt.s32.totalorder %s34, 3
      %p464 = pnand %p462, %p463
      %p465 = pneg %p464
      // Predicated region
      $region53: #{tpu_custom_call.1} parent=5 // pred_check
        _
      $region54: #{tpu_custom_call.1} parent=5 // pred_check_branch
        %467 = sbr.rel (%p464) target = $region56
      $region55: #{tpu_custom_call.1} parent=5 // pred_region
        %s468 = ssub.s32 %s34, 1
        %s469 = sand.u32 %s47, 1
        %s470 = scalar_lea.sflag [#allocation3], %s469
        %s471 = sand.u32 %s47, 1
        %s472 = smul.addr %s471, 256
        %s473 = scalar_lea.vmem [#allocation2], %s472
        // Predicated region
        $region57: #{tpu_custom_call.1} parent=55 // pred_check
          %p474 = pneg %p60
        $region58: #{tpu_custom_call.1} parent=55 // pred_check_branch
          %476 = sbr.rel (%p474) target = $region60
        $region59: #{tpu_custom_call.1} parent=55 // pred_region
          %477 = dma.done %s470, 4096
        $region60: #{tpu_custom_call.1} parent=55 // pred_fallthru
          _
        // Predicated region
        $region61: #{tpu_custom_call.1} parent=55 // pred_check
          %p478 = pneg %p81
        $region62: #{tpu_custom_call.1} parent=55 // pred_check_branch
          %480 = sbr.rel (%p478) target = $region64
        $region63: #{tpu_custom_call.1} parent=55 // pred_region
          %481 = dma.done [#allocation6], 8192
        $region64: #{tpu_custom_call.1} parent=55 // pred_fallthru
          _
        // Predicated region
        $region65: #{tpu_custom_call.1} parent=55 // pred_check
          %p482 = pneg %p102
        $region66: #{tpu_custom_call.1} parent=55 // pred_check_branch
          %484 = sbr.rel (%p482) target = $region68
        $region67: #{tpu_custom_call.1} parent=55 // pred_region
          %485 = dma.done [#allocation6], 8192
        $region68: #{tpu_custom_call.1} parent=55 // pred_fallthru
          _
        // Predicated region
        $region69: #{tpu_custom_call.1} parent=55 // pred_check
          %p486 = pneg %p123
        $region70: #{tpu_custom_call.1} parent=55 // pred_check_branch
          %488 = sbr.rel (%p486) target = $region72
        $region71: #{tpu_custom_call.1} parent=55 // pred_region
          %489 = dma.done [#allocation9], 8192
        $region72: #{tpu_custom_call.1} parent=55 // pred_fallthru
          _
        // Predicated region
        $region73: #{tpu_custom_call.1} parent=55 // pred_check
          %p490 = pneg %p144
        $region74: #{tpu_custom_call.1} parent=55 // pred_check_branch
          %492 = sbr.rel (%p490) target = $region76
        $region75: #{tpu_custom_call.1} parent=55 // pred_region
          %493 = dma.done [#allocation9], 2048
        $region76: #{tpu_custom_call.1} parent=55 // pred_fallthru
          _
        %s494 = sand.u32 %s47, 1
        %s495 = scalar_lea.sflag [#allocation3], %s494
        %s496 = sand.u32 %s47, 1
        %s497 = smul.addr %s496, 256
        %s498 = scalar_lea.vmem [#allocation2], %s497
        %p499 = pneg %p60
        %p500 = pneg %p57
        %p501 = pneg %p81
        %p502 = pneg %p78
        %p503 = pneg %p102
        %p504 = pneg %p99
        %p505 = pneg %p123
        %p506 = pneg %p120
        %p507 = pneg %p144
        %p508 = pneg %p141
        %p509 = pneg %p165
        %p510 = pneg %p162
        %p511 = pneg %p186
        %p512 = pneg %p183
        %p513 = pneg %p207
        %p514 = pneg %p204
        %p515 = pneg %p228
        %p516 = pneg %p225
        %p517 = pneg %p254
        %p518 = pneg %p251
        %s519 = sand.u32 %s241, 1
        %s520 = scalar_lea.sflag [#allocation4], %s519
        %s521 = sand.u32 %s241, 1
        %s522 = smul.addr %s521, 256
        %s523 = scalar_lea.vmem [#allocation11], %s522
        %p524 = pneg %p280
        %p525 = pneg %p277
        %s526 = sand.u32 %s39, 1
        %s527 = scalar_lea.sflag [#allocation13], %s526
        %s528 = sand.u32 %s267, 1
        %s529 = smul.addr %s528, 256
        %s530 = scalar_lea.vmem [#allocation12], %s529
        %p531 = pneg %p306
        %p532 = pneg %p303
        %s533 = sand.u32 %s39, 1
        %s534 = scalar_lea.sflag [#allocation13], %s533
        %s535 = sand.u32 %s293, 1
        %s536 = smul.addr %s535, 1024
        %s537 = scalar_lea.vmem [#allocation14], %s536
        %p538 = pneg %p332
        %p539 = pneg %p329
        %s540 = sand.u32 %s39, 1
        %s541 = scalar_lea.sflag [#allocation16], %s540
        %s542 = sand.u32 %s319, 1
        %s543 = smul.addr %s542, 256
        %s544 = scalar_lea.vmem [#allocation15], %s543
        %p545 = pneg %p358
        %p546 = pneg %p355
        %s547 = sand.u32 %s39, 1
        %s548 = scalar_lea.sflag [#allocation16], %s547
        %s549 = sand.u32 %s345, 1
        %s550 = scalar_lea.vmem [#allocation17], %s549
        %s551 = smul.u32 32, %s39
        %s552 = smul.u32 32, %s39
        %s553 = smul.u32 32, %s39
        %s554 = smul.u32 32, %s39
        %s555 = smul.u32 32, %s39
        %v556 = vld [vmem:[%s473] sm:$0xff]
        %v557 = vld [vmem:[%s473 + $0x8] sm:$0xff]
        %v558 = vld [vmem:[%s473 + $0x10] sm:$0xff]
        %v559 = vld [vmem:[%s473 + $0x18] sm:$0xff]
        %v560 = vld [vmem:[%s473 + $0x20] sm:$0xff]
        %v561 = vld [vmem:[%s473 + $0x28] sm:$0xff]
        %v562 = vld [vmem:[%s473 + $0x30] sm:$0xff]
        %v563 = vld [vmem:[%s473 + $0x38] sm:$0xff]
        %v564 = vld [vmem:[%s473 + $0x40] sm:$0xff]
        %v565 = vld [vmem:[%s473 + $0x48] sm:$0xff]
        %v566 = vld [vmem:[%s473 + $0x50] sm:$0xff]
        %v567 = vld [vmem:[%s473 + $0x58] sm:$0xff]
        %v568 = vld [vmem:[%s473 + $0x60] sm:$0xff]
        %v569 = vld [vmem:[%s473 + $0x68] sm:$0xff]
        %v570 = vld [vmem:[%s473 + $0x70] sm:$0xff]
        %v571 = vld [vmem:[%s473 + $0x78] sm:$0xff]
        %v572 = vld [vmem:[%s473 + $0x80] sm:$0xff]
        %v573 = vld [vmem:[%s473 + $0x88] sm:$0xff]
        %v574 = vld [vmem:[%s473 + $0x90] sm:$0xff]
        %v575 = vld [vmem:[%s473 + $0x98] sm:$0xff]
        %v576 = vld [vmem:[%s473 + $0xa0] sm:$0xff]
        %v577 = vld [vmem:[%s473 + $0xa8] sm:$0xff]
        %v578 = vld [vmem:[%s473 + $0xb0] sm:$0xff]
        %v579 = vld [vmem:[%s473 + $0xb8] sm:$0xff]
        %v580 = vld [vmem:[%s473 + $0xc0] sm:$0xff]
        %v581 = vld [vmem:[%s473 + $0xc8] sm:$0xff]
        %v582 = vld [vmem:[%s473 + $0xd0] sm:$0xff]
        %v583 = vld [vmem:[%s473 + $0xd8] sm:$0xff]
        %v584 = vld [vmem:[%s473 + $0xe0] sm:$0xff]
        %v585 = vld [vmem:[%s473 + $0xe8] sm:$0xff]
        %v586 = vld [vmem:[%s473 + $0xf0] sm:$0xff]
        %v587 = vld [vmem:[%s473 + $0xf8] sm:$0xff]
        %v588 = vld [vmem:[%s7] sm:$0x1]
        %v589 = vld [vmem:[%s8] sm:$0x1]
        %v590 = vadd.f32 %v588, %v589
        %v591 = vmul.f32 %v590, 0.5
        %v593 = vlaneseq
        %v594 = vshrl.u32 %v593, 7
        %v595 = vsub.s32 0, %v594
        %v596 = vrot.slane %v591, %v595
        %v598 = vsub.f32 %v556, %v596
        %v599 = vsub.f32 %v557, %v596
        %v600 = vsub.f32 %v558, %v596
        %v601 = vsub.f32 %v559, %v596
        %v602 = vsub.f32 %v560, %v596
        %v603 = vsub.f32 %v561, %v596
        %v604 = vsub.f32 %v562, %v596
        %v605 = vsub.f32 %v563, %v596
        %v606 = vsub.f32 %v564, %v596
        %v607 = vsub.f32 %v565, %v596
        %v608 = vsub.f32 %v566, %v596
        %v609 = vsub.f32 %v567, %v596
        %v610 = vsub.f32 %v568, %v596
        %v611 = vsub.f32 %v569, %v596
        %v612 = vsub.f32 %v570, %v596
        %v613 = vsub.f32 %v571, %v596
        %v614 = vsub.f32 %v572, %v596
        %v615 = vsub.f32 %v573, %v596
        %v616 = vsub.f32 %v574, %v596
        %v617 = vsub.f32 %v575, %v596
        %v618 = vsub.f32 %v576, %v596
        %v619 = vsub.f32 %v577, %v596
        %v620 = vsub.f32 %v578, %v596
        %v621 = vsub.f32 %v579, %v596
        %v622 = vsub.f32 %v580, %v596
        %v623 = vsub.f32 %v581, %v596
        %v624 = vsub.f32 %v582, %v596
        %v625 = vsub.f32 %v583, %v596
        %v626 = vsub.f32 %v584, %v596
        %v627 = vsub.f32 %v585, %v596
        %v628 = vsub.f32 %v586, %v596
        %v629 = vsub.f32 %v587, %v596
        %v630 = vld [vmem:[#allocation5] sm:$0xff]
        %v631 = vld [vmem:[#allocation5 + $0x8] sm:$0xff]
        %v632 = vld [vmem:[#allocation5 + $0x10] sm:$0xff]
        %v633 = vld [vmem:[#allocation5 + $0x18] sm:$0xff]
        %v634 = vld [vmem:[#allocation5 + $0x20] sm:$0xff]
        %v635 = vld [vmem:[#allocation5 + $0x28] sm:$0xff]
        %v636 = vld [vmem:[#allocation5 + $0x30] sm:$0xff]
        %v637 = vld [vmem:[#allocation5 + $0x38] sm:$0xff]
        %v638 = vld [vmem:[#allocation5 + $0x40] sm:$0xff]
        %v639 = vld [vmem:[#allocation5 + $0x48] sm:$0xff]
        %v640 = vld [vmem:[#allocation5 + $0x50] sm:$0xff]
        %v641 = vld [vmem:[#allocation5 + $0x58] sm:$0xff]
        %v642 = vld [vmem:[#allocation5 + $0x60] sm:$0xff]
        %v643 = vld [vmem:[#allocation5 + $0x68] sm:$0xff]
        %v644 = vld [vmem:[#allocation5 + $0x70] sm:$0xff]
        %v645 = vld [vmem:[#allocation5 + $0x78] sm:$0xff]
        %v646 = vld [vmem:[#allocation5 + $0x80] sm:$0xff]
        %v647 = vld [vmem:[#allocation5 + $0x88] sm:$0xff]
        %v648 = vld [vmem:[#allocation5 + $0x90] sm:$0xff]
        %v649 = vld [vmem:[#allocation5 + $0x98] sm:$0xff]
        %v650 = vld [vmem:[#allocation5 + $0xa0] sm:$0xff]
        %v651 = vld [vmem:[#allocation5 + $0xa8] sm:$0xff]
        %v652 = vld [vmem:[#allocation5 + $0xb0] sm:$0xff]
        %v653 = vld [vmem:[#allocation5 + $0xb8] sm:$0xff]
        %v654 = vld [vmem:[#allocation5 + $0xc0] sm:$0xff]
        %v655 = vld [vmem:[#allocation5 + $0xc8] sm:$0xff]
        %v656 = vld [vmem:[#allocation5 + $0xd0] sm:$0xff]
        %v657 = vld [vmem:[#allocation5 + $0xd8] sm:$0xff]
        %v658 = vld [vmem:[#allocation5 + $0xe0] sm:$0xff]
        %v659 = vld [vmem:[#allocation5 + $0xe8] sm:$0xff]
        %v660 = vld [vmem:[#allocation5 + $0xf0] sm:$0xff]
        %v661 = vld [vmem:[#allocation5 + $0xf8] sm:$0xff]
        %v662 = vld [vmem:[#allocation5 + $0x100] sm:$0xff]
        %v663 = vld [vmem:[#allocation5 + $0x108] sm:$0xff]
        %v664 = vld [vmem:[#allocation5 + $0x110] sm:$0xff]
        %v665 = vld [vmem:[#allocation5 + $0x118] sm:$0xff]
        %v666 = vld [vmem:[#allocation5 + $0x120] sm:$0xff]
        %v667 = vld [vmem:[#allocation5 + $0x128] sm:$0xff]
        %v668 = vld [vmem:[#allocation5 + $0x130] sm:$0xff]
        %v669 = vld [vmem:[#allocation5 + $0x138] sm:$0xff]
        %v670 = vld [vmem:[#allocation5 + $0x140] sm:$0xff]
        %v671 = vld [vmem:[#allocation5 + $0x148] sm:$0xff]
        %v672 = vld [vmem:[#allocation5 + $0x150] sm:$0xff]
        %v673 = vld [vmem:[#allocation5 + $0x158] sm:$0xff]
        %v674 = vld [vmem:[#allocation5 + $0x160] sm:$0xff]
        %v675 = vld [vmem:[#allocation5 + $0x168] sm:$0xff]
        %v676 = vld [vmem:[#allocation5 + $0x170] sm:$0xff]
        %v677 = vld [vmem:[#allocation5 + $0x178] sm:$0xff]
        %v678 = vld [vmem:[#allocation5 + $0x180] sm:$0xff]
        %v679 = vld [vmem:[#allocation5 + $0x188] sm:$0xff]
        %v680 = vld [vmem:[#allocation5 + $0x190] sm:$0xff]
        %v681 = vld [vmem:[#allocation5 + $0x198] sm:$0xff]
        %v682 = vld [vmem:[#allocation5 + $0x1a0] sm:$0xff]
        %v683 = vld [vmem:[#allocation5 + $0x1a8] sm:$0xff]
        %v684 = vld [vmem:[#allocation5 + $0x1b0] sm:$0xff]
        %v685 = vld [vmem:[#allocation5 + $0x1b8] sm:$0xff]
        %v686 = vld [vmem:[#allocation5 + $0x1c0] sm:$0xff]
        %v687 = vld [vmem:[#allocation5 + $0x1c8] sm:$0xff]
        %v688 = vld [vmem:[#allocation5 + $0x1d0] sm:$0xff]
        %v689 = vld [vmem:[#allocation5 + $0x1d8] sm:$0xff]
        %v690 = vld [vmem:[#allocation5 + $0x1e0] sm:$0xff]
        %v691 = vld [vmem:[#allocation5 + $0x1e8] sm:$0xff]
        %v692 = vld [vmem:[#allocation5 + $0x1f0] sm:$0xff]
        %v693 = vld [vmem:[#allocation5 + $0x1f8] sm:$0xff]
        %v694 = vld [vmem:[%s5] sm:$0xf]
        %v696 = vlaneseq
        %v697 = vshrl.u32 %v696, 7
        %v698 = vsub.s32 0, %v697
        %v699 = vrot.slane %v694, %v698
        %v700 = vlaneseq
        %v701 = vshrl.u32 %v700, 7
        %v702 = vsub.s32 1, %v701
        %v703 = vrot.slane %v694, %v702
        %v704 = vlaneseq
        %v705 = vshrl.u32 %v704, 7
        %v706 = vsub.s32 2, %v705
        %v707 = vrot.slane %v694, %v706
        %v708 = vlaneseq
        %v709 = vshrl.u32 %v708, 7
        %v710 = vsub.s32 3, %v709
        %v711 = vrot.slane %v694, %v710
        %716 = vmatprep.subr.mxu0 %v691
        %717 = vmatpush1.msra.mxu0 %v690
        %718 = vmatprep.subr.mxu0 %v687
        %719 = vmatpush1.msra.mxu0 %v686
        %720 = vmatprep.subr.mxu0 %v683
        %721 = vmatpush1.msra.mxu0 %v682
        %722 = vmatprep.subr.mxu0 %v679
        %723 = vmatpush1.msra.mxu0 %v678
        %724 = vmatprep.subr.mxu0 %v675
        %725 = vmatpush1.msra.mxu0 %v674
        %726 = vmatprep.subr.mxu0 %v671
        %727 = vmatpush1.msra.mxu0 %v670
        %728 = vmatprep.subr.mxu0 %v667
        %729 = vmatpush1.msra.mxu0 %v666
        %730 = vmatprep.subr.mxu0 %v663
        %731 = vmatpush1.msra.mxu0 %v662
        %732 = vmatprep.subr.mxu0 %v659
        %733 = vmatpush1.msra.mxu0 %v658
        %734 = vmatprep.subr.mxu0 %v655
        %735 = vmatpush1.msra.mxu0 %v654
        %736 = vmatprep.subr.mxu0 %v651
        %737 = vmatpush1.msra.mxu0 %v650
        %738 = vmatprep.subr.mxu0 %v647
        %739 = vmatpush1.msra.mxu0 %v646
        %740 = vmatprep.subr.mxu0 %v643
        %741 = vmatpush1.msra.mxu0 %v642
        %742 = vmatprep.subr.mxu0 %v639
        %743 = vmatpush1.msra.mxu0 %v638
        %744 = vmatprep.subr.mxu0 %v635
        %745 = vmatpush1.msra.mxu0 %v634
        %746 = vmatprep.subr.mxu0 %v631
        %747 = vmatpush1.msra.mxu0 %v630
        %748 = vmatprep.subr.mxu0 0.0
        %749 = vmatpush2.msra.mxu0 0.0
        %750 = vmatprep.subr.mxu0 0.0
        %751 = vmatpush2.msra.mxu0 0.0
        %752 = vmatprep.subr.mxu0 0.0
        %753 = vmatpush2.msra.mxu0 0.0
        %754 = vmatprep.subr.mxu0 0.0
        %755 = vmatpush2.msra.mxu0 0.0
        %756 = vmatprep.subr.mxu0 0.0
        %757 = vmatpush2.msra.mxu0 0.0
        %758 = vmatprep.subr.mxu0 0.0
        %759 = vmatpush2.msra.mxu0 0.0
        %760 = vmatprep.subr.mxu0 0.0
        %761 = vmatpush2.msra.mxu0 0.0
        %762 = vmatprep.subr.mxu0 0.0
        %763 = vmatpush2.msra.mxu0 0.0
        %764 = vmatprep.subr.mxu0 0.0
        %765 = vmatpush2.msra.mxu0 0.0
        %766 = vmatprep.subr.mxu0 0.0
        %767 = vmatpush2.msra.mxu0 0.0
        %768 = vmatprep.subr.mxu0 0.0
        %769 = vmatpush2.msra.mxu0 0.0
        %770 = vmatprep.subr.mxu0 0.0
        %771 = vmatpush2.msra.mxu0 0.0
        %772 = vmatprep.subr.mxu0 0.0
        %773 = vmatpush2.msra.mxu0 0.0
        %774 = vmatprep.subr.mxu0 0.0
        %775 = vmatpush2.msra.mxu0 0.0
        %776 = vmatprep.subr.mxu0 0.0
        %777 = vmatpush2.msra.mxu0 0.0
        %778 = vmatprep.subr.mxu0 0.0
        %779 = vmatpush2.msra.mxu0 0.0
        %780 = vmatprep.mubr.f32.mxu0 0.0
        %781 = vmatmul.mubr.f32.gmra.mxu0 %v598
        %v782 = vpop.f32.mrf.mxu0
        %v783 = vadd.f32 %v699, %v782
        %v784 = vpop.f32.mrf.mxu0
        %v785 = vadd.f32 %v703, %v784
        %786 = vmatprep.mubr.f32.mxu0 0.0
        %787 = vmatmul.mubr.f32.gmra.mxu0 %v599
        %v788 = vpop.f32.mrf.mxu0
        %v789 = vadd.f32 %v699, %v788
        %v790 = vpop.f32.mrf.mxu0
        %v791 = vadd.f32 %v703, %v790
        %792 = vmatprep.mubr.f32.mxu0 0.0
        %793 = vmatmul.mubr.f32.gmra.mxu0 %v600
        %v794 = vpop.f32.mrf.mxu0
        %v795 = vadd.f32 %v699, %v794
        %v796 = vpop.f32.mrf.mxu0
        %v797 = vadd.f32 %v703, %v796
        %798 = vmatprep.mubr.f32.mxu0 0.0
        %799 = vmatmul.mubr.f32.gmra.mxu0 %v601
        %v800 = vpop.f32.mrf.mxu0
        %v801 = vadd.f32 %v699, %v800
        %v802 = vpop.f32.mrf.mxu0
        %v803 = vadd.f32 %v703, %v802
        %804 = vmatprep.mubr.f32.mxu0 0.0
        %805 = vmatmul.mubr.f32.gmra.mxu0 %v602
        %v806 = vpop.f32.mrf.mxu0
        %v807 = vadd.f32 %v699, %v806
        %v808 = vpop.f32.mrf.mxu0
        %v809 = vadd.f32 %v703, %v808
        %810 = vmatprep.mubr.f32.mxu0 0.0
        %811 = vmatmul.mubr.f32.gmra.mxu0 %v603
        %v812 = vpop.f32.mrf.mxu0
        %v813 = vadd.f32 %v699, %v812
        %v814 = vpop.f32.mrf.mxu0
        %v815 = vadd.f32 %v703, %v814
        %816 = vmatprep.mubr.f32.mxu0 0.0
        %817 = vmatmul.mubr.f32.gmra.mxu0 %v604
        %v818 = vpop.f32.mrf.mxu0
        %v819 = vadd.f32 %v699, %v818
        %v820 = vpop.f32.mrf.mxu0
        %v821 = vadd.f32 %v703, %v820
        %822 = vmatprep.mubr.f32.mxu0 0.0
        %823 = vmatmul.mubr.f32.gmra.mxu0 %v605
        %v824 = vpop.f32.mrf.mxu0
        %v825 = vadd.f32 %v699, %v824
        %v826 = vpop.f32.mrf.mxu0
        %v827 = vadd.f32 %v703, %v826
        %828 = vmatprep.mubr.f32.mxu0 0.0
        %829 = vmatmul.mubr.f32.gmra.mxu0 %v606
        %v830 = vpop.f32.mrf.mxu0
        %v831 = vadd.f32 %v699, %v830
        %v832 = vpop.f32.mrf.mxu0
        %v833 = vadd.f32 %v703, %v832
        %834 = vmatprep.mubr.f32.mxu0 0.0
        %835 = vmatmul.mubr.f32.gmra.mxu0 %v607
        %v836 = vpop.f32.mrf.mxu0
        %v837 = vadd.f32 %v699, %v836
        %v838 = vpop.f32.mrf.mxu0
        %v839 = vadd.f32 %v703, %v838
        %840 = vmatprep.mubr.f32.mxu0 0.0
        %841 = vmatmul.mubr.f32.gmra.mxu0 %v608
        %v842 = vpop.f32.mrf.mxu0
        %v843 = vadd.f32 %v699, %v842
        %v844 = vpop.f32.mrf.mxu0
        %v845 = vadd.f32 %v703, %v844
        %846 = vmatprep.mubr.f32.mxu0 0.0
        %847 = vmatmul.mubr.f32.gmra.mxu0 %v609
        %v848 = vpop.f32.mrf.mxu0
        %v849 = vadd.f32 %v699, %v848
        %v850 = vpop.f32.mrf.mxu0
        %v851 = vadd.f32 %v703, %v850
        %852 = vmatprep.mubr.f32.mxu0 0.0
        %853 = vmatmul.mubr.f32.gmra.mxu0 %v610
        %v854 = vpop.f32.mrf.mxu0
        %v855 = vadd.f32 %v699, %v854
        %v856 = vpop.f32.mrf.mxu0
        %v857 = vadd.f32 %v703, %v856
        %858 = vmatprep.mubr.f32.mxu0 0.0
        %859 = vmatmul.mubr.f32.gmra.mxu0 %v611
        %v860 = vpop.f32.mrf.mxu0
        %v861 = vadd.f32 %v699, %v860
        %v862 = vpop.f32.mrf.mxu0
        %v863 = vadd.f32 %v703, %v862
        %864 = vmatprep.mubr.f32.mxu0 0.0
        %865 = vmatmul.mubr.f32.gmra.mxu0 %v612
        %v866 = vpop.f32.mrf.mxu0
        %v867 = vadd.f32 %v699, %v866
        %v868 = vpop.f32.mrf.mxu0
        %v869 = vadd.f32 %v703, %v868
        %870 = vmatprep.mubr.f32.mxu0 0.0
        %871 = vmatmul.mubr.f32.gmra.mxu0 %v613
        %v872 = vpop.f32.mrf.mxu0
        %v873 = vadd.f32 %v699, %v872
        %v874 = vpop.f32.mrf.mxu0
        %v875 = vadd.f32 %v703, %v874
        %876 = vmatprep.mubr.f32.mxu0 0.0
        %877 = vmatmul.mubr.f32.gmra.mxu0 %v614
        %v878 = vpop.f32.mrf.mxu0
        %v879 = vadd.f32 %v699, %v878
        %v880 = vpop.f32.mrf.mxu0
        %v881 = vadd.f32 %v703, %v880
        %882 = vmatprep.mubr.f32.mxu0 0.0
        %883 = vmatmul.mubr.f32.gmra.mxu0 %v615
        %v884 = vpop.f32.mrf.mxu0
        %v885 = vadd.f32 %v699, %v884
        %v886 = vpop.f32.mrf.mxu0
        %v887 = vadd.f32 %v703, %v886
        %888 = vmatprep.mubr.f32.mxu0 0.0
        %889 = vmatmul.mubr.f32.gmra.mxu0 %v616
        %v890 = vpop.f32.mrf.mxu0
        %v891 = vadd.f32 %v699, %v890
        %v892 = vpop.f32.mrf.mxu0
        %v893 = vadd.f32 %v703, %v892
        %894 = vmatprep.mubr.f32.mxu0 0.0
        %895 = vmatmul.mubr.f32.gmra.mxu0 %v617
        %v896 = vpop.f32.mrf.mxu0
        %v897 = vadd.f32 %v699, %v896
        %v898 = vpop.f32.mrf.mxu0
        %v899 = vadd.f32 %v703, %v898
        %900 = vmatprep.mubr.f32.mxu0 0.0
        %901 = vmatmul.mubr.f32.gmra.mxu0 %v618
        %v902 = vpop.f32.mrf.mxu0
        %v903 = vadd.f32 %v699, %v902
        %v904 = vpop.f32.mrf.mxu0
        %v905 = vadd.f32 %v703, %v904
        %906 = vmatprep.mubr.f32.mxu0 0.0
        %907 = vmatmul.mubr.f32.gmra.mxu0 %v619
        %v908 = vpop.f32.mrf.mxu0
        %v909 = vadd.f32 %v699, %v908
        %v910 = vpop.f32.mrf.mxu0
        %v911 = vadd.f32 %v703, %v910
        %912 = vmatprep.mubr.f32.mxu0 0.0
        %913 = vmatmul.mubr.f32.gmra.mxu0 %v620
        %v914 = vpop.f32.mrf.mxu0
        %v915 = vadd.f32 %v699, %v914
        %v916 = vpop.f32.mrf.mxu0
        %v917 = vadd.f32 %v703, %v916
        %918 = vmatprep.mubr.f32.mxu0 0.0
        %919 = vmatmul.mubr.f32.gmra.mxu0 %v621
        %v920 = vpop.f32.mrf.mxu0
        %v921 = vadd.f32 %v699, %v920
        %v922 = vpop.f32.mrf.mxu0
        %v923 = vadd.f32 %v703, %v922
        %924 = vmatprep.mubr.f32.mxu0 0.0
        %925 = vmatmul.mubr.f32.gmra.mxu0 %v622
        %v926 = vpop.f32.mrf.mxu0
        %v927 = vadd.f32 %v699, %v926
        %v928 = vpop.f32.mrf.mxu0
        %v929 = vadd.f32 %v703, %v928
        %930 = vmatprep.mubr.f32.mxu0 0.0
        %931 = vmatmul.mubr.f32.gmra.mxu0 %v623
        %v932 = vpop.f32.mrf.mxu0
        %v933 = vadd.f32 %v699, %v932
        %v934 = vpop.f32.mrf.mxu0
        %v935 = vadd.f32 %v703, %v934
        %936 = vmatprep.mubr.f32.mxu0 0.0
        %937 = vmatmul.mubr.f32.gmra.mxu0 %v624
        %v938 = vpop.f32.mrf.mxu0
        %v939 = vadd.f32 %v699, %v938
        %v940 = vpop.f32.mrf.mxu0
        %v941 = vadd.f32 %v703, %v940
        %942 = vmatprep.mubr.f32.mxu0 0.0
        %943 = vmatmul.mubr.f32.gmra.mxu0 %v625
        %v944 = vpop.f32.mrf.mxu0
        %v945 = vadd.f32 %v699, %v944
        %v946 = vpop.f32.mrf.mxu0
        %v947 = vadd.f32 %v703, %v946
        %948 = vmatprep.mubr.f32.mxu0 0.0
        %949 = vmatmul.mubr.f32.gmra.mxu0 %v626
        %v950 = vpop.f32.mrf.mxu0
        %v951 = vadd.f32 %v699, %v950
        %v952 = vpop.f32.mrf.mxu0
        %v953 = vadd.f32 %v703, %v952
        %954 = vmatprep.mubr.f32.mxu0 0.0
        %955 = vmatmul.mubr.f32.gmra.mxu0 %v627
        %v956 = vpop.f32.mrf.mxu0
        %v957 = vadd.f32 %v699, %v956
        %v958 = vpop.f32.mrf.mxu0
        %v959 = vadd.f32 %v703, %v958
        %960 = vmatprep.mubr.f32.mxu0 0.0
        %961 = vmatmul.mubr.f32.gmra.mxu0 %v628
        %v962 = vpop.f32.mrf.mxu0
        %v963 = vadd.f32 %v699, %v962
        %v964 = vpop.f32.mrf.mxu0
        %v965 = vadd.f32 %v703, %v964
        %966 = vmatprep.mubr.f32.mxu0 0.0
        %967 = vmatmul.mubr.f32.gmra.mxu0 %v629
        %v968 = vpop.f32.mrf.mxu0
        %v969 = vadd.f32 %v699, %v968
        %v970 = vpop.f32.mrf.mxu0
        %v971 = vadd.f32 %v703, %v970
        %972 = vdwg.mxu0
        %973 = vmatprep.subr.mxu0 %v693
        %974 = vmatpush1.msra.mxu0 %v692
        %975 = vmatprep.subr.mxu0 %v689
        %976 = vmatpush1.msra.mxu0 %v688
        %977 = vmatprep.subr.mxu0 %v685
        %978 = vmatpush1.msra.mxu0 %v684
        %979 = vmatprep.subr.mxu0 %v681
        %980 = vmatpush1.msra.mxu0 %v680
        %981 = vmatprep.subr.mxu0 %v677
        %982 = vmatpush1.msra.mxu0 %v676
        %983 = vmatprep.subr.mxu0 %v673
        %984 = vmatpush1.msra.mxu0 %v672
        %985 = vmatprep.subr.mxu0 %v669
        %986 = vmatpush1.msra.mxu0 %v668
        %987 = vmatprep.subr.mxu0 %v665
        %988 = vmatpush1.msra.mxu0 %v664
        %989 = vmatprep.subr.mxu0 %v661
        %990 = vmatpush1.msra.mxu0 %v660
        %991 = vmatprep.subr.mxu0 %v657
        %992 = vmatpush1.msra.mxu0 %v656
        %993 = vmatprep.subr.mxu0 %v653
        %994 = vmatpush1.msra.mxu0 %v652
        %995 = vmatprep.subr.mxu0 %v649
        %996 = vmatpush1.msra.mxu0 %v648
        %997 = vmatprep.subr.mxu0 %v645
        %998 = vmatpush1.msra.mxu0 %v644
        %999 = vmatprep.subr.mxu0 %v641
        %1000 = vmatpush1.msra.mxu0 %v640
        %1001 = vmatprep.subr.mxu0 %v637
        %1002 = vmatpush1.msra.mxu0 %v636
        %1003 = vmatprep.subr.mxu0 %v633
        %1004 = vmatpush1.msra.mxu0 %v632
        %1005 = vmatprep.subr.mxu0 0.0
        %1006 = vmatpush2.msra.mxu0 0.0
        %1007 = vmatprep.subr.mxu0 0.0
        %1008 = vmatpush2.msra.mxu0 0.0
        %1009 = vmatprep.subr.mxu0 0.0
        %1010 = vmatpush2.msra.mxu0 0.0
        %1011 = vmatprep.subr.mxu0 0.0
        %1012 = vmatpush2.msra.mxu0 0.0
        %1013 = vmatprep.subr.mxu0 0.0
        %1014 = vmatpush2.msra.mxu0 0.0
        %1015 = vmatprep.subr.mxu0 0.0
        %1016 = vmatpush2.msra.mxu0 0.0
        %1017 = vmatprep.subr.mxu0 0.0
        %1018 = vmatpush2.msra.mxu0 0.0
        %1019 = vmatprep.subr.mxu0 0.0
        %1020 = vmatpush2.msra.mxu0 0.0
        %1021 = vmatprep.subr.mxu0 0.0
        %1022 = vmatpush2.msra.mxu0 0.0
        %1023 = vmatprep.subr.mxu0 0.0
        %1024 = vmatpush2.msra.mxu0 0.0
        %1025 = vmatprep.subr.mxu0 0.0
        %1026 = vmatpush2.msra.mxu0 0.0
        %1027 = vmatprep.subr.mxu0 0.0
        %1028 = vmatpush2.msra.mxu0 0.0
        %1029 = vmatprep.subr.mxu0 0.0
        %1030 = vmatpush2.msra.mxu0 0.0
        %1031 = vmatprep.subr.mxu0 0.0
        %1032 = vmatpush2.msra.mxu0 0.0
        %1033 = vmatprep.subr.mxu0 0.0
        %1034 = vmatpush2.msra.mxu0 0.0
        %1035 = vmatprep.subr.mxu0 0.0
        %1036 = vmatpush2.msra.mxu0 0.0
        %1037 = vmatprep.mubr.f32.mxu0 0.0
        %1038 = vmatmul.mubr.f32.gmra.mxu0 %v598
        %v1039 = vpop.f32.mrf.mxu0
        %v1040 = vadd.f32 %v707, %v1039
        %v1041 = vpop.f32.mrf.mxu0
        %v1042 = vadd.f32 %v711, %v1041
        %1043 = vmatprep.mubr.f32.mxu0 0.0
        %1044 = vmatmul.mubr.f32.gmra.mxu0 %v599
        %v1045 = vpop.f32.mrf.mxu0
        %v1046 = vadd.f32 %v707, %v1045
        %v1047 = vpop.f32.mrf.mxu0
        %v1048 = vadd.f32 %v711, %v1047
        %1049 = vmatprep.mubr.f32.mxu0 0.0
        %1050 = vmatmul.mubr.f32.gmra.mxu0 %v600
        %v1051 = vpop.f32.mrf.mxu0
        %v1052 = vadd.f32 %v707, %v1051
        %v1053 = vpop.f32.mrf.mxu0
        %v1054 = vadd.f32 %v711, %v1053
        %1055 = vmatprep.mubr.f32.mxu0 0.0
        %1056 = vmatmul.mubr.f32.gmra.mxu0 %v601
        %v1057 = vpop.f32.mrf.mxu0
        %v1058 = vadd.f32 %v707, %v1057
        %v1059 = vpop.f32.mrf.mxu0
        %v1060 = vadd.f32 %v711, %v1059
        %1061 = vmatprep.mubr.f32.mxu0 0.0
        %1062 = vmatmul.mubr.f32.gmra.mxu0 %v602
        %v1063 = vpop.f32.mrf.mxu0
        %v1064 = vadd.f32 %v707, %v1063
        %v1065 = vpop.f32.mrf.mxu0
        %v1066 = vadd.f32 %v711, %v1065
        %1067 = vmatprep.mubr.f32.mxu0 0.0
        %1068 = vmatmul.mubr.f32.gmra.mxu0 %v603
        %v1069 = vpop.f32.mrf.mxu0
        %v1070 = vadd.f32 %v707, %v1069
        %v1071 = vpop.f32.mrf.mxu0
        %v1072 = vadd.f32 %v711, %v1071
        %1073 = vmatprep.mubr.f32.mxu0 0.0
        %1074 = vmatmul.mubr.f32.gmra.mxu0 %v604
        %v1075 = vpop.f32.mrf.mxu0
        %v1076 = vadd.f32 %v707, %v1075
        %v1077 = vpop.f32.mrf.mxu0
        %v1078 = vadd.f32 %v711, %v1077
        %1079 = vmatprep.mubr.f32.mxu0 0.0
        %1080 = vmatmul.mubr.f32.gmra.mxu0 %v605
        %v1081 = vpop.f32.mrf.mxu0
        %v1082 = vadd.f32 %v707, %v1081
        %v1083 = vpop.f32.mrf.mxu0
        %v1084 = vadd.f32 %v711, %v1083
        %1085 = vmatprep.mubr.f32.mxu0 0.0
        %1086 = vmatmul.mubr.f32.gmra.mxu0 %v606
        %v1087 = vpop.f32.mrf.mxu0
        %v1088 = vadd.f32 %v707, %v1087
        %v1089 = vpop.f32.mrf.mxu0
        %v1090 = vadd.f32 %v711, %v1089
        %1091 = vmatprep.mubr.f32.mxu0 0.0
        %1092 = vmatmul.mubr.f32.gmra.mxu0 %v607
        %v1093 = vpop.f32.mrf.mxu0
        %v1094 = vadd.f32 %v707, %v1093
        %v1095 = vpop.f32.mrf.mxu0
        %v1096 = vadd.f32 %v711, %v1095
        %1097 = vmatprep.mubr.f32.mxu0 0.0
        %1098 = vmatmul.mubr.f32.gmra.mxu0 %v608
        %v1099 = vpop.f32.mrf.mxu0
        %v1100 = vadd.f32 %v707, %v1099
        %v1101 = vpop.f32.mrf.mxu0
        %v1102 = vadd.f32 %v711, %v1101
        %1103 = vmatprep.mubr.f32.mxu0 0.0
        %1104 = vmatmul.mubr.f32.gmra.mxu0 %v609
        %v1105 = vpop.f32.mrf.mxu0
        %v1106 = vadd.f32 %v707, %v1105
        %v1107 = vpop.f32.mrf.mxu0
        %v1108 = vadd.f32 %v711, %v1107
        %1109 = vmatprep.mubr.f32.mxu0 0.0
        %1110 = vmatmul.mubr.f32.gmra.mxu0 %v610
        %v1111 = vpop.f32.mrf.mxu0
        %v1112 = vadd.f32 %v707, %v1111
        %v1113 = vpop.f32.mrf.mxu0
        %v1114 = vadd.f32 %v711, %v1113
        %1115 = vmatprep.mubr.f32.mxu0 0.0
        %1116 = vmatmul.mubr.f32.gmra.mxu0 %v611
        %v1117 = vpop.f32.mrf.mxu0
        %v1118 = vadd.f32 %v707, %v1117
        %v1119 = vpop.f32.mrf.mxu0
        %v1120 = vadd.f32 %v711, %v1119
        %1121 = vmatprep.mubr.f32.mxu0 0.0
        %1122 = vmatmul.mubr.f32.gmra.mxu0 %v612
        %v1123 = vpop.f32.mrf.mxu0
        %v1124 = vadd.f32 %v707, %v1123
        %v1125 = vpop.f32.mrf.mxu0
        %v1126 = vadd.f32 %v711, %v1125
        %1127 = vmatprep.mubr.f32.mxu0 0.0
        %1128 = vmatmul.mubr.f32.gmra.mxu0 %v613
        %v1129 = vpop.f32.mrf.mxu0
        %v1130 = vadd.f32 %v707, %v1129
        %v1131 = vpop.f32.mrf.mxu0
        %v1132 = vadd.f32 %v711, %v1131
        %1133 = vmatprep.mubr.f32.mxu0 0.0
        %1134 = vmatmul.mubr.f32.gmra.mxu0 %v614
        %v1135 = vpop.f32.mrf.mxu0
        %v1136 = vadd.f32 %v707, %v1135
        %v1137 = vpop.f32.mrf.mxu0
        %v1138 = vadd.f32 %v711, %v1137
        %1139 = vmatprep.mubr.f32.mxu0 0.0
        %1140 = vmatmul.mubr.f32.gmra.mxu0 %v615
        %v1141 = vpop.f32.mrf.mxu0
        %v1142 = vadd.f32 %v707, %v1141
        %v1143 = vpop.f32.mrf.mxu0
        %v1144 = vadd.f32 %v711, %v1143
        %1145 = vmatprep.mubr.f32.mxu0 0.0
        %1146 = vmatmul.mubr.f32.gmra.mxu0 %v616
        %v1147 = vpop.f32.mrf.mxu0
        %v1148 = vadd.f32 %v707, %v1147
        %v1149 = vpop.f32.mrf.mxu0
        %v1150 = vadd.f32 %v711, %v1149
        %1151 = vmatprep.mubr.f32.mxu0 0.0
        %1152 = vmatmul.mubr.f32.gmra.mxu0 %v617
        %v1153 = vpop.f32.mrf.mxu0
        %v1154 = vadd.f32 %v707, %v1153
        %v1155 = vpop.f32.mrf.mxu0
        %v1156 = vadd.f32 %v711, %v1155
        %1157 = vmatprep.mubr.f32.mxu0 0.0
        %1158 = vmatmul.mubr.f32.gmra.mxu0 %v618
        %v1159 = vpop.f32.mrf.mxu0
        %v1160 = vadd.f32 %v707, %v1159
        %v1161 = vpop.f32.mrf.mxu0
        %v1162 = vadd.f32 %v711, %v1161
        %1163 = vmatprep.mubr.f32.mxu0 0.0
        %1164 = vmatmul.mubr.f32.gmra.mxu0 %v619
        %v1165 = vpop.f32.mrf.mxu0
        %v1166 = vadd.f32 %v707, %v1165
        %v1167 = vpop.f32.mrf.mxu0
        %v1168 = vadd.f32 %v711, %v1167
        %1169 = vmatprep.mubr.f32.mxu0 0.0
        %1170 = vmatmul.mubr.f32.gmra.mxu0 %v620
        %v1171 = vpop.f32.mrf.mxu0
        %v1172 = vadd.f32 %v707, %v1171
        %v1173 = vpop.f32.mrf.mxu0
        %v1174 = vadd.f32 %v711, %v1173
        %1175 = vmatprep.mubr.f32.mxu0 0.0
        %1176 = vmatmul.mubr.f32.gmra.mxu0 %v621
        %v1177 = vpop.f32.mrf.mxu0
        %v1178 = vadd.f32 %v707, %v1177
        %v1179 = vpop.f32.mrf.mxu0
        %v1180 = vadd.f32 %v711, %v1179
        %1181 = vmatprep.mubr.f32.mxu0 0.0
        %1182 = vmatmul.mubr.f32.gmra.mxu0 %v622
        %v1183 = vpop.f32.mrf.mxu0
        %v1184 = vadd.f32 %v707, %v1183
        %v1185 = vpop.f32.mrf.mxu0
        %v1186 = vadd.f32 %v711, %v1185
        %1187 = vmatprep.mubr.f32.mxu0 0.0
        %1188 = vmatmul.mubr.f32.gmra.mxu0 %v623
        %v1189 = vpop.f32.mrf.mxu0
        %v1190 = vadd.f32 %v707, %v1189
        %v1191 = vpop.f32.mrf.mxu0
        %v1192 = vadd.f32 %v711, %v1191
        %1193 = vmatprep.mubr.f32.mxu0 0.0
        %1194 = vmatmul.mubr.f32.gmra.mxu0 %v624
        %v1195 = vpop.f32.mrf.mxu0
        %v1196 = vadd.f32 %v707, %v1195
        %v1197 = vpop.f32.mrf.mxu0
        %v1198 = vadd.f32 %v711, %v1197
        %1199 = vmatprep.mubr.f32.mxu0 0.0
        %1200 = vmatmul.mubr.f32.gmra.mxu0 %v625
        %v1201 = vpop.f32.mrf.mxu0
        %v1202 = vadd.f32 %v707, %v1201
        %v1203 = vpop.f32.mrf.mxu0
        %v1204 = vadd.f32 %v711, %v1203
        %1205 = vmatprep.mubr.f32.mxu0 0.0
        %1206 = vmatmul.mubr.f32.gmra.mxu0 %v626
        %v1207 = vpop.f32.mrf.mxu0
        %v1208 = vadd.f32 %v707, %v1207
        %v1209 = vpop.f32.mrf.mxu0
        %v1210 = vadd.f32 %v711, %v1209
        %1211 = vmatprep.mubr.f32.mxu0 0.0
        %1212 = vmatmul.mubr.f32.gmra.mxu0 %v627
        %v1213 = vpop.f32.mrf.mxu0
        %v1214 = vadd.f32 %v707, %v1213
        %v1215 = vpop.f32.mrf.mxu0
        %v1216 = vadd.f32 %v711, %v1215
        %1217 = vmatprep.mubr.f32.mxu0 0.0
        %1218 = vmatmul.mubr.f32.gmra.mxu0 %v628
        %v1219 = vpop.f32.mrf.mxu0
        %v1220 = vadd.f32 %v707, %v1219
        %v1221 = vpop.f32.mrf.mxu0
        %v1222 = vadd.f32 %v711, %v1221
        %1223 = vmatprep.mubr.f32.mxu0 0.0
        %1224 = vmatmul.mubr.f32.gmra.mxu0 %v629
        %v1225 = vpop.f32.mrf.mxu0
        %v1226 = vadd.f32 %v707, %v1225
        %v1227 = vpop.f32.mrf.mxu0
        %v1228 = vadd.f32 %v711, %v1227
        %1229 = vdwg.mxu0
        %v1230 = vmax.f32 %v783, 0.0
        %v1231 = vmax.f32 %v785, 0.0
        %v1232 = vmax.f32 %v1040, 0.0
        %v1233 = vmax.f32 %v1042, 0.0
        %v1234 = vmax.f32 %v789, 0.0
        %v1235 = vmax.f32 %v791, 0.0
        %v1236 = vmax.f32 %v1046, 0.0
        %v1237 = vmax.f32 %v1048, 0.0
        %v1238 = vmax.f32 %v795, 0.0
        %v1239 = vmax.f32 %v797, 0.0
        %v1240 = vmax.f32 %v1052, 0.0
        %v1241 = vmax.f32 %v1054, 0.0
        %v1242 = vmax.f32 %v801, 0.0
        %v1243 = vmax.f32 %v803, 0.0
        %v1244 = vmax.f32 %v1058, 0.0
        %v1245 = vmax.f32 %v1060, 0.0
        %v1246 = vmax.f32 %v807, 0.0
        %v1247 = vmax.f32 %v809, 0.0
        %v1248 = vmax.f32 %v1064, 0.0
        %v1249 = vmax.f32 %v1066, 0.0
        %v1250 = vmax.f32 %v813, 0.0
        %v1251 = vmax.f32 %v815, 0.0
        %v1252 = vmax.f32 %v1070, 0.0
        %v1253 = vmax.f32 %v1072, 0.0
        %v1254 = vmax.f32 %v819, 0.0
        %v1255 = vmax.f32 %v821, 0.0
        %v1256 = vmax.f32 %v1076, 0.0
        %v1257 = vmax.f32 %v1078, 0.0
        %v1258 = vmax.f32 %v825, 0.0
        %v1259 = vmax.f32 %v827, 0.0
        %v1260 = vmax.f32 %v1082, 0.0
        %v1261 = vmax.f32 %v1084, 0.0
        %v1262 = vmax.f32 %v831, 0.0
        %v1263 = vmax.f32 %v833, 0.0
        %v1264 = vmax.f32 %v1088, 0.0
        %v1265 = vmax.f32 %v1090, 0.0
        %v1266 = vmax.f32 %v837, 0.0
        %v1267 = vmax.f32 %v839, 0.0
        %v1268 = vmax.f32 %v1094, 0.0
        %v1269 = vmax.f32 %v1096, 0.0
        %v1270 = vmax.f32 %v843, 0.0
        %v1271 = vmax.f32 %v845, 0.0
        %v1272 = vmax.f32 %v1100, 0.0
        %v1273 = vmax.f32 %v1102, 0.0
        %v1274 = vmax.f32 %v849, 0.0
        %v1275 = vmax.f32 %v851, 0.0
        %v1276 = vmax.f32 %v1106, 0.0
        %v1277 = vmax.f32 %v1108, 0.0
        %v1278 = vmax.f32 %v855, 0.0
        %v1279 = vmax.f32 %v857, 0.0
        %v1280 = vmax.f32 %v1112, 0.0
        %v1281 = vmax.f32 %v1114, 0.0
        %v1282 = vmax.f32 %v861, 0.0
        %v1283 = vmax.f32 %v863, 0.0
        %v1284 = vmax.f32 %v1118, 0.0
        %v1285 = vmax.f32 %v1120, 0.0
        %v1286 = vmax.f32 %v867, 0.0
        %v1287 = vmax.f32 %v869, 0.0
        %v1288 = vmax.f32 %v1124, 0.0
        %v1289 = vmax.f32 %v1126, 0.0
        %v1290 = vmax.f32 %v873, 0.0
        %v1291 = vmax.f32 %v875, 0.0
        %v1292 = vmax.f32 %v1130, 0.0
        %v1293 = vmax.f32 %v1132, 0.0
        %v1294 = vmax.f32 %v879, 0.0
        %v1295 = vmax.f32 %v881, 0.0
        %v1296 = vmax.f32 %v1136, 0.0
        %v1297 = vmax.f32 %v1138, 0.0
        %v1298 = vmax.f32 %v885, 0.0
        %v1299 = vmax.f32 %v887, 0.0
        %v1300 = vmax.f32 %v1142, 0.0
        %v1301 = vmax.f32 %v1144, 0.0
        %v1302 = vmax.f32 %v891, 0.0
        %v1303 = vmax.f32 %v893, 0.0
        %v1304 = vmax.f32 %v1148, 0.0
        %v1305 = vmax.f32 %v1150, 0.0
        %v1306 = vmax.f32 %v897, 0.0
        %v1307 = vmax.f32 %v899, 0.0
        %v1308 = vmax.f32 %v1154, 0.0
        %v1309 = vmax.f32 %v1156, 0.0
        %v1310 = vmax.f32 %v903, 0.0
        %v1311 = vmax.f32 %v905, 0.0
        %v1312 = vmax.f32 %v1160, 0.0
        %v1313 = vmax.f32 %v1162, 0.0
        %v1314 = vmax.f32 %v909, 0.0
        %v1315 = vmax.f32 %v911, 0.0
        %v1316 = vmax.f32 %v1166, 0.0
        %v1317 = vmax.f32 %v1168, 0.0
        %v1318 = vmax.f32 %v915, 0.0
        %v1319 = vmax.f32 %v917, 0.0
        %v1320 = vmax.f32 %v1172, 0.0
        %v1321 = vmax.f32 %v1174, 0.0
        %v1322 = vmax.f32 %v921, 0.0
        %v1323 = vmax.f32 %v923, 0.0
        %v1324 = vmax.f32 %v1178, 0.0
        %v1325 = vmax.f32 %v1180, 0.0
        %v1326 = vmax.f32 %v927, 0.0
        %v1327 = vmax.f32 %v929, 0.0
        %v1328 = vmax.f32 %v1184, 0.0
        %v1329 = vmax.f32 %v1186, 0.0
        %v1330 = vmax.f32 %v933, 0.0
        %v1331 = vmax.f32 %v935, 0.0
        %v1332 = vmax.f32 %v1190, 0.0
        %v1333 = vmax.f32 %v1192, 0.0
        %v1334 = vmax.f32 %v939, 0.0
        %v1335 = vmax.f32 %v941, 0.0
        %v1336 = vmax.f32 %v1196, 0.0
        %v1337 = vmax.f32 %v1198, 0.0
        %v1338 = vmax.f32 %v945, 0.0
        %v1339 = vmax.f32 %v947, 0.0
        %v1340 = vmax.f32 %v1202, 0.0
        %v1341 = vmax.f32 %v1204, 0.0
        %v1342 = vmax.f32 %v951, 0.0
        %v1343 = vmax.f32 %v953, 0.0
        %v1344 = vmax.f32 %v1208, 0.0
        %v1345 = vmax.f32 %v1210, 0.0
        %v1346 = vmax.f32 %v957, 0.0
        %v1347 = vmax.f32 %v959, 0.0
        %v1348 = vmax.f32 %v1214, 0.0
        %v1349 = vmax.f32 %v1216, 0.0
        %v1350 = vmax.f32 %v963, 0.0
        %v1351 = vmax.f32 %v965, 0.0
        %v1352 = vmax.f32 %v1220, 0.0
        %v1353 = vmax.f32 %v1222, 0.0
        %v1354 = vmax.f32 %v969, 0.0
        %v1355 = vmax.f32 %v971, 0.0
        %v1356 = vmax.f32 %v1226, 0.0
        %v1357 = vmax.f32 %v1228, 0.0
        %v1358 = vld [vmem:[#allocation7] sm:$0xff]
        %v1359 = vld [vmem:[#allocation7 + $0x8] sm:$0xff]
        %v1360 = vld [vmem:[#allocation7 + $0x10] sm:$0xff]
        %v1361 = vld [vmem:[#allocation7 + $0x18] sm:$0xff]
        %v1362 = vld [vmem:[#allocation7 + $0x20] sm:$0xff]
        %v1363 = vld [vmem:[#allocation7 + $0x28] sm:$0xff]
        %v1364 = vld [vmem:[#allocation7 + $0x30] sm:$0xff]
        %v1365 = vld [vmem:[#allocation7 + $0x38] sm:$0xff]
        %v1366 = vld [vmem:[#allocation7 + $0x40] sm:$0xff]
        %v1367 = vld [vmem:[#allocation7 + $0x48] sm:$0xff]
        %v1368 = vld [vmem:[#allocation7 + $0x50] sm:$0xff]
        %v1369 = vld [vmem:[#allocation7 + $0x58] sm:$0xff]
        %v1370 = vld [vmem:[#allocation7 + $0x60] sm:$0xff]
        %v1371 = vld [vmem:[#allocation7 + $0x68] sm:$0xff]
        %v1372 = vld [vmem:[#allocation7 + $0x70] sm:$0xff]
        %v1373 = vld [vmem:[#allocation7 + $0x78] sm:$0xff]
        %v1374 = vld [vmem:[#allocation7 + $0x80] sm:$0xff]
        %v1375 = vld [vmem:[#allocation7 + $0x88] sm:$0xff]
        %v1376 = vld [vmem:[#allocation7 + $0x90] sm:$0xff]
        %v1377 = vld [vmem:[#allocation7 + $0x98] sm:$0xff]
        %v1378 = vld [vmem:[#allocation7 + $0xa0] sm:$0xff]
        %v1379 = vld [vmem:[#allocation7 + $0xa8] sm:$0xff]
        %v1380 = vld [vmem:[#allocation7 + $0xb0] sm:$0xff]
        %v1381 = vld [vmem:[#allocation7 + $0xb8] sm:$0xff]
        %v1382 = vld [vmem:[#allocation7 + $0xc0] sm:$0xff]
        %v1383 = vld [vmem:[#allocation7 + $0xc8] sm:$0xff]
        %v1384 = vld [vmem:[#allocation7 + $0xd0] sm:$0xff]
        %v1385 = vld [vmem:[#allocation7 + $0xd8] sm:$0xff]
        %v1386 = vld [vmem:[#allocation7 + $0xe0] sm:$0xff]
        %v1387 = vld [vmem:[#allocation7 + $0xe8] sm:$0xff]
        %v1388 = vld [vmem:[#allocation7 + $0xf0] sm:$0xff]
        %v1389 = vld [vmem:[#allocation7 + $0xf8] sm:$0xff]
        %v1390 = vld [vmem:[#allocation7 + $0x100] sm:$0xff]
        %v1391 = vld [vmem:[#allocation7 + $0x108] sm:$0xff]
        %v1392 = vld [vmem:[#allocation7 + $0x110] sm:$0xff]
        %v1393 = vld [vmem:[#allocation7 + $0x118] sm:$0xff]
        %v1394 = vld [vmem:[#allocation7 + $0x120] sm:$0xff]
        %v1395 = vld [vmem:[#allocation7 + $0x128] sm:$0xff]
        %v1396 = vld [vmem:[#allocation7 + $0x130] sm:$0xff]
        %v1397 = vld [vmem:[#allocation7 + $0x138] sm:$0xff]
        %v1398 = vld [vmem:[#allocation7 + $0x140] sm:$0xff]
        %v1399 = vld [vmem:[#allocation7 + $0x148] sm:$0xff]
        %v1400 = vld [vmem:[#allocation7 + $0x150] sm:$0xff]
        %v1401 = vld [vmem:[#allocation7 + $0x158] sm:$0xff]
        %v1402 = vld [vmem:[#allocation7 + $0x160] sm:$0xff]
        %v1403 = vld [vmem:[#allocation7 + $0x168] sm:$0xff]
        %v1404 = vld [vmem:[#allocation7 + $0x170] sm:$0xff]
        %v1405 = vld [vmem:[#allocation7 + $0x178] sm:$0xff]
        %v1406 = vld [vmem:[#allocation7 + $0x180] sm:$0xff]
        %v1407 = vld [vmem:[#allocation7 + $0x188] sm:$0xff]
        %v1408 = vld [vmem:[#allocation7 + $0x190] sm:$0xff]
        %v1409 = vld [vmem:[#allocation7 + $0x198] sm:$0xff]
        %v1410 = vld [vmem:[#allocation7 + $0x1a0] sm:$0xff]
        %v1411 = vld [vmem:[#allocation7 + $0x1a8] sm:$0xff]
        %v1412 = vld [vmem:[#allocation7 + $0x1b0] sm:$0xff]
        %v1413 = vld [vmem:[#allocation7 + $0x1b8] sm:$0xff]
        %v1414 = vld [vmem:[#allocation7 + $0x1c0] sm:$0xff]
        %v1415 = vld [vmem:[#allocation7 + $0x1c8] sm:$0xff]
        %v1416 = vld [vmem:[#allocation7 + $0x1d0] sm:$0xff]
        %v1417 = vld [vmem:[#allocation7 + $0x1d8] sm:$0xff]
        %v1418 = vld [vmem:[#allocation7 + $0x1e0] sm:$0xff]
        %v1419 = vld [vmem:[#allocation7 + $0x1e8] sm:$0xff]
        %v1420 = vld [vmem:[#allocation7 + $0x1f0] sm:$0xff]
        %v1421 = vld [vmem:[#allocation7 + $0x1f8] sm:$0xff]
        %v1422 = vld [vmem:[%s6] sm:$0x1]
        %v1424 = vlaneseq
        %v1425 = vshrl.u32 %v1424, 7
        %v1426 = vsub.s32 0, %v1425
        %v1427 = vrot.slane %v1422, %v1426
        %1429 = vmatprep.subr.mxu0 0.0
        %1430 = vmatpush1.msra.mxu0 %v1373
        %1431 = vmatprep.subr.mxu0 0.0
        %1432 = vmatpush1.msra.mxu0 %v1372
        %1433 = vmatprep.subr.mxu0 0.0
        %1434 = vmatpush1.msra.mxu0 %v1371
        %1435 = vmatprep.subr.mxu0 0.0
        %1436 = vmatpush1.msra.mxu0 %v1370
        %1437 = vmatprep.subr.mxu0 0.0
        %1438 = vmatpush1.msra.mxu0 %v1369
        %1439 = vmatprep.subr.mxu0 0.0
        %1440 = vmatpush1.msra.mxu0 %v1368
        %1441 = vmatprep.subr.mxu0 0.0
        %1442 = vmatpush1.msra.mxu0 %v1367
        %1443 = vmatprep.subr.mxu0 0.0
        %1444 = vmatpush1.msra.mxu0 %v1366
        %1445 = vmatprep.subr.mxu0 0.0
        %1446 = vmatpush1.msra.mxu0 %v1365
        %1447 = vmatprep.subr.mxu0 0.0
        %1448 = vmatpush1.msra.mxu0 %v1364
        %1449 = vmatprep.subr.mxu0 0.0
        %1450 = vmatpush1.msra.mxu0 %v1363
        %1451 = vmatprep.subr.mxu0 0.0
        %1452 = vmatpush1.msra.mxu0 %v1362
        %1453 = vmatprep.subr.mxu0 0.0
        %1454 = vmatpush1.msra.mxu0 %v1361
        %1455 = vmatprep.subr.mxu0 0.0
        %1456 = vmatpush1.msra.mxu0 %v1360
        %1457 = vmatprep.subr.mxu0 0.0
        %1458 = vmatpush1.msra.mxu0 %v1359
        %1459 = vmatprep.subr.mxu0 0.0
        %1460 = vmatpush1.msra.mxu0 %v1358
        %1461 = vmatprep.subr.mxu0 0.0
        %1462 = vmatpush2.msra.mxu0 %v1389
        %1463 = vmatprep.subr.mxu0 0.0
        %1464 = vmatpush2.msra.mxu0 %v1388
        %1465 = vmatprep.subr.mxu0 0.0
        %1466 = vmatpush2.msra.mxu0 %v1387
        %1467 = vmatprep.subr.mxu0 0.0
        %1468 = vmatpush2.msra.mxu0 %v1386
        %1469 = vmatprep.subr.mxu0 0.0
        %1470 = vmatpush2.msra.mxu0 %v1385
        %1471 = vmatprep.subr.mxu0 0.0
        %1472 = vmatpush2.msra.mxu0 %v1384
        %1473 = vmatprep.subr.mxu0 0.0
        %1474 = vmatpush2.msra.mxu0 %v1383
        %1475 = vmatprep.subr.mxu0 0.0
        %1476 = vmatpush2.msra.mxu0 %v1382
        %1477 = vmatprep.subr.mxu0 0.0
        %1478 = vmatpush2.msra.mxu0 %v1381
        %1479 = vmatprep.subr.mxu0 0.0
        %1480 = vmatpush2.msra.mxu0 %v1380
        %1481 = vmatprep.subr.mxu0 0.0
        %1482 = vmatpush2.msra.mxu0 %v1379
        %1483 = vmatprep.subr.mxu0 0.0
        %1484 = vmatpush2.msra.mxu0 %v1378
        %1485 = vmatprep.subr.mxu0 0.0
        %1486 = vmatpush2.msra.mxu0 %v1377
        %1487 = vmatprep.subr.mxu0 0.0
        %1488 = vmatpush2.msra.mxu0 %v1376
        %1489 = vmatprep.subr.mxu0 0.0
        %1490 = vmatpush2.msra.mxu0 %v1375
        %1491 = vmatprep.subr.mxu0 0.0
        %1492 = vmatpush2.msra.mxu0 %v1374
        %1493 = vmatprep.mubr.f32.mxu0 %v1231
        %1494 = vmatmul.mubr.f32.gmra.mxu0 %v1230
        %v1495 = vpop.f32.mrf.mxu0
        %v1496 = vadd.f32 %v1427, %v1495
        %v1497 = vpop.f32.mrf.mxu0
        %1498 = vmatprep.mubr.f32.mxu0 %v1235
        %1499 = vmatmul.mubr.f32.gmra.mxu0 %v1234
        %v1500 = vpop.f32.mrf.mxu0
        %v1501 = vadd.f32 %v1427, %v1500
        %v1502 = vpop.f32.mrf.mxu0
        %1503 = vmatprep.mubr.f32.mxu0 %v1239
        %1504 = vmatmul.mubr.f32.gmra.mxu0 %v1238
        %v1505 = vpop.f32.mrf.mxu0
        %v1506 = vadd.f32 %v1427, %v1505
        %v1507 = vpop.f32.mrf.mxu0
        %1508 = vmatprep.mubr.f32.mxu0 %v1243
        %1509 = vmatmul.mubr.f32.gmra.mxu0 %v1242
        %v1510 = vpop.f32.mrf.mxu0
        %v1511 = vadd.f32 %v1427, %v1510
        %v1512 = vpop.f32.mrf.mxu0
        %1513 = vmatprep.mubr.f32.mxu0 %v1247
        %1514 = vmatmul.mubr.f32.gmra.mxu0 %v1246
        %v1515 = vpop.f32.mrf.mxu0
        %v1516 = vadd.f32 %v1427, %v1515
        %v1517 = vpop.f32.mrf.mxu0
        %1518 = vmatprep.mubr.f32.mxu0 %v1251
        %1519 = vmatmul.mubr.f32.gmra.mxu0 %v1250
        %v1520 = vpop.f32.mrf.mxu0
        %v1521 = vadd.f32 %v1427, %v1520
        %v1522 = vpop.f32.mrf.mxu0
        %1523 = vmatprep.mubr.f32.mxu0 %v1255
        %1524 = vmatmul.mubr.f32.gmra.mxu0 %v1254
        %v1525 = vpop.f32.mrf.mxu0
        %v1526 = vadd.f32 %v1427, %v1525
        %v1527 = vpop.f32.mrf.mxu0
        %1528 = vmatprep.mubr.f32.mxu0 %v1259
        %1529 = vmatmul.mubr.f32.gmra.mxu0 %v1258
        %v1530 = vpop.f32.mrf.mxu0
        %v1531 = vadd.f32 %v1427, %v1530
        %v1532 = vpop.f32.mrf.mxu0
        %1533 = vmatprep.mubr.f32.mxu0 %v1263
        %1534 = vmatmul.mubr.f32.gmra.mxu0 %v1262
        %v1535 = vpop.f32.mrf.mxu0
        %v1536 = vadd.f32 %v1427, %v1535
        %v1537 = vpop.f32.mrf.mxu0
        %1538 = vmatprep.mubr.f32.mxu0 %v1267
        %1539 = vmatmul.mubr.f32.gmra.mxu0 %v1266
        %v1540 = vpop.f32.mrf.mxu0
        %v1541 = vadd.f32 %v1427, %v1540
        %v1542 = vpop.f32.mrf.mxu0
        %1543 = vmatprep.mubr.f32.mxu0 %v1271
        %1544 = vmatmul.mubr.f32.gmra.mxu0 %v1270
        %v1545 = vpop.f32.mrf.mxu0
        %v1546 = vadd.f32 %v1427, %v1545
        %v1547 = vpop.f32.mrf.mxu0
        %1548 = vmatprep.mubr.f32.mxu0 %v1275
        %1549 = vmatmul.mubr.f32.gmra.mxu0 %v1274
        %v1550 = vpop.f32.mrf.mxu0
        %v1551 = vadd.f32 %v1427, %v1550
        %v1552 = vpop.f32.mrf.mxu0
        %1553 = vmatprep.mubr.f32.mxu0 %v1279
        %1554 = vmatmul.mubr.f32.gmra.mxu0 %v1278
        %v1555 = vpop.f32.mrf.mxu0
        %v1556 = vadd.f32 %v1427, %v1555
        %v1557 = vpop.f32.mrf.mxu0
        %1558 = vmatprep.mubr.f32.mxu0 %v1283
        %1559 = vmatmul.mubr.f32.gmra.mxu0 %v1282
        %v1560 = vpop.f32.mrf.mxu0
        %v1561 = vadd.f32 %v1427, %v1560
        %v1562 = vpop.f32.mrf.mxu0
        %1563 = vmatprep.mubr.f32.mxu0 %v1287
        %1564 = vmatmul.mubr.f32.gmra.mxu0 %v1286
        %v1565 = vpop.f32.mrf.mxu0
        %v1566 = vadd.f32 %v1427, %v1565
        %v1567 = vpop.f32.mrf.mxu0
        %1568 = vmatprep.mubr.f32.mxu0 %v1291
        %1569 = vmatmul.mubr.f32.gmra.mxu0 %v1290
        %v1570 = vpop.f32.mrf.mxu0
        %v1571 = vadd.f32 %v1427, %v1570
        %v1572 = vpop.f32.mrf.mxu0
        %1573 = vmatprep.mubr.f32.mxu0 %v1295
        %1574 = vmatmul.mubr.f32.gmra.mxu0 %v1294
        %v1575 = vpop.f32.mrf.mxu0
        %v1576 = vadd.f32 %v1427, %v1575
        %v1577 = vpop.f32.mrf.mxu0
        %1578 = vmatprep.mubr.f32.mxu0 %v1299
        %1579 = vmatmul.mubr.f32.gmra.mxu0 %v1298
        %v1580 = vpop.f32.mrf.mxu0
        %v1581 = vadd.f32 %v1427, %v1580
        %v1582 = vpop.f32.mrf.mxu0
        %1583 = vmatprep.mubr.f32.mxu0 %v1303
        %1584 = vmatmul.mubr.f32.gmra.mxu0 %v1302
        %v1585 = vpop.f32.mrf.mxu0
        %v1586 = vadd.f32 %v1427, %v1585
        %v1587 = vpop.f32.mrf.mxu0
        %1588 = vmatprep.mubr.f32.mxu0 %v1307
        %1589 = vmatmul.mubr.f32.gmra.mxu0 %v1306
        %v1590 = vpop.f32.mrf.mxu0
        %v1591 = vadd.f32 %v1427, %v1590
        %v1592 = vpop.f32.mrf.mxu0
        %1593 = vmatprep.mubr.f32.mxu0 %v1311
        %1594 = vmatmul.mubr.f32.gmra.mxu0 %v1310
        %v1595 = vpop.f32.mrf.mxu0
        %v1596 = vadd.f32 %v1427, %v1595
        %v1597 = vpop.f32.mrf.mxu0
        %1598 = vmatprep.mubr.f32.mxu0 %v1315
        %1599 = vmatmul.mubr.f32.gmra.mxu0 %v1314
        %v1600 = vpop.f32.mrf.mxu0
        %v1601 = vadd.f32 %v1427, %v1600
        %v1602 = vpop.f32.mrf.mxu0
        %1603 = vmatprep.mubr.f32.mxu0 %v1319
        %1604 = vmatmul.mubr.f32.gmra.mxu0 %v1318
        %v1605 = vpop.f32.mrf.mxu0
        %v1606 = vadd.f32 %v1427, %v1605
        %v1607 = vpop.f32.mrf.mxu0
        %1608 = vmatprep.mubr.f32.mxu0 %v1323
        %1609 = vmatmul.mubr.f32.gmra.mxu0 %v1322
        %v1610 = vpop.f32.mrf.mxu0
        %v1611 = vadd.f32 %v1427, %v1610
        %v1612 = vpop.f32.mrf.mxu0
        %1613 = vmatprep.mubr.f32.mxu0 %v1327
        %1614 = vmatmul.mubr.f32.gmra.mxu0 %v1326
        %v1615 = vpop.f32.mrf.mxu0
        %v1616 = vadd.f32 %v1427, %v1615
        %v1617 = vpop.f32.mrf.mxu0
        %1618 = vmatprep.mubr.f32.mxu0 %v1331
        %1619 = vmatmul.mubr.f32.gmra.mxu0 %v1330
        %v1620 = vpop.f32.mrf.mxu0
        %v1621 = vadd.f32 %v1427, %v1620
        %v1622 = vpop.f32.mrf.mxu0
        %1623 = vmatprep.mubr.f32.mxu0 %v1335
        %1624 = vmatmul.mubr.f32.gmra.mxu0 %v1334
        %v1625 = vpop.f32.mrf.mxu0
        %v1626 = vadd.f32 %v1427, %v1625
        %v1627 = vpop.f32.mrf.mxu0
        %1628 = vmatprep.mubr.f32.mxu0 %v1339
        %1629 = vmatmul.mubr.f32.gmra.mxu0 %v1338
        %v1630 = vpop.f32.mrf.mxu0
        %v1631 = vadd.f32 %v1427, %v1630
        %v1632 = vpop.f32.mrf.mxu0
        %1633 = vmatprep.mubr.f32.mxu0 %v1343
        %1634 = vmatmul.mubr.f32.gmra.mxu0 %v1342
        %v1635 = vpop.f32.mrf.mxu0
        %v1636 = vadd.f32 %v1427, %v1635
        %v1637 = vpop.f32.mrf.mxu0
        %1638 = vmatprep.mubr.f32.mxu0 %v1347
        %1639 = vmatmul.mubr.f32.gmra.mxu0 %v1346
        %v1640 = vpop.f32.mrf.mxu0
        %v1641 = vadd.f32 %v1427, %v1640
        %v1642 = vpop.f32.mrf.mxu0
        %1643 = vmatprep.mubr.f32.mxu0 %v1351
        %1644 = vmatmul.mubr.f32.gmra.mxu0 %v1350
        %v1645 = vpop.f32.mrf.mxu0
        %v1646 = vadd.f32 %v1427, %v1645
        %v1647 = vpop.f32.mrf.mxu0
        %1648 = vmatprep.mubr.f32.mxu0 %v1355
        %1649 = vmatmul.mubr.f32.gmra.mxu0 %v1354
        %v1650 = vpop.f32.mrf.mxu0
        %v1651 = vadd.f32 %v1427, %v1650
        %v1652 = vpop.f32.mrf.mxu0
        %1653 = vdwg.mxu0
        %1654 = vmatprep.subr.mxu0 0.0
        %1655 = vmatpush1.msra.mxu0 %v1405
        %1656 = vmatprep.subr.mxu0 0.0
        %1657 = vmatpush1.msra.mxu0 %v1404
        %1658 = vmatprep.subr.mxu0 0.0
        %1659 = vmatpush1.msra.mxu0 %v1403
        %1660 = vmatprep.subr.mxu0 0.0
        %1661 = vmatpush1.msra.mxu0 %v1402
        %1662 = vmatprep.subr.mxu0 0.0
        %1663 = vmatpush1.msra.mxu0 %v1401
        %1664 = vmatprep.subr.mxu0 0.0
        %1665 = vmatpush1.msra.mxu0 %v1400
        %1666 = vmatprep.subr.mxu0 0.0
        %1667 = vmatpush1.msra.mxu0 %v1399
        %1668 = vmatprep.subr.mxu0 0.0
        %1669 = vmatpush1.msra.mxu0 %v1398
        %1670 = vmatprep.subr.mxu0 0.0
        %1671 = vmatpush1.msra.mxu0 %v1397
        %1672 = vmatprep.subr.mxu0 0.0
        %1673 = vmatpush1.msra.mxu0 %v1396
        %1674 = vmatprep.subr.mxu0 0.0
        %1675 = vmatpush1.msra.mxu0 %v1395
        %1676 = vmatprep.subr.mxu0 0.0
        %1677 = vmatpush1.msra.mxu0 %v1394
        %1678 = vmatprep.subr.mxu0 0.0
        %1679 = vmatpush1.msra.mxu0 %v1393
        %1680 = vmatprep.subr.mxu0 0.0
        %1681 = vmatpush1.msra.mxu0 %v1392
        %1682 = vmatprep.subr.mxu0 0.0
        %1683 = vmatpush1.msra.mxu0 %v1391
        %1684 = vmatprep.subr.mxu0 0.0
        %1685 = vmatpush1.msra.mxu0 %v1390
        %1686 = vmatprep.subr.mxu0 0.0
        %1687 = vmatpush2.msra.mxu0 %v1421
        %1688 = vmatprep.subr.mxu0 0.0
        %1689 = vmatpush2.msra.mxu0 %v1420
        %1690 = vmatprep.subr.mxu0 0.0
        %1691 = vmatpush2.msra.mxu0 %v1419
        %1692 = vmatprep.subr.mxu0 0.0
        %1693 = vmatpush2.msra.mxu0 %v1418
        %1694 = vmatprep.subr.mxu0 0.0
        %1695 = vmatpush2.msra.mxu0 %v1417
        %1696 = vmatprep.subr.mxu0 0.0
        %1697 = vmatpush2.msra.mxu0 %v1416
        %1698 = vmatprep.subr.mxu0 0.0
        %1699 = vmatpush2.msra.mxu0 %v1415
        %1700 = vmatprep.subr.mxu0 0.0
        %1701 = vmatpush2.msra.mxu0 %v1414
        %1702 = vmatprep.subr.mxu0 0.0
        %1703 = vmatpush2.msra.mxu0 %v1413
        %1704 = vmatprep.subr.mxu0 0.0
        %1705 = vmatpush2.msra.mxu0 %v1412
        %1706 = vmatprep.subr.mxu0 0.0
        %1707 = vmatpush2.msra.mxu0 %v1411
        %1708 = vmatprep.subr.mxu0 0.0
        %1709 = vmatpush2.msra.mxu0 %v1410
        %1710 = vmatprep.subr.mxu0 0.0
        %1711 = vmatpush2.msra.mxu0 %v1409
        %1712 = vmatprep.subr.mxu0 0.0
        %1713 = vmatpush2.msra.mxu0 %v1408
        %1714 = vmatprep.subr.mxu0 0.0
        %1715 = vmatpush2.msra.mxu0 %v1407
        %1716 = vmatprep.subr.mxu0 0.0
        %1717 = vmatpush2.msra.mxu0 %v1406
        %1718 = vmatprep.mubr.f32.mxu0 %v1233
        %1719 = vmatmul.mubr.f32.gmra.mxu0 %v1232
        %v1720 = vpop.f32.mrf.mxu0
        %v1721 = vadd.f32 %v1496, %v1720
        %v1722 = vpop.f32.mrf.mxu0
        %1723 = vmatprep.mubr.f32.mxu0 %v1237
        %1724 = vmatmul.mubr.f32.gmra.mxu0 %v1236
        %v1725 = vpop.f32.mrf.mxu0
        %v1726 = vadd.f32 %v1501, %v1725
        %v1727 = vpop.f32.mrf.mxu0
        %1728 = vmatprep.mubr.f32.mxu0 %v1241
        %1729 = vmatmul.mubr.f32.gmra.mxu0 %v1240
        %v1730 = vpop.f32.mrf.mxu0
        %v1731 = vadd.f32 %v1506, %v1730
        %v1732 = vpop.f32.mrf.mxu0
        %1733 = vmatprep.mubr.f32.mxu0 %v1245
        %1734 = vmatmul.mubr.f32.gmra.mxu0 %v1244
        %v1735 = vpop.f32.mrf.mxu0
        %v1736 = vadd.f32 %v1511, %v1735
        %v1737 = vpop.f32.mrf.mxu0
        %1738 = vmatprep.mubr.f32.mxu0 %v1249
        %1739 = vmatmul.mubr.f32.gmra.mxu0 %v1248
        %v1740 = vpop.f32.mrf.mxu0
        %v1741 = vadd.f32 %v1516, %v1740
        %v1742 = vpop.f32.mrf.mxu0
        %1743 = vmatprep.mubr.f32.mxu0 %v1253
        %1744 = vmatmul.mubr.f32.gmra.mxu0 %v1252
        %v1745 = vpop.f32.mrf.mxu0
        %v1746 = vadd.f32 %v1521, %v1745
        %v1747 = vpop.f32.mrf.mxu0
        %1748 = vmatprep.mubr.f32.mxu0 %v1257
        %1749 = vmatmul.mubr.f32.gmra.mxu0 %v1256
        %v1750 = vpop.f32.mrf.mxu0
        %v1751 = vadd.f32 %v1526, %v1750
        %v1752 = vpop.f32.mrf.mxu0
        %1753 = vmatprep.mubr.f32.mxu0 %v1261
        %1754 = vmatmul.mubr.f32.gmra.mxu0 %v1260
        %v1755 = vpop.f32.mrf.mxu0
        %v1756 = vadd.f32 %v1531, %v1755
        %v1757 = vpop.f32.mrf.mxu0
        %1758 = vmatprep.mubr.f32.mxu0 %v1265
        %1759 = vmatmul.mubr.f32.gmra.mxu0 %v1264
        %v1760 = vpop.f32.mrf.mxu0
        %v1761 = vadd.f32 %v1536, %v1760
        %v1762 = vpop.f32.mrf.mxu0
        %1763 = vmatprep.mubr.f32.mxu0 %v1269
        %1764 = vmatmul.mubr.f32.gmra.mxu0 %v1268
        %v1765 = vpop.f32.mrf.mxu0
        %v1766 = vadd.f32 %v1541, %v1765
        %v1767 = vpop.f32.mrf.mxu0
        %1768 = vmatprep.mubr.f32.mxu0 %v1273
        %1769 = vmatmul.mubr.f32.gmra.mxu0 %v1272
        %v1770 = vpop.f32.mrf.mxu0
        %v1771 = vadd.f32 %v1546, %v1770
        %v1772 = vpop.f32.mrf.mxu0
        %1773 = vmatprep.mubr.f32.mxu0 %v1277
        %1774 = vmatmul.mubr.f32.gmra.mxu0 %v1276
        %v1775 = vpop.f32.mrf.mxu0
        %v1776 = vadd.f32 %v1551, %v1775
        %v1777 = vpop.f32.mrf.mxu0
        %1778 = vmatprep.mubr.f32.mxu0 %v1281
        %1779 = vmatmul.mubr.f32.gmra.mxu0 %v1280
        %v1780 = vpop.f32.mrf.mxu0
        %v1781 = vadd.f32 %v1556, %v1780
        %v1782 = vpop.f32.mrf.mxu0
        %1783 = vmatprep.mubr.f32.mxu0 %v1285
        %1784 = vmatmul.mubr.f32.gmra.mxu0 %v1284
        %v1785 = vpop.f32.mrf.mxu0
        %v1786 = vadd.f32 %v1561, %v1785
        %v1787 = vpop.f32.mrf.mxu0
        %1788 = vmatprep.mubr.f32.mxu0 %v1289
        %1789 = vmatmul.mubr.f32.gmra.mxu0 %v1288
        %v1790 = vpop.f32.mrf.mxu0
        %v1791 = vadd.f32 %v1566, %v1790
        %v1792 = vpop.f32.mrf.mxu0
        %1793 = vmatprep.mubr.f32.mxu0 %v1293
        %1794 = vmatmul.mubr.f32.gmra.mxu0 %v1292
        %v1795 = vpop.f32.mrf.mxu0
        %v1796 = vadd.f32 %v1571, %v1795
        %v1797 = vpop.f32.mrf.mxu0
        %1798 = vmatprep.mubr.f32.mxu0 %v1297
        %1799 = vmatmul.mubr.f32.gmra.mxu0 %v1296
        %v1800 = vpop.f32.mrf.mxu0
        %v1801 = vadd.f32 %v1576, %v1800
        %v1802 = vpop.f32.mrf.mxu0
        %1803 = vmatprep.mubr.f32.mxu0 %v1301
        %1804 = vmatmul.mubr.f32.gmra.mxu0 %v1300
        %v1805 = vpop.f32.mrf.mxu0
        %v1806 = vadd.f32 %v1581, %v1805
        %v1807 = vpop.f32.mrf.mxu0
        %1808 = vmatprep.mubr.f32.mxu0 %v1305
        %1809 = vmatmul.mubr.f32.gmra.mxu0 %v1304
        %v1810 = vpop.f32.mrf.mxu0
        %v1811 = vadd.f32 %v1586, %v1810
        %v1812 = vpop.f32.mrf.mxu0
        %1813 = vmatprep.mubr.f32.mxu0 %v1309
        %1814 = vmatmul.mubr.f32.gmra.mxu0 %v1308
        %v1815 = vpop.f32.mrf.mxu0
        %v1816 = vadd.f32 %v1591, %v1815
        %v1817 = vpop.f32.mrf.mxu0
        %1818 = vmatprep.mubr.f32.mxu0 %v1313
        %1819 = vmatmul.mubr.f32.gmra.mxu0 %v1312
        %v1820 = vpop.f32.mrf.mxu0
        %v1821 = vadd.f32 %v1596, %v1820
        %v1822 = vpop.f32.mrf.mxu0
        %1823 = vmatprep.mubr.f32.mxu0 %v1317
        %1824 = vmatmul.mubr.f32.gmra.mxu0 %v1316
        %v1825 = vpop.f32.mrf.mxu0
        %v1826 = vadd.f32 %v1601, %v1825
        %v1827 = vpop.f32.mrf.mxu0
        %1828 = vmatprep.mubr.f32.mxu0 %v1321
        %1829 = vmatmul.mubr.f32.gmra.mxu0 %v1320
        %v1830 = vpop.f32.mrf.mxu0
        %v1831 = vadd.f32 %v1606, %v1830
        %v1832 = vpop.f32.mrf.mxu0
        %1833 = vmatprep.mubr.f32.mxu0 %v1325
        %1834 = vmatmul.mubr.f32.gmra.mxu0 %v1324
        %v1835 = vpop.f32.mrf.mxu0
        %v1836 = vadd.f32 %v1611, %v1835
        %v1837 = vpop.f32.mrf.mxu0
        %1838 = vmatprep.mubr.f32.mxu0 %v1329
        %1839 = vmatmul.mubr.f32.gmra.mxu0 %v1328
        %v1840 = vpop.f32.mrf.mxu0
        %v1841 = vadd.f32 %v1616, %v1840
        %v1842 = vpop.f32.mrf.mxu0
        %1843 = vmatprep.mubr.f32.mxu0 %v1333
        %1844 = vmatmul.mubr.f32.gmra.mxu0 %v1332
        %v1845 = vpop.f32.mrf.mxu0
        %v1846 = vadd.f32 %v1621, %v1845
        %v1847 = vpop.f32.mrf.mxu0
        %1848 = vmatprep.mubr.f32.mxu0 %v1337
        %1849 = vmatmul.mubr.f32.gmra.mxu0 %v1336
        %v1850 = vpop.f32.mrf.mxu0
        %v1851 = vadd.f32 %v1626, %v1850
        %v1852 = vpop.f32.mrf.mxu0
        %1853 = vmatprep.mubr.f32.mxu0 %v1341
        %1854 = vmatmul.mubr.f32.gmra.mxu0 %v1340
        %v1855 = vpop.f32.mrf.mxu0
        %v1856 = vadd.f32 %v1631, %v1855
        %v1857 = vpop.f32.mrf.mxu0
        %1858 = vmatprep.mubr.f32.mxu0 %v1345
        %1859 = vmatmul.mubr.f32.gmra.mxu0 %v1344
        %v1860 = vpop.f32.mrf.mxu0
        %v1861 = vadd.f32 %v1636, %v1860
        %v1862 = vpop.f32.mrf.mxu0
        %1863 = vmatprep.mubr.f32.mxu0 %v1349
        %1864 = vmatmul.mubr.f32.gmra.mxu0 %v1348
        %v1865 = vpop.f32.mrf.mxu0
        %v1866 = vadd.f32 %v1641, %v1865
        %v1867 = vpop.f32.mrf.mxu0
        %1868 = vmatprep.mubr.f32.mxu0 %v1353
        %1869 = vmatmul.mubr.f32.gmra.mxu0 %v1352
        %v1870 = vpop.f32.mrf.mxu0
        %v1871 = vadd.f32 %v1646, %v1870
        %v1872 = vpop.f32.mrf.mxu0
        %1873 = vmatprep.mubr.f32.mxu0 %v1357
        %1874 = vmatmul.mubr.f32.gmra.mxu0 %v1356
        %v1875 = vpop.f32.mrf.mxu0
        %v1876 = vadd.f32 %v1651, %v1875
        %v1877 = vpop.f32.mrf.mxu0
        %1878 = vdwg.mxu0
        %v1879 = vmax.f32 %v1721, 0.0
        %v1880 = vmax.f32 %v1726, 0.0
        %v1881 = vmax.f32 %v1731, 0.0
        %v1882 = vmax.f32 %v1736, 0.0
        %v1883 = vmax.f32 %v1741, 0.0
        %v1884 = vmax.f32 %v1746, 0.0
        %v1885 = vmax.f32 %v1751, 0.0
        %v1886 = vmax.f32 %v1756, 0.0
        %v1887 = vmax.f32 %v1761, 0.0
        %v1888 = vmax.f32 %v1766, 0.0
        %v1889 = vmax.f32 %v1771, 0.0
        %v1890 = vmax.f32 %v1776, 0.0
        %v1891 = vmax.f32 %v1781, 0.0
        %v1892 = vmax.f32 %v1786, 0.0
        %v1893 = vmax.f32 %v1791, 0.0
        %v1894 = vmax.f32 %v1796, 0.0
        %v1895 = vmax.f32 %v1801, 0.0
        %v1896 = vmax.f32 %v1806, 0.0
        %v1897 = vmax.f32 %v1811, 0.0
        %v1898 = vmax.f32 %v1816, 0.0
        %v1899 = vmax.f32 %v1821, 0.0
        %v1900 = vmax.f32 %v1826, 0.0
        %v1901 = vmax.f32 %v1831, 0.0
        %v1902 = vmax.f32 %v1836, 0.0
        %v1903 = vmax.f32 %v1841, 0.0
        %v1904 = vmax.f32 %v1846, 0.0
        %v1905 = vmax.f32 %v1851, 0.0
        %v1906 = vmax.f32 %v1856, 0.0
        %v1907 = vmax.f32 %v1861, 0.0
        %v1908 = vmax.f32 %v1866, 0.0
        %v1909 = vmax.f32 %v1871, 0.0
        %v1910 = vmax.f32 %v1876, 0.0
        %v1911 = vld [vmem:[#allocation8] sm:$0xff]
        %v1912 = vld [vmem:[#allocation8 + $0x8] sm:$0xff]
        %v1913 = vld [vmem:[#allocation8 + $0x10] sm:$0xff]
        %v1914 = vld [vmem:[#allocation8 + $0x18] sm:$0xff]
        %v1915 = vld [vmem:[#allocation8 + $0x20] sm:$0xff]
        %v1916 = vld [vmem:[#allocation8 + $0x28] sm:$0xff]
        %v1917 = vld [vmem:[#allocation8 + $0x30] sm:$0xff]
        %v1918 = vld [vmem:[#allocation8 + $0x38] sm:$0xff]
        %v1919 = vld [vmem:[#allocation8 + $0x40] sm:$0xff]
        %v1920 = vld [vmem:[#allocation8 + $0x48] sm:$0xff]
        %v1921 = vld [vmem:[#allocation8 + $0x50] sm:$0xff]
        %v1922 = vld [vmem:[#allocation8 + $0x58] sm:$0xff]
        %v1923 = vld [vmem:[#allocation8 + $0x60] sm:$0xff]
        %v1924 = vld [vmem:[#allocation8 + $0x68] sm:$0xff]
        %v1925 = vld [vmem:[#allocation8 + $0x70] sm:$0xff]
        %v1926 = vld [vmem:[#allocation8 + $0x78] sm:$0xff]
        %v1927 = vld [vmem:[#allocation8 + $0x80] sm:$0xff]
        %v1928 = vld [vmem:[#allocation8 + $0x88] sm:$0xff]
        %v1929 = vld [vmem:[#allocation8 + $0x90] sm:$0xff]
        %v1930 = vld [vmem:[#allocation8 + $0x98] sm:$0xff]
        %v1931 = vld [vmem:[#allocation8 + $0xa0] sm:$0xff]
        %v1932 = vld [vmem:[#allocation8 + $0xa8] sm:$0xff]
        %v1933 = vld [vmem:[#allocation8 + $0xb0] sm:$0xff]
        %v1934 = vld [vmem:[#allocation8 + $0xb8] sm:$0xff]
        %v1935 = vld [vmem:[#allocation8 + $0xc0] sm:$0xff]
        %v1936 = vld [vmem:[#allocation8 + $0xc8] sm:$0xff]
        %v1937 = vld [vmem:[#allocation8 + $0xd0] sm:$0xff]
        %v1938 = vld [vmem:[#allocation8 + $0xd8] sm:$0xff]
        %v1939 = vld [vmem:[#allocation8 + $0xe0] sm:$0xff]
        %v1940 = vld [vmem:[#allocation8 + $0xe8] sm:$0xff]
        %v1941 = vld [vmem:[#allocation8 + $0xf0] sm:$0xff]
        %v1942 = vld [vmem:[#allocation8 + $0xf8] sm:$0xff]
        %v1943 = vld [vmem:[#allocation8 + $0x100] sm:$0xff]
        %v1944 = vld [vmem:[#allocation8 + $0x108] sm:$0xff]
        %v1945 = vld [vmem:[#allocation8 + $0x110] sm:$0xff]
        %v1946 = vld [vmem:[#allocation8 + $0x118] sm:$0xff]
        %v1947 = vld [vmem:[#allocation8 + $0x120] sm:$0xff]
        %v1948 = vld [vmem:[#allocation8 + $0x128] sm:$0xff]
        %v1949 = vld [vmem:[#allocation8 + $0x130] sm:$0xff]
        %v1950 = vld [vmem:[#allocation8 + $0x138] sm:$0xff]
        %v1951 = vld [vmem:[#allocation8 + $0x140] sm:$0xff]
        %v1952 = vld [vmem:[#allocation8 + $0x148] sm:$0xff]
        %v1953 = vld [vmem:[#allocation8 + $0x150] sm:$0xff]
        %v1954 = vld [vmem:[#allocation8 + $0x158] sm:$0xff]
        %v1955 = vld [vmem:[#allocation8 + $0x160] sm:$0xff]
        %v1956 = vld [vmem:[#allocation8 + $0x168] sm:$0xff]
        %v1957 = vld [vmem:[#allocation8 + $0x170] sm:$0xff]
        %v1958 = vld [vmem:[#allocation8 + $0x178] sm:$0xff]
        %v1959 = vld [vmem:[#allocation8 + $0x180] sm:$0xff]
        %v1960 = vld [vmem:[#allocation8 + $0x188] sm:$0xff]
        %v1961 = vld [vmem:[#allocation8 + $0x190] sm:$0xff]
        %v1962 = vld [vmem:[#allocation8 + $0x198] sm:$0xff]
        %v1963 = vld [vmem:[#allocation8 + $0x1a0] sm:$0xff]
        %v1964 = vld [vmem:[#allocation8 + $0x1a8] sm:$0xff]
        %v1965 = vld [vmem:[#allocation8 + $0x1b0] sm:$0xff]
        %v1966 = vld [vmem:[#allocation8 + $0x1b8] sm:$0xff]
        %v1967 = vld [vmem:[#allocation8 + $0x1c0] sm:$0xff]
        %v1968 = vld [vmem:[#allocation8 + $0x1c8] sm:$0xff]
        %v1969 = vld [vmem:[#allocation8 + $0x1d0] sm:$0xff]
        %v1970 = vld [vmem:[#allocation8 + $0x1d8] sm:$0xff]
        %v1971 = vld [vmem:[#allocation8 + $0x1e0] sm:$0xff]
        %v1972 = vld [vmem:[#allocation8 + $0x1e8] sm:$0xff]
        %v1973 = vld [vmem:[#allocation8 + $0x1f0] sm:$0xff]
        %v1974 = vld [vmem:[#allocation8 + $0x1f8] sm:$0xff]
        %v1976 = vlaneseq
        %v1977 = vshrl.u32 %v1976, 7
        %v1978 = vsub.s32 0, %v1977
        %v1979 = vrot.slane %v588, %v1978
        %1981 = vmatprep.subr.mxu0 0.0
        %1982 = vmatpush1.msra.mxu0 %v1926
        %1983 = vmatprep.subr.mxu0 0.0
        %1984 = vmatpush1.msra.mxu0 %v1925
        %1985 = vmatprep.subr.mxu0 0.0
        %1986 = vmatpush1.msra.mxu0 %v1924
        %1987 = vmatprep.subr.mxu0 0.0
        %1988 = vmatpush1.msra.mxu0 %v1923
        %1989 = vmatprep.subr.mxu0 0.0
        %1990 = vmatpush1.msra.mxu0 %v1922
        %1991 = vmatprep.subr.mxu0 0.0
        %1992 = vmatpush1.msra.mxu0 %v1921
        %1993 = vmatprep.subr.mxu0 0.0
        %1994 = vmatpush1.msra.mxu0 %v1920
        %1995 = vmatprep.subr.mxu0 0.0
        %1996 = vmatpush1.msra.mxu0 %v1919
        %1997 = vmatprep.subr.mxu0 0.0
        %1998 = vmatpush1.msra.mxu0 %v1918
        %1999 = vmatprep.subr.mxu0 0.0
        %2000 = vmatpush1.msra.mxu0 %v1917
        %2001 = vmatprep.subr.mxu0 0.0
        %2002 = vmatpush1.msra.mxu0 %v1916
        %2003 = vmatprep.subr.mxu0 0.0
        %2004 = vmatpush1.msra.mxu0 %v1915
        %2005 = vmatprep.subr.mxu0 0.0
        %2006 = vmatpush1.msra.mxu0 %v1914
        %2007 = vmatprep.subr.mxu0 0.0
        %2008 = vmatpush1.msra.mxu0 %v1913
        %2009 = vmatprep.subr.mxu0 0.0
        %2010 = vmatpush1.msra.mxu0 %v1912
        %2011 = vmatprep.subr.mxu0 0.0
        %2012 = vmatpush1.msra.mxu0 %v1911
        %2013 = vmatprep.subr.mxu0 0.0
        %2014 = vmatpush2.msra.mxu0 %v1942
        %2015 = vmatprep.subr.mxu0 0.0
        %2016 = vmatpush2.msra.mxu0 %v1941
        %2017 = vmatprep.subr.mxu0 0.0
        %2018 = vmatpush2.msra.mxu0 %v1940
        %2019 = vmatprep.subr.mxu0 0.0
        %2020 = vmatpush2.msra.mxu0 %v1939
        %2021 = vmatprep.subr.mxu0 0.0
        %2022 = vmatpush2.msra.mxu0 %v1938
        %2023 = vmatprep.subr.mxu0 0.0
        %2024 = vmatpush2.msra.mxu0 %v1937
        %2025 = vmatprep.subr.mxu0 0.0
        %2026 = vmatpush2.msra.mxu0 %v1936
        %2027 = vmatprep.subr.mxu0 0.0
        %2028 = vmatpush2.msra.mxu0 %v1935
        %2029 = vmatprep.subr.mxu0 0.0
        %2030 = vmatpush2.msra.mxu0 %v1934
        %2031 = vmatprep.subr.mxu0 0.0
        %2032 = vmatpush2.msra.mxu0 %v1933
        %2033 = vmatprep.subr.mxu0 0.0
        %2034 = vmatpush2.msra.mxu0 %v1932
        %2035 = vmatprep.subr.mxu0 0.0
        %2036 = vmatpush2.msra.mxu0 %v1931
        %2037 = vmatprep.subr.mxu0 0.0
        %2038 = vmatpush2.msra.mxu0 %v1930
        %2039 = vmatprep.subr.mxu0 0.0
        %2040 = vmatpush2.msra.mxu0 %v1929
        %2041 = vmatprep.subr.mxu0 0.0
        %2042 = vmatpush2.msra.mxu0 %v1928
        %2043 = vmatprep.subr.mxu0 0.0
        %2044 = vmatpush2.msra.mxu0 %v1927
        %2045 = vmatprep.mubr.f32.mxu0 %v1231
        %2046 = vmatmul.mubr.f32.gmra.mxu0 %v1230
        %v2047 = vpop.f32.mrf.mxu0
        %v2048 = vadd.f32 %v1979, %v2047
        %v2049 = vpop.f32.mrf.mxu0
        %2050 = vmatprep.mubr.f32.mxu0 %v1235
        %2051 = vmatmul.mubr.f32.gmra.mxu0 %v1234
        %v2052 = vpop.f32.mrf.mxu0
        %v2053 = vadd.f32 %v1979, %v2052
        %v2054 = vpop.f32.mrf.mxu0
        %2055 = vmatprep.mubr.f32.mxu0 %v1239
        %2056 = vmatmul.mubr.f32.gmra.mxu0 %v1238
        %v2057 = vpop.f32.mrf.mxu0
        %v2058 = vadd.f32 %v1979, %v2057
        %v2059 = vpop.f32.mrf.mxu0
        %2060 = vmatprep.mubr.f32.mxu0 %v1243
        %2061 = vmatmul.mubr.f32.gmra.mxu0 %v1242
        %v2062 = vpop.f32.mrf.mxu0
        %v2063 = vadd.f32 %v1979, %v2062
        %v2064 = vpop.f32.mrf.mxu0
        %2065 = vmatprep.mubr.f32.mxu0 %v1247
        %2066 = vmatmul.mubr.f32.gmra.mxu0 %v1246
        %v2067 = vpop.f32.mrf.mxu0
        %v2068 = vadd.f32 %v1979, %v2067
        %v2069 = vpop.f32.mrf.mxu0
        %2070 = vmatprep.mubr.f32.mxu0 %v1251
        %2071 = vmatmul.mubr.f32.gmra.mxu0 %v1250
        %v2072 = vpop.f32.mrf.mxu0
        %v2073 = vadd.f32 %v1979, %v2072
        %v2074 = vpop.f32.mrf.mxu0
        %2075 = vmatprep.mubr.f32.mxu0 %v1255
        %2076 = vmatmul.mubr.f32.gmra.mxu0 %v1254
        %v2077 = vpop.f32.mrf.mxu0
        %v2078 = vadd.f32 %v1979, %v2077
        %v2079 = vpop.f32.mrf.mxu0
        %2080 = vmatprep.mubr.f32.mxu0 %v1259
        %2081 = vmatmul.mubr.f32.gmra.mxu0 %v1258
        %v2082 = vpop.f32.mrf.mxu0
        %v2083 = vadd.f32 %v1979, %v2082
        %v2084 = vpop.f32.mrf.mxu0
        %2085 = vmatprep.mubr.f32.mxu0 %v1263
        %2086 = vmatmul.mubr.f32.gmra.mxu0 %v1262
        %v2087 = vpop.f32.mrf.mxu0
        %v2088 = vadd.f32 %v1979, %v2087
        %v2089 = vpop.f32.mrf.mxu0
        %2090 = vmatprep.mubr.f32.mxu0 %v1267
        %2091 = vmatmul.mubr.f32.gmra.mxu0 %v1266
        %v2092 = vpop.f32.mrf.mxu0
        %v2093 = vadd.f32 %v1979, %v2092
        %v2094 = vpop.f32.mrf.mxu0
        %2095 = vmatprep.mubr.f32.mxu0 %v1271
        %2096 = vmatmul.mubr.f32.gmra.mxu0 %v1270
        %v2097 = vpop.f32.mrf.mxu0
        %v2098 = vadd.f32 %v1979, %v2097
        %v2099 = vpop.f32.mrf.mxu0
        %2100 = vmatprep.mubr.f32.mxu0 %v1275
        %2101 = vmatmul.mubr.f32.gmra.mxu0 %v1274
        %v2102 = vpop.f32.mrf.mxu0
        %v2103 = vadd.f32 %v1979, %v2102
        %v2104 = vpop.f32.mrf.mxu0
        %2105 = vmatprep.mubr.f32.mxu0 %v1279
        %2106 = vmatmul.mubr.f32.gmra.mxu0 %v1278
        %v2107 = vpop.f32.mrf.mxu0
        %v2108 = vadd.f32 %v1979, %v2107
        %v2109 = vpop.f32.mrf.mxu0
        %2110 = vmatprep.mubr.f32.mxu0 %v1283
        %2111 = vmatmul.mubr.f32.gmra.mxu0 %v1282
        %v2112 = vpop.f32.mrf.mxu0
        %v2113 = vadd.f32 %v1979, %v2112
        %v2114 = vpop.f32.mrf.mxu0
        %2115 = vmatprep.mubr.f32.mxu0 %v1287
        %2116 = vmatmul.mubr.f32.gmra.mxu0 %v1286
        %v2117 = vpop.f32.mrf.mxu0
        %v2118 = vadd.f32 %v1979, %v2117
        %v2119 = vpop.f32.mrf.mxu0
        %2120 = vmatprep.mubr.f32.mxu0 %v1291
        %2121 = vmatmul.mubr.f32.gmra.mxu0 %v1290
        %v2122 = vpop.f32.mrf.mxu0
        %v2123 = vadd.f32 %v1979, %v2122
        %v2124 = vpop.f32.mrf.mxu0
        %2125 = vmatprep.mubr.f32.mxu0 %v1295
        %2126 = vmatmul.mubr.f32.gmra.mxu0 %v1294
        %v2127 = vpop.f32.mrf.mxu0
        %v2128 = vadd.f32 %v1979, %v2127
        %v2129 = vpop.f32.mrf.mxu0
        %2130 = vmatprep.mubr.f32.mxu0 %v1299
        %2131 = vmatmul.mubr.f32.gmra.mxu0 %v1298
        %v2132 = vpop.f32.mrf.mxu0
        %v2133 = vadd.f32 %v1979, %v2132
        %v2134 = vpop.f32.mrf.mxu0
        %2135 = vmatprep.mubr.f32.mxu0 %v1303
        %2136 = vmatmul.mubr.f32.gmra.mxu0 %v1302
        %v2137 = vpop.f32.mrf.mxu0
        %v2138 = vadd.f32 %v1979, %v2137
        %v2139 = vpop.f32.mrf.mxu0
        %2140 = vmatprep.mubr.f32.mxu0 %v1307
        %2141 = vmatmul.mubr.f32.gmra.mxu0 %v1306
        %v2142 = vpop.f32.mrf.mxu0
        %v2143 = vadd.f32 %v1979, %v2142
        %v2144 = vpop.f32.mrf.mxu0
        %2145 = vmatprep.mubr.f32.mxu0 %v1311
        %2146 = vmatmul.mubr.f32.gmra.mxu0 %v1310
        %v2147 = vpop.f32.mrf.mxu0
        %v2148 = vadd.f32 %v1979, %v2147
        %v2149 = vpop.f32.mrf.mxu0
        %2150 = vmatprep.mubr.f32.mxu0 %v1315
        %2151 = vmatmul.mubr.f32.gmra.mxu0 %v1314
        %v2152 = vpop.f32.mrf.mxu0
        %v2153 = vadd.f32 %v1979, %v2152
        %v2154 = vpop.f32.mrf.mxu0
        %2155 = vmatprep.mubr.f32.mxu0 %v1319
        %2156 = vmatmul.mubr.f32.gmra.mxu0 %v1318
        %v2157 = vpop.f32.mrf.mxu0
        %v2158 = vadd.f32 %v1979, %v2157
        %v2159 = vpop.f32.mrf.mxu0
        %2160 = vmatprep.mubr.f32.mxu0 %v1323
        %2161 = vmatmul.mubr.f32.gmra.mxu0 %v1322
        %v2162 = vpop.f32.mrf.mxu0
        %v2163 = vadd.f32 %v1979, %v2162
        %v2164 = vpop.f32.mrf.mxu0
        %2165 = vmatprep.mubr.f32.mxu0 %v1327
        %2166 = vmatmul.mubr.f32.gmra.mxu0 %v1326
        %v2167 = vpop.f32.mrf.mxu0
        %v2168 = vadd.f32 %v1979, %v2167
        %v2169 = vpop.f32.mrf.mxu0
        %2170 = vmatprep.mubr.f32.mxu0 %v1331
        %2171 = vmatmul.mubr.f32.gmra.mxu0 %v1330
        %v2172 = vpop.f32.mrf.mxu0
        %v2173 = vadd.f32 %v1979, %v2172
        %v2174 = vpop.f32.mrf.mxu0
        %2175 = vmatprep.mubr.f32.mxu0 %v1335
        %2176 = vmatmul.mubr.f32.gmra.mxu0 %v1334
        %v2177 = vpop.f32.mrf.mxu0
        %v2178 = vadd.f32 %v1979, %v2177
        %v2179 = vpop.f32.mrf.mxu0
        %2180 = vmatprep.mubr.f32.mxu0 %v1339
        %2181 = vmatmul.mubr.f32.gmra.mxu0 %v1338
        %v2182 = vpop.f32.mrf.mxu0
        %v2183 = vadd.f32 %v1979, %v2182
        %v2184 = vpop.f32.mrf.mxu0
        %2185 = vmatprep.mubr.f32.mxu0 %v1343
        %2186 = vmatmul.mubr.f32.gmra.mxu0 %v1342
        %v2187 = vpop.f32.mrf.mxu0
        %v2188 = vadd.f32 %v1979, %v2187
        %v2189 = vpop.f32.mrf.mxu0
        %2190 = vmatprep.mubr.f32.mxu0 %v1347
        %2191 = vmatmul.mubr.f32.gmra.mxu0 %v1346
        %v2192 = vpop.f32.mrf.mxu0
        %v2193 = vadd.f32 %v1979, %v2192
        %v2194 = vpop.f32.mrf.mxu0
        %2195 = vmatprep.mubr.f32.mxu0 %v1351
        %2196 = vmatmul.mubr.f32.gmra.mxu0 %v1350
        %v2197 = vpop.f32.mrf.mxu0
        %v2198 = vadd.f32 %v1979, %v2197
        %v2199 = vpop.f32.mrf.mxu0
        %2200 = vmatprep.mubr.f32.mxu0 %v1355
        %2201 = vmatmul.mubr.f32.gmra.mxu0 %v1354
        %v2202 = vpop.f32.mrf.mxu0
        %v2203 = vadd.f32 %v1979, %v2202
        %v2204 = vpop.f32.mrf.mxu0
        %2205 = vdwg.mxu0
        %2206 = vmatprep.subr.mxu0 0.0
        %2207 = vmatpush1.msra.mxu0 %v1958
        %2208 = vmatprep.subr.mxu0 0.0
        %2209 = vmatpush1.msra.mxu0 %v1957
        %2210 = vmatprep.subr.mxu0 0.0
        %2211 = vmatpush1.msra.mxu0 %v1956
        %2212 = vmatprep.subr.mxu0 0.0
        %2213 = vmatpush1.msra.mxu0 %v1955
        %2214 = vmatprep.subr.mxu0 0.0
        %2215 = vmatpush1.msra.mxu0 %v1954
        %2216 = vmatprep.subr.mxu0 0.0
        %2217 = vmatpush1.msra.mxu0 %v1953
        %2218 = vmatprep.subr.mxu0 0.0
        %2219 = vmatpush1.msra.mxu0 %v1952
        %2220 = vmatprep.subr.mxu0 0.0
        %2221 = vmatpush1.msra.mxu0 %v1951
        %2222 = vmatprep.subr.mxu0 0.0
        %2223 = vmatpush1.msra.mxu0 %v1950
        %2224 = vmatprep.subr.mxu0 0.0
        %2225 = vmatpush1.msra.mxu0 %v1949
        %2226 = vmatprep.subr.mxu0 0.0
        %2227 = vmatpush1.msra.mxu0 %v1948
        %2228 = vmatprep.subr.mxu0 0.0
        %2229 = vmatpush1.msra.mxu0 %v1947
        %2230 = vmatprep.subr.mxu0 0.0
        %2231 = vmatpush1.msra.mxu0 %v1946
        %2232 = vmatprep.subr.mxu0 0.0
        %2233 = vmatpush1.msra.mxu0 %v1945
        %2234 = vmatprep.subr.mxu0 0.0
        %2235 = vmatpush1.msra.mxu0 %v1944
        %2236 = vmatprep.subr.mxu0 0.0
        %2237 = vmatpush1.msra.mxu0 %v1943
        %2238 = vmatprep.subr.mxu0 0.0
        %2239 = vmatpush2.msra.mxu0 %v1974
        %2240 = vmatprep.subr.mxu0 0.0
        %2241 = vmatpush2.msra.mxu0 %v1973
        %2242 = vmatprep.subr.mxu0 0.0
        %2243 = vmatpush2.msra.mxu0 %v1972
        %2244 = vmatprep.subr.mxu0 0.0
        %2245 = vmatpush2.msra.mxu0 %v1971
        %2246 = vmatprep.subr.mxu0 0.0
        %2247 = vmatpush2.msra.mxu0 %v1970
        %2248 = vmatprep.subr.mxu0 0.0
        %2249 = vmatpush2.msra.mxu0 %v1969
        %2250 = vmatprep.subr.mxu0 0.0
        %2251 = vmatpush2.msra.mxu0 %v1968
        %2252 = vmatprep.subr.mxu0 0.0
        %2253 = vmatpush2.msra.mxu0 %v1967
        %2254 = vmatprep.subr.mxu0 0.0
        %2255 = vmatpush2.msra.mxu0 %v1966
        %2256 = vmatprep.subr.mxu0 0.0
        %2257 = vmatpush2.msra.mxu0 %v1965
        %2258 = vmatprep.subr.mxu0 0.0
        %2259 = vmatpush2.msra.mxu0 %v1964
        %2260 = vmatprep.subr.mxu0 0.0
        %2261 = vmatpush2.msra.mxu0 %v1963
        %2262 = vmatprep.subr.mxu0 0.0
        %2263 = vmatpush2.msra.mxu0 %v1962
        %2264 = vmatprep.subr.mxu0 0.0
        %2265 = vmatpush2.msra.mxu0 %v1961
        %2266 = vmatprep.subr.mxu0 0.0
        %2267 = vmatpush2.msra.mxu0 %v1960
        %2268 = vmatprep.subr.mxu0 0.0
        %2269 = vmatpush2.msra.mxu0 %v1959
        %2270 = vmatprep.mubr.f32.mxu0 %v1233
        %2271 = vmatmul.mubr.f32.gmra.mxu0 %v1232
        %v2272 = vpop.f32.mrf.mxu0
        %v2273 = vadd.f32 %v2048, %v2272
        %v2274 = vpop.f32.mrf.mxu0
        %2275 = vmatprep.mubr.f32.mxu0 %v1237
        %2276 = vmatmul.mubr.f32.gmra.mxu0 %v1236
        %v2277 = vpop.f32.mrf.mxu0
        %v2278 = vadd.f32 %v2053, %v2277
        %v2279 = vpop.f32.mrf.mxu0
        %2280 = vmatprep.mubr.f32.mxu0 %v1241
        %2281 = vmatmul.mubr.f32.gmra.mxu0 %v1240
        %v2282 = vpop.f32.mrf.mxu0
        %v2283 = vadd.f32 %v2058, %v2282
        %v2284 = vpop.f32.mrf.mxu0
        %2285 = vmatprep.mubr.f32.mxu0 %v1245
        %2286 = vmatmul.mubr.f32.gmra.mxu0 %v1244
        %v2287 = vpop.f32.mrf.mxu0
        %v2288 = vadd.f32 %v2063, %v2287
        %v2289 = vpop.f32.mrf.mxu0
        %2290 = vmatprep.mubr.f32.mxu0 %v1249
        %2291 = vmatmul.mubr.f32.gmra.mxu0 %v1248
        %v2292 = vpop.f32.mrf.mxu0
        %v2293 = vadd.f32 %v2068, %v2292
        %v2294 = vpop.f32.mrf.mxu0
        %2295 = vmatprep.mubr.f32.mxu0 %v1253
        %2296 = vmatmul.mubr.f32.gmra.mxu0 %v1252
        %v2297 = vpop.f32.mrf.mxu0
        %v2298 = vadd.f32 %v2073, %v2297
        %v2299 = vpop.f32.mrf.mxu0
        %2300 = vmatprep.mubr.f32.mxu0 %v1257
        %2301 = vmatmul.mubr.f32.gmra.mxu0 %v1256
        %v2302 = vpop.f32.mrf.mxu0
        %v2303 = vadd.f32 %v2078, %v2302
        %v2304 = vpop.f32.mrf.mxu0
        %2305 = vmatprep.mubr.f32.mxu0 %v1261
        %2306 = vmatmul.mubr.f32.gmra.mxu0 %v1260
        %v2307 = vpop.f32.mrf.mxu0
        %v2308 = vadd.f32 %v2083, %v2307
        %v2309 = vpop.f32.mrf.mxu0
        %2310 = vmatprep.mubr.f32.mxu0 %v1265
        %2311 = vmatmul.mubr.f32.gmra.mxu0 %v1264
        %v2312 = vpop.f32.mrf.mxu0
        %v2313 = vadd.f32 %v2088, %v2312
        %v2314 = vpop.f32.mrf.mxu0
        %2315 = vmatprep.mubr.f32.mxu0 %v1269
        %2316 = vmatmul.mubr.f32.gmra.mxu0 %v1268
        %v2317 = vpop.f32.mrf.mxu0
        %v2318 = vadd.f32 %v2093, %v2317
        %v2319 = vpop.f32.mrf.mxu0
        %2320 = vmatprep.mubr.f32.mxu0 %v1273
        %2321 = vmatmul.mubr.f32.gmra.mxu0 %v1272
        %v2322 = vpop.f32.mrf.mxu0
        %v2323 = vadd.f32 %v2098, %v2322
        %v2324 = vpop.f32.mrf.mxu0
        %2325 = vmatprep.mubr.f32.mxu0 %v1277
        %2326 = vmatmul.mubr.f32.gmra.mxu0 %v1276
        %v2327 = vpop.f32.mrf.mxu0
        %v2328 = vadd.f32 %v2103, %v2327
        %v2329 = vpop.f32.mrf.mxu0
        %2330 = vmatprep.mubr.f32.mxu0 %v1281
        %2331 = vmatmul.mubr.f32.gmra.mxu0 %v1280
        %v2332 = vpop.f32.mrf.mxu0
        %v2333 = vadd.f32 %v2108, %v2332
        %v2334 = vpop.f32.mrf.mxu0
        %2335 = vmatprep.mubr.f32.mxu0 %v1285
        %2336 = vmatmul.mubr.f32.gmra.mxu0 %v1284
        %v2337 = vpop.f32.mrf.mxu0
        %v2338 = vadd.f32 %v2113, %v2337
        %v2339 = vpop.f32.mrf.mxu0
        %2340 = vmatprep.mubr.f32.mxu0 %v1289
        %2341 = vmatmul.mubr.f32.gmra.mxu0 %v1288
        %v2342 = vpop.f32.mrf.mxu0
        %v2343 = vadd.f32 %v2118, %v2342
        %v2344 = vpop.f32.mrf.mxu0
        %2345 = vmatprep.mubr.f32.mxu0 %v1293
        %2346 = vmatmul.mubr.f32.gmra.mxu0 %v1292
        %v2347 = vpop.f32.mrf.mxu0
        %v2348 = vadd.f32 %v2123, %v2347
        %v2349 = vpop.f32.mrf.mxu0
        %2350 = vmatprep.mubr.f32.mxu0 %v1297
        %2351 = vmatmul.mubr.f32.gmra.mxu0 %v1296
        %v2352 = vpop.f32.mrf.mxu0
        %v2353 = vadd.f32 %v2128, %v2352
        %v2354 = vpop.f32.mrf.mxu0
        %2355 = vmatprep.mubr.f32.mxu0 %v1301
        %2356 = vmatmul.mubr.f32.gmra.mxu0 %v1300
        %v2357 = vpop.f32.mrf.mxu0
        %v2358 = vadd.f32 %v2133, %v2357
        %v2359 = vpop.f32.mrf.mxu0
        %2360 = vmatprep.mubr.f32.mxu0 %v1305
        %2361 = vmatmul.mubr.f32.gmra.mxu0 %v1304
        %v2362 = vpop.f32.mrf.mxu0
        %v2363 = vadd.f32 %v2138, %v2362
        %v2364 = vpop.f32.mrf.mxu0
        %2365 = vmatprep.mubr.f32.mxu0 %v1309
        %2366 = vmatmul.mubr.f32.gmra.mxu0 %v1308
        %v2367 = vpop.f32.mrf.mxu0
        %v2368 = vadd.f32 %v2143, %v2367
        %v2369 = vpop.f32.mrf.mxu0
        %2370 = vmatprep.mubr.f32.mxu0 %v1313
        %2371 = vmatmul.mubr.f32.gmra.mxu0 %v1312
        %v2372 = vpop.f32.mrf.mxu0
        %v2373 = vadd.f32 %v2148, %v2372
        %v2374 = vpop.f32.mrf.mxu0
        %2375 = vmatprep.mubr.f32.mxu0 %v1317
        %2376 = vmatmul.mubr.f32.gmra.mxu0 %v1316
        %v2377 = vpop.f32.mrf.mxu0
        %v2378 = vadd.f32 %v2153, %v2377
        %v2379 = vpop.f32.mrf.mxu0
        %2380 = vmatprep.mubr.f32.mxu0 %v1321
        %2381 = vmatmul.mubr.f32.gmra.mxu0 %v1320
        %v2382 = vpop.f32.mrf.mxu0
        %v2383 = vadd.f32 %v2158, %v2382
        %v2384 = vpop.f32.mrf.mxu0
        %2385 = vmatprep.mubr.f32.mxu0 %v1325
        %2386 = vmatmul.mubr.f32.gmra.mxu0 %v1324
        %v2387 = vpop.f32.mrf.mxu0
        %v2388 = vadd.f32 %v2163, %v2387
        %v2389 = vpop.f32.mrf.mxu0
        %2390 = vmatprep.mubr.f32.mxu0 %v1329
        %2391 = vmatmul.mubr.f32.gmra.mxu0 %v1328
        %v2392 = vpop.f32.mrf.mxu0
        %v2393 = vadd.f32 %v2168, %v2392
        %v2394 = vpop.f32.mrf.mxu0
        %2395 = vmatprep.mubr.f32.mxu0 %v1333
        %2396 = vmatmul.mubr.f32.gmra.mxu0 %v1332
        %v2397 = vpop.f32.mrf.mxu0
        %v2398 = vadd.f32 %v2173, %v2397
        %v2399 = vpop.f32.mrf.mxu0
        %2400 = vmatprep.mubr.f32.mxu0 %v1337
        %2401 = vmatmul.mubr.f32.gmra.mxu0 %v1336
        %v2402 = vpop.f32.mrf.mxu0
        %v2403 = vadd.f32 %v2178, %v2402
        %v2404 = vpop.f32.mrf.mxu0
        %2405 = vmatprep.mubr.f32.mxu0 %v1341
        %2406 = vmatmul.mubr.f32.gmra.mxu0 %v1340
        %v2407 = vpop.f32.mrf.mxu0
        %v2408 = vadd.f32 %v2183, %v2407
        %v2409 = vpop.f32.mrf.mxu0
        %2410 = vmatprep.mubr.f32.mxu0 %v1345
        %2411 = vmatmul.mubr.f32.gmra.mxu0 %v1344
        %v2412 = vpop.f32.mrf.mxu0
        %v2413 = vadd.f32 %v2188, %v2412
        %v2414 = vpop.f32.mrf.mxu0
        %2415 = vmatprep.mubr.f32.mxu0 %v1349
        %2416 = vmatmul.mubr.f32.gmra.mxu0 %v1348
        %v2417 = vpop.f32.mrf.mxu0
        %v2418 = vadd.f32 %v2193, %v2417
        %v2419 = vpop.f32.mrf.mxu0
        %2420 = vmatprep.mubr.f32.mxu0 %v1353
        %2421 = vmatmul.mubr.f32.gmra.mxu0 %v1352
        %v2422 = vpop.f32.mrf.mxu0
        %v2423 = vadd.f32 %v2198, %v2422
        %v2424 = vpop.f32.mrf.mxu0
        %2425 = vmatprep.mubr.f32.mxu0 %v1357
        %2426 = vmatmul.mubr.f32.gmra.mxu0 %v1356
        %v2427 = vpop.f32.mrf.mxu0
        %v2428 = vadd.f32 %v2203, %v2427
        %v2429 = vpop.f32.mrf.mxu0
        %2430 = vdwg.mxu0
        %v2431 = vld [vmem:[#allocation10] sm:$0xff]
        %v2432 = vld [vmem:[#allocation10 + $0x8] sm:$0xff]
        %v2433 = vld [vmem:[#allocation10 + $0x10] sm:$0xff]
        %v2434 = vld [vmem:[#allocation10 + $0x18] sm:$0xff]
        %v2435 = vld [vmem:[#allocation10 + $0x20] sm:$0xff]
        %v2436 = vld [vmem:[#allocation10 + $0x28] sm:$0xff]
        %v2437 = vld [vmem:[#allocation10 + $0x30] sm:$0xff]
        %v2438 = vld [vmem:[#allocation10 + $0x38] sm:$0xff]
        %v2439 = vld [vmem:[#allocation10 + $0x40] sm:$0xff]
        %v2440 = vld [vmem:[#allocation10 + $0x48] sm:$0xff]
        %v2441 = vld [vmem:[#allocation10 + $0x50] sm:$0xff]
        %v2442 = vld [vmem:[#allocation10 + $0x58] sm:$0xff]
        %v2443 = vld [vmem:[#allocation10 + $0x60] sm:$0xff]
        %v2444 = vld [vmem:[#allocation10 + $0x68] sm:$0xff]
        %v2445 = vld [vmem:[#allocation10 + $0x70] sm:$0xff]
        %v2446 = vld [vmem:[#allocation10 + $0x78] sm:$0xff]
        %v2448 = vlaneseq
        %v2449 = vshrl.u32 %v2448, 7
        %v2450 = vsub.s32 0, %v2449
        %v2451 = vrot.slane %v589, %v2450
        %2453 = vmatprep.subr.mxu0 0.0
        %2454 = vmatpush1.msra.mxu0 %v2446
        %2455 = vmatprep.subr.mxu0 0.0
        %2456 = vmatpush1.msra.mxu0 %v2445
        %2457 = vmatprep.subr.mxu0 0.0
        %2458 = vmatpush1.msra.mxu0 %v2444
        %2459 = vmatprep.subr.mxu0 0.0
        %2460 = vmatpush1.msra.mxu0 %v2443
        %2461 = vmatprep.subr.mxu0 0.0
        %2462 = vmatpush1.msra.mxu0 %v2442
        %2463 = vmatprep.subr.mxu0 0.0
        %2464 = vmatpush1.msra.mxu0 %v2441
        %2465 = vmatprep.subr.mxu0 0.0
        %2466 = vmatpush1.msra.mxu0 %v2440
        %2467 = vmatprep.subr.mxu0 0.0
        %2468 = vmatpush1.msra.mxu0 %v2439
        %2469 = vmatprep.subr.mxu0 0.0
        %2470 = vmatpush1.msra.mxu0 %v2438
        %2471 = vmatprep.subr.mxu0 0.0
        %2472 = vmatpush1.msra.mxu0 %v2437
        %2473 = vmatprep.subr.mxu0 0.0
        %2474 = vmatpush1.msra.mxu0 %v2436
        %2475 = vmatprep.subr.mxu0 0.0
        %2476 = vmatpush1.msra.mxu0 %v2435
        %2477 = vmatprep.subr.mxu0 0.0
        %2478 = vmatpush1.msra.mxu0 %v2434
        %2479 = vmatprep.subr.mxu0 0.0
        %2480 = vmatpush1.msra.mxu0 %v2433
        %2481 = vmatprep.subr.mxu0 0.0
        %2482 = vmatpush1.msra.mxu0 %v2432
        %2483 = vmatprep.subr.mxu0 0.0
        %2484 = vmatpush1.msra.mxu0 %v2431
        %2485 = vmatprep.subr.mxu0 0.0
        %2486 = vmatpush2.msra.mxu0 0.0
        %2487 = vmatprep.subr.mxu0 0.0
        %2488 = vmatpush2.msra.mxu0 0.0
        %2489 = vmatprep.subr.mxu0 0.0
        %2490 = vmatpush2.msra.mxu0 0.0
        %2491 = vmatprep.subr.mxu0 0.0
        %2492 = vmatpush2.msra.mxu0 0.0
        %2493 = vmatprep.subr.mxu0 0.0
        %2494 = vmatpush2.msra.mxu0 0.0
        %2495 = vmatprep.subr.mxu0 0.0
        %2496 = vmatpush2.msra.mxu0 0.0
        %2497 = vmatprep.subr.mxu0 0.0
        %2498 = vmatpush2.msra.mxu0 0.0
        %2499 = vmatprep.subr.mxu0 0.0
        %2500 = vmatpush2.msra.mxu0 0.0
        %2501 = vmatprep.subr.mxu0 0.0
        %2502 = vmatpush2.msra.mxu0 0.0
        %2503 = vmatprep.subr.mxu0 0.0
        %2504 = vmatpush2.msra.mxu0 0.0
        %2505 = vmatprep.subr.mxu0 0.0
        %2506 = vmatpush2.msra.mxu0 0.0
        %2507 = vmatprep.subr.mxu0 0.0
        %2508 = vmatpush2.msra.mxu0 0.0
        %2509 = vmatprep.subr.mxu0 0.0
        %2510 = vmatpush2.msra.mxu0 0.0
        %2511 = vmatprep.subr.mxu0 0.0
        %2512 = vmatpush2.msra.mxu0 0.0
        %2513 = vmatprep.subr.mxu0 0.0
        %2514 = vmatpush2.msra.mxu0 0.0
        %2515 = vmatprep.subr.mxu0 0.0
        %2516 = vmatpush2.msra.mxu0 0.0
        %2517 = vmatprep.mubr.f32.mxu0 0.0
        %2518 = vmatmul.mubr.f32.gmra.mxu0 %v1879
        %v2519 = vpop.f32.mrf.mxu0
        %v2520 = vadd.f32 %v2451, %v2519
        %v2521 = vpop.f32.mrf.mxu0
        %2522 = vmatprep.mubr.f32.mxu0 0.0
        %2523 = vmatmul.mubr.f32.gmra.mxu0 %v1880
        %v2524 = vpop.f32.mrf.mxu0
        %v2525 = vadd.f32 %v2451, %v2524
        %v2526 = vpop.f32.mrf.mxu0
        %2527 = vmatprep.mubr.f32.mxu0 0.0
        %2528 = vmatmul.mubr.f32.gmra.mxu0 %v1881
        %v2529 = vpop.f32.mrf.mxu0
        %v2530 = vadd.f32 %v2451, %v2529
        %v2531 = vpop.f32.mrf.mxu0
        %2532 = vmatprep.mubr.f32.mxu0 0.0
        %2533 = vmatmul.mubr.f32.gmra.mxu0 %v1882
        %v2534 = vpop.f32.mrf.mxu0
        %v2535 = vadd.f32 %v2451, %v2534
        %v2536 = vpop.f32.mrf.mxu0
        %2537 = vmatprep.mubr.f32.mxu0 0.0
        %2538 = vmatmul.mubr.f32.gmra.mxu0 %v1883
        %v2539 = vpop.f32.mrf.mxu0
        %v2540 = vadd.f32 %v2451, %v2539
        %v2541 = vpop.f32.mrf.mxu0
        %2542 = vmatprep.mubr.f32.mxu0 0.0
        %2543 = vmatmul.mubr.f32.gmra.mxu0 %v1884
        %v2544 = vpop.f32.mrf.mxu0
        %v2545 = vadd.f32 %v2451, %v2544
        %v2546 = vpop.f32.mrf.mxu0
        %2547 = vmatprep.mubr.f32.mxu0 0.0
        %2548 = vmatmul.mubr.f32.gmra.mxu0 %v1885
        %v2549 = vpop.f32.mrf.mxu0
        %v2550 = vadd.f32 %v2451, %v2549
        %v2551 = vpop.f32.mrf.mxu0
        %2552 = vmatprep.mubr.f32.mxu0 0.0
        %2553 = vmatmul.mubr.f32.gmra.mxu0 %v1886
        %v2554 = vpop.f32.mrf.mxu0
        %v2555 = vadd.f32 %v2451, %v2554
        %v2556 = vpop.f32.mrf.mxu0
        %2557 = vmatprep.mubr.f32.mxu0 0.0
        %2558 = vmatmul.mubr.f32.gmra.mxu0 %v1887
        %v2559 = vpop.f32.mrf.mxu0
        %v2560 = vadd.f32 %v2451, %v2559
        %v2561 = vpop.f32.mrf.mxu0
        %2562 = vmatprep.mubr.f32.mxu0 0.0
        %2563 = vmatmul.mubr.f32.gmra.mxu0 %v1888
        %v2564 = vpop.f32.mrf.mxu0
        %v2565 = vadd.f32 %v2451, %v2564
        %v2566 = vpop.f32.mrf.mxu0
        %2567 = vmatprep.mubr.f32.mxu0 0.0
        %2568 = vmatmul.mubr.f32.gmra.mxu0 %v1889
        %v2569 = vpop.f32.mrf.mxu0
        %v2570 = vadd.f32 %v2451, %v2569
        %v2571 = vpop.f32.mrf.mxu0
        %2572 = vmatprep.mubr.f32.mxu0 0.0
        %2573 = vmatmul.mubr.f32.gmra.mxu0 %v1890
        %v2574 = vpop.f32.mrf.mxu0
        %v2575 = vadd.f32 %v2451, %v2574
        %v2576 = vpop.f32.mrf.mxu0
        %2577 = vmatprep.mubr.f32.mxu0 0.0
        %2578 = vmatmul.mubr.f32.gmra.mxu0 %v1891
        %v2579 = vpop.f32.mrf.mxu0
        %v2580 = vadd.f32 %v2451, %v2579
        %v2581 = vpop.f32.mrf.mxu0
        %2582 = vmatprep.mubr.f32.mxu0 0.0
        %2583 = vmatmul.mubr.f32.gmra.mxu0 %v1892
        %v2584 = vpop.f32.mrf.mxu0
        %v2585 = vadd.f32 %v2451, %v2584
        %v2586 = vpop.f32.mrf.mxu0
        %2587 = vmatprep.mubr.f32.mxu0 0.0
        %2588 = vmatmul.mubr.f32.gmra.mxu0 %v1893
        %v2589 = vpop.f32.mrf.mxu0
        %v2590 = vadd.f32 %v2451, %v2589
        %v2591 = vpop.f32.mrf.mxu0
        %2592 = vmatprep.mubr.f32.mxu0 0.0
        %2593 = vmatmul.mubr.f32.gmra.mxu0 %v1894
        %v2594 = vpop.f32.mrf.mxu0
        %v2595 = vadd.f32 %v2451, %v2594
        %v2596 = vpop.f32.mrf.mxu0
        %2597 = vmatprep.mubr.f32.mxu0 0.0
        %2598 = vmatmul.mubr.f32.gmra.mxu0 %v1895
        %v2599 = vpop.f32.mrf.mxu0
        %v2600 = vadd.f32 %v2451, %v2599
        %v2601 = vpop.f32.mrf.mxu0
        %2602 = vmatprep.mubr.f32.mxu0 0.0
        %2603 = vmatmul.mubr.f32.gmra.mxu0 %v1896
        %v2604 = vpop.f32.mrf.mxu0
        %v2605 = vadd.f32 %v2451, %v2604
        %v2606 = vpop.f32.mrf.mxu0
        %2607 = vmatprep.mubr.f32.mxu0 0.0
        %2608 = vmatmul.mubr.f32.gmra.mxu0 %v1897
        %v2609 = vpop.f32.mrf.mxu0
        %v2610 = vadd.f32 %v2451, %v2609
        %v2611 = vpop.f32.mrf.mxu0
        %2612 = vmatprep.mubr.f32.mxu0 0.0
        %2613 = vmatmul.mubr.f32.gmra.mxu0 %v1898
        %v2614 = vpop.f32.mrf.mxu0
        %v2615 = vadd.f32 %v2451, %v2614
        %v2616 = vpop.f32.mrf.mxu0
        %2617 = vmatprep.mubr.f32.mxu0 0.0
        %2618 = vmatmul.mubr.f32.gmra.mxu0 %v1899
        %v2619 = vpop.f32.mrf.mxu0
        %v2620 = vadd.f32 %v2451, %v2619
        %v2621 = vpop.f32.mrf.mxu0
        %2622 = vmatprep.mubr.f32.mxu0 0.0
        %2623 = vmatmul.mubr.f32.gmra.mxu0 %v1900
        %v2624 = vpop.f32.mrf.mxu0
        %v2625 = vadd.f32 %v2451, %v2624
        %v2626 = vpop.f32.mrf.mxu0
        %2627 = vmatprep.mubr.f32.mxu0 0.0
        %2628 = vmatmul.mubr.f32.gmra.mxu0 %v1901
        %v2629 = vpop.f32.mrf.mxu0
        %v2630 = vadd.f32 %v2451, %v2629
        %v2631 = vpop.f32.mrf.mxu0
        %2632 = vmatprep.mubr.f32.mxu0 0.0
        %2633 = vmatmul.mubr.f32.gmra.mxu0 %v1902
        %v2634 = vpop.f32.mrf.mxu0
        %v2635 = vadd.f32 %v2451, %v2634
        %v2636 = vpop.f32.mrf.mxu0
        %2637 = vmatprep.mubr.f32.mxu0 0.0
        %2638 = vmatmul.mubr.f32.gmra.mxu0 %v1903
        %v2639 = vpop.f32.mrf.mxu0
        %v2640 = vadd.f32 %v2451, %v2639
        %v2641 = vpop.f32.mrf.mxu0
        %2642 = vmatprep.mubr.f32.mxu0 0.0
        %2643 = vmatmul.mubr.f32.gmra.mxu0 %v1904
        %v2644 = vpop.f32.mrf.mxu0
        %v2645 = vadd.f32 %v2451, %v2644
        %v2646 = vpop.f32.mrf.mxu0
        %2647 = vmatprep.mubr.f32.mxu0 0.0
        %2648 = vmatmul.mubr.f32.gmra.mxu0 %v1905
        %v2649 = vpop.f32.mrf.mxu0
        %v2650 = vadd.f32 %v2451, %v2649
        %v2651 = vpop.f32.mrf.mxu0
        %2652 = vmatprep.mubr.f32.mxu0 0.0
        %2653 = vmatmul.mubr.f32.gmra.mxu0 %v1906
        %v2654 = vpop.f32.mrf.mxu0
        %v2655 = vadd.f32 %v2451, %v2654
        %v2656 = vpop.f32.mrf.mxu0
        %2657 = vmatprep.mubr.f32.mxu0 0.0
        %2658 = vmatmul.mubr.f32.gmra.mxu0 %v1907
        %v2659 = vpop.f32.mrf.mxu0
        %v2660 = vadd.f32 %v2451, %v2659
        %v2661 = vpop.f32.mrf.mxu0
        %2662 = vmatprep.mubr.f32.mxu0 0.0
        %2663 = vmatmul.mubr.f32.gmra.mxu0 %v1908
        %v2664 = vpop.f32.mrf.mxu0
        %v2665 = vadd.f32 %v2451, %v2664
        %v2666 = vpop.f32.mrf.mxu0
        %2667 = vmatprep.mubr.f32.mxu0 0.0
        %2668 = vmatmul.mubr.f32.gmra.mxu0 %v1909
        %v2669 = vpop.f32.mrf.mxu0
        %v2670 = vadd.f32 %v2451, %v2669
        %v2671 = vpop.f32.mrf.mxu0
        %2672 = vmatprep.mubr.f32.mxu0 0.0
        %2673 = vmatmul.mubr.f32.gmra.mxu0 %v1910
        %v2674 = vpop.f32.mrf.mxu0
        %v2675 = vadd.f32 %v2451, %v2674
        %v2676 = vpop.f32.mrf.mxu0
        %2677 = vdwg.mxu0
        %2678 = vst [vmem:[%s537] sm:$0xff] %v1230
        %2679 = vst [vmem:[%s537 + $0x8] sm:$0xff] %v1231
        %2680 = vst [vmem:[%s537 + $0x10] sm:$0xff] %v1232
        %2681 = vst [vmem:[%s537 + $0x18] sm:$0xff] %v1233
        %2682 = vst [vmem:[%s537 + $0x20] sm:$0xff] %v1234
        %2683 = vst [vmem:[%s537 + $0x28] sm:$0xff] %v1235
        %2684 = vst [vmem:[%s537 + $0x30] sm:$0xff] %v1236
        %2685 = vst [vmem:[%s537 + $0x38] sm:$0xff] %v1237
        %2686 = vst [vmem:[%s537 + $0x40] sm:$0xff] %v1238
        %2687 = vst [vmem:[%s537 + $0x48] sm:$0xff] %v1239
        %2688 = vst [vmem:[%s537 + $0x50] sm:$0xff] %v1240
        %2689 = vst [vmem:[%s537 + $0x58] sm:$0xff] %v1241
        %2690 = vst [vmem:[%s537 + $0x60] sm:$0xff] %v1242
        %2691 = vst [vmem:[%s537 + $0x68] sm:$0xff] %v1243
        %2692 = vst [vmem:[%s537 + $0x70] sm:$0xff] %v1244
        %2693 = vst [vmem:[%s537 + $0x78] sm:$0xff] %v1245
        %2694 = vst [vmem:[%s537 + $0x80] sm:$0xff] %v1246
        %2695 = vst [vmem:[%s537 + $0x88] sm:$0xff] %v1247
        %2696 = vst [vmem:[%s537 + $0x90] sm:$0xff] %v1248
        %2697 = vst [vmem:[%s537 + $0x98] sm:$0xff] %v1249
        %2698 = vst [vmem:[%s537 + $0xa0] sm:$0xff] %v1250
        %2699 = vst [vmem:[%s537 + $0xa8] sm:$0xff] %v1251
        %2700 = vst [vmem:[%s537 + $0xb0] sm:$0xff] %v1252
        %2701 = vst [vmem:[%s537 + $0xb8] sm:$0xff] %v1253
        %2702 = vst [vmem:[%s537 + $0xc0] sm:$0xff] %v1254
        %2703 = vst [vmem:[%s537 + $0xc8] sm:$0xff] %v1255
        %2704 = vst [vmem:[%s537 + $0xd0] sm:$0xff] %v1256
        %2705 = vst [vmem:[%s537 + $0xd8] sm:$0xff] %v1257
        %2706 = vst [vmem:[%s537 + $0xe0] sm:$0xff] %v1258
        %2707 = vst [vmem:[%s537 + $0xe8] sm:$0xff] %v1259
        %2708 = vst [vmem:[%s537 + $0xf0] sm:$0xff] %v1260
        %2709 = vst [vmem:[%s537 + $0xf8] sm:$0xff] %v1261
        %2710 = vst [vmem:[%s537 + $0x100] sm:$0xff] %v1262
        %2711 = vst [vmem:[%s537 + $0x108] sm:$0xff] %v1263
        %2712 = vst [vmem:[%s537 + $0x110] sm:$0xff] %v1264
        %2713 = vst [vmem:[%s537 + $0x118] sm:$0xff] %v1265
        %2714 = vst [vmem:[%s537 + $0x120] sm:$0xff] %v1266
        %2715 = vst [vmem:[%s537 + $0x128] sm:$0xff] %v1267
        %2716 = vst [vmem:[%s537 + $0x130] sm:$0xff] %v1268
        %2717 = vst [vmem:[%s537 + $0x138] sm:$0xff] %v1269
        %2718 = vst [vmem:[%s537 + $0x140] sm:$0xff] %v1270
        %2719 = vst [vmem:[%s537 + $0x148] sm:$0xff] %v1271
        %2720 = vst [vmem:[%s537 + $0x150] sm:$0xff] %v1272
        %2721 = vst [vmem:[%s537 + $0x158] sm:$0xff] %v1273
        %2722 = vst [vmem:[%s537 + $0x160] sm:$0xff] %v1274
        %2723 = vst [vmem:[%s537 + $0x168] sm:$0xff] %v1275
        %2724 = vst [vmem:[%s537 + $0x170] sm:$0xff] %v1276
        %2725 = vst [vmem:[%s537 + $0x178] sm:$0xff] %v1277
        %2726 = vst [vmem:[%s537 + $0x180] sm:$0xff] %v1278
        %2727 = vst [vmem:[%s537 + $0x188] sm:$0xff] %v1279
        %2728 = vst [vmem:[%s537 + $0x190] sm:$0xff] %v1280
        %2729 = vst [vmem:[%s537 + $0x198] sm:$0xff] %v1281
        %2730 = vst [vmem:[%s537 + $0x1a0] sm:$0xff] %v1282
        %2731 = vst [vmem:[%s537 + $0x1a8] sm:$0xff] %v1283
        %2732 = vst [vmem:[%s537 + $0x1b0] sm:$0xff] %v1284
        %2733 = vst [vmem:[%s537 + $0x1b8] sm:$0xff] %v1285
        %2734 = vst [vmem:[%s537 + $0x1c0] sm:$0xff] %v1286
        %2735 = vst [vmem:[%s537 + $0x1c8] sm:$0xff] %v1287
        %2736 = vst [vmem:[%s537 + $0x1d0] sm:$0xff] %v1288
        %2737 = vst [vmem:[%s537 + $0x1d8] sm:$0xff] %v1289
        %2738 = vst [vmem:[%s537 + $0x1e0] sm:$0xff] %v1290
        %2739 = vst [vmem:[%s537 + $0x1e8] sm:$0xff] %v1291
        %2740 = vst [vmem:[%s537 + $0x1f0] sm:$0xff] %v1292
        %2741 = vst [vmem:[%s537 + $0x1f8] sm:$0xff] %v1293
        %2742 = vst [vmem:[%s537 + $0x200] sm:$0xff] %v1294
        %2743 = vst [vmem:[%s537 + $0x208] sm:$0xff] %v1295
        %2744 = vst [vmem:[%s537 + $0x210] sm:$0xff] %v1296
        %2745 = vst [vmem:[%s537 + $0x218] sm:$0xff] %v1297
        %2746 = vst [vmem:[%s537 + $0x220] sm:$0xff] %v1298
        %2747 = vst [vmem:[%s537 + $0x228] sm:$0xff] %v1299
        %2748 = vst [vmem:[%s537 + $0x230] sm:$0xff] %v1300
        %2749 = vst [vmem:[%s537 + $0x238] sm:$0xff] %v1301
        %2750 = vst [vmem:[%s537 + $0x240] sm:$0xff] %v1302
        %2751 = vst [vmem:[%s537 + $0x248] sm:$0xff] %v1303
        %2752 = vst [vmem:[%s537 + $0x250] sm:$0xff] %v1304
        %2753 = vst [vmem:[%s537 + $0x258] sm:$0xff] %v1305
        %2754 = vst [vmem:[%s537 + $0x260] sm:$0xff] %v1306
        %2755 = vst [vmem:[%s537 + $0x268] sm:$0xff] %v1307
        %2756 = vst [vmem:[%s537 + $0x270] sm:$0xff] %v1308
        %2757 = vst [vmem:[%s537 + $0x278] sm:$0xff] %v1309
        %2758 = vst [vmem:[%s537 + $0x280] sm:$0xff] %v1310
        %2759 = vst [vmem:[%s537 + $0x288] sm:$0xff] %v1311
        %2760 = vst [vmem:[%s537 + $0x290] sm:$0xff] %v1312
        %2761 = vst [vmem:[%s537 + $0x298] sm:$0xff] %v1313
        %2762 = vst [vmem:[%s537 + $0x2a0] sm:$0xff] %v1314
        %2763 = vst [vmem:[%s537 + $0x2a8] sm:$0xff] %v1315
        %2764 = vst [vmem:[%s537 + $0x2b0] sm:$0xff] %v1316
        %2765 = vst [vmem:[%s537 + $0x2b8] sm:$0xff] %v1317
        %2766 = vst [vmem:[%s537 + $0x2c0] sm:$0xff] %v1318
        %2767 = vst [vmem:[%s537 + $0x2c8] sm:$0xff] %v1319
        %2768 = vst [vmem:[%s537 + $0x2d0] sm:$0xff] %v1320
        %2769 = vst [vmem:[%s537 + $0x2d8] sm:$0xff] %v1321
        %2770 = vst [vmem:[%s537 + $0x2e0] sm:$0xff] %v1322
        %2771 = vst [vmem:[%s537 + $0x2e8] sm:$0xff] %v1323
        %2772 = vst [vmem:[%s537 + $0x2f0] sm:$0xff] %v1324
        %2773 = vst [vmem:[%s537 + $0x2f8] sm:$0xff] %v1325
        %2774 = vst [vmem:[%s537 + $0x300] sm:$0xff] %v1326
        %2775 = vst [vmem:[%s537 + $0x308] sm:$0xff] %v1327
        %2776 = vst [vmem:[%s537 + $0x310] sm:$0xff] %v1328
        %2777 = vst [vmem:[%s537 + $0x318] sm:$0xff] %v1329
        %2778 = vst [vmem:[%s537 + $0x320] sm:$0xff] %v1330
        %2779 = vst [vmem:[%s537 + $0x328] sm:$0xff] %v1331
        %2780 = vst [vmem:[%s537 + $0x330] sm:$0xff] %v1332
        %2781 = vst [vmem:[%s537 + $0x338] sm:$0xff] %v1333
        %2782 = vst [vmem:[%s537 + $0x340] sm:$0xff] %v1334
        %2783 = vst [vmem:[%s537 + $0x348] sm:$0xff] %v1335
        %2784 = vst [vmem:[%s537 + $0x350] sm:$0xff] %v1336
        %2785 = vst [vmem:[%s537 + $0x358] sm:$0xff] %v1337
        %2786 = vst [vmem:[%s537 + $0x360] sm:$0xff] %v1338
        %2787 = vst [vmem:[%s537 + $0x368] sm:$0xff] %v1339
        %2788 = vst [vmem:[%s537 + $0x370] sm:$0xff] %v1340
        %2789 = vst [vmem:[%s537 + $0x378] sm:$0xff] %v1341
        %2790 = vst [vmem:[%s537 + $0x380] sm:$0xff] %v1342
        %2791 = vst [vmem:[%s537 + $0x388] sm:$0xff] %v1343
        %2792 = vst [vmem:[%s537 + $0x390] sm:$0xff] %v1344
        %2793 = vst [vmem:[%s537 + $0x398] sm:$0xff] %v1345
        %2794 = vst [vmem:[%s537 + $0x3a0] sm:$0xff] %v1346
        %2795 = vst [vmem:[%s537 + $0x3a8] sm:$0xff] %v1347
        %2796 = vst [vmem:[%s537 + $0x3b0] sm:$0xff] %v1348
        %2797 = vst [vmem:[%s537 + $0x3b8] sm:$0xff] %v1349
        %2798 = vst [vmem:[%s537 + $0x3c0] sm:$0xff] %v1350
        %2799 = vst [vmem:[%s537 + $0x3c8] sm:$0xff] %v1351
        %2800 = vst [vmem:[%s537 + $0x3d0] sm:$0xff] %v1352
        %2801 = vst [vmem:[%s537 + $0x3d8] sm:$0xff] %v1353
        %2802 = vst [vmem:[%s537 + $0x3e0] sm:$0xff] %v1354
        %2803 = vst [vmem:[%s537 + $0x3e8] sm:$0xff] %v1355
        %2804 = vst [vmem:[%s537 + $0x3f0] sm:$0xff] %v1356
        %2805 = vst [vmem:[%s537 + $0x3f8] sm:$0xff] %v1357
        %2806 = vst [vmem:[%s544] sm:$0xff] %v1879
        %2807 = vst [vmem:[%s544 + $0x8] sm:$0xff] %v1880
        %2808 = vst [vmem:[%s544 + $0x10] sm:$0xff] %v1881
        %2809 = vst [vmem:[%s544 + $0x18] sm:$0xff] %v1882
        %2810 = vst [vmem:[%s544 + $0x20] sm:$0xff] %v1883
        %2811 = vst [vmem:[%s544 + $0x28] sm:$0xff] %v1884
        %2812 = vst [vmem:[%s544 + $0x30] sm:$0xff] %v1885
        %2813 = vst [vmem:[%s544 + $0x38] sm:$0xff] %v1886
        %2814 = vst [vmem:[%s544 + $0x40] sm:$0xff] %v1887
        %2815 = vst [vmem:[%s544 + $0x48] sm:$0xff] %v1888
        %2816 = vst [vmem:[%s544 + $0x50] sm:$0xff] %v1889
        %2817 = vst [vmem:[%s544 + $0x58] sm:$0xff] %v1890
        %2818 = vst [vmem:[%s544 + $0x60] sm:$0xff] %v1891
        %2819 = vst [vmem:[%s544 + $0x68] sm:$0xff] %v1892
        %2820 = vst [vmem:[%s544 + $0x70] sm:$0xff] %v1893
        %2821 = vst [vmem:[%s544 + $0x78] sm:$0xff] %v1894
        %2822 = vst [vmem:[%s544 + $0x80] sm:$0xff] %v1895
        %2823 = vst [vmem:[%s544 + $0x88] sm:$0xff] %v1896
        %2824 = vst [vmem:[%s544 + $0x90] sm:$0xff] %v1897
        %2825 = vst [vmem:[%s544 + $0x98] sm:$0xff] %v1898
        %2826 = vst [vmem:[%s544 + $0xa0] sm:$0xff] %v1899
        %2827 = vst [vmem:[%s544 + $0xa8] sm:$0xff] %v1900
        %2828 = vst [vmem:[%s544 + $0xb0] sm:$0xff] %v1901
        %2829 = vst [vmem:[%s544 + $0xb8] sm:$0xff] %v1902
        %2830 = vst [vmem:[%s544 + $0xc0] sm:$0xff] %v1903
        %2831 = vst [vmem:[%s544 + $0xc8] sm:$0xff] %v1904
        %2832 = vst [vmem:[%s544 + $0xd0] sm:$0xff] %v1905
        %2833 = vst [vmem:[%s544 + $0xd8] sm:$0xff] %v1906
        %2834 = vst [vmem:[%s544 + $0xe0] sm:$0xff] %v1907
        %2835 = vst [vmem:[%s544 + $0xe8] sm:$0xff] %v1908
        %2836 = vst [vmem:[%s544 + $0xf0] sm:$0xff] %v1909
        %2837 = vst [vmem:[%s544 + $0xf8] sm:$0xff] %v1910
        %2838 = vst [vmem:[%s523] sm:$0xff] %v2273
        %2839 = vst [vmem:[%s523 + $0x8] sm:$0xff] %v2278
        %2840 = vst [vmem:[%s523 + $0x10] sm:$0xff] %v2283
        %2841 = vst [vmem:[%s523 + $0x18] sm:$0xff] %v2288
        %2842 = vst [vmem:[%s523 + $0x20] sm:$0xff] %v2293
        %2843 = vst [vmem:[%s523 + $0x28] sm:$0xff] %v2298
        %2844 = vst [vmem:[%s523 + $0x30] sm:$0xff] %v2303
        %2845 = vst [vmem:[%s523 + $0x38] sm:$0xff] %v2308
        %2846 = vst [vmem:[%s523 + $0x40] sm:$0xff] %v2313
        %2847 = vst [vmem:[%s523 + $0x48] sm:$0xff] %v2318
        %2848 = vst [vmem:[%s523 + $0x50] sm:$0xff] %v2323
        %2849 = vst [vmem:[%s523 + $0x58] sm:$0xff] %v2328
        %2850 = vst [vmem:[%s523 + $0x60] sm:$0xff] %v2333
        %2851 = vst [vmem:[%s523 + $0x68] sm:$0xff] %v2338
        %2852 = vst [vmem:[%s523 + $0x70] sm:$0xff] %v2343
        %2853 = vst [vmem:[%s523 + $0x78] sm:$0xff] %v2348
        %2854 = vst [vmem:[%s523 + $0x80] sm:$0xff] %v2353
        %2855 = vst [vmem:[%s523 + $0x88] sm:$0xff] %v2358
        %2856 = vst [vmem:[%s523 + $0x90] sm:$0xff] %v2363
        %2857 = vst [vmem:[%s523 + $0x98] sm:$0xff] %v2368
        %2858 = vst [vmem:[%s523 + $0xa0] sm:$0xff] %v2373
        %2859 = vst [vmem:[%s523 + $0xa8] sm:$0xff] %v2378
        %2860 = vst [vmem:[%s523 + $0xb0] sm:$0xff] %v2383
        %2861 = vst [vmem:[%s523 + $0xb8] sm:$0xff] %v2388
        %2862 = vst [vmem:[%s523 + $0xc0] sm:$0xff] %v2393
        %2863 = vst [vmem:[%s523 + $0xc8] sm:$0xff] %v2398
        %2864 = vst [vmem:[%s523 + $0xd0] sm:$0xff] %v2403
        %2865 = vst [vmem:[%s523 + $0xd8] sm:$0xff] %v2408
        %2866 = vst [vmem:[%s523 + $0xe0] sm:$0xff] %v2413
        %2867 = vst [vmem:[%s523 + $0xe8] sm:$0xff] %v2418
        %2868 = vst [vmem:[%s523 + $0xf0] sm:$0xff] %v2423
        %2869 = vst [vmem:[%s523 + $0xf8] sm:$0xff] %v2428
        %2870 = vst [vmem:[%s530] sm:$0xff] %v2520
        %2871 = vst [vmem:[%s530 + $0x8] sm:$0xff] %v2525
        %2872 = vst [vmem:[%s530 + $0x10] sm:$0xff] %v2530
        %2873 = vst [vmem:[%s530 + $0x18] sm:$0xff] %v2535
        %2874 = vst [vmem:[%s530 + $0x20] sm:$0xff] %v2540
        %2875 = vst [vmem:[%s530 + $0x28] sm:$0xff] %v2545
        %2876 = vst [vmem:[%s530 + $0x30] sm:$0xff] %v2550
        %2877 = vst [vmem:[%s530 + $0x38] sm:$0xff] %v2555
        %2878 = vst [vmem:[%s530 + $0x40] sm:$0xff] %v2560
        %2879 = vst [vmem:[%s530 + $0x48] sm:$0xff] %v2565
        %2880 = vst [vmem:[%s530 + $0x50] sm:$0xff] %v2570
        %2881 = vst [vmem:[%s530 + $0x58] sm:$0xff] %v2575
        %2882 = vst [vmem:[%s530 + $0x60] sm:$0xff] %v2580
        %2883 = vst [vmem:[%s530 + $0x68] sm:$0xff] %v2585
        %2884 = vst [vmem:[%s530 + $0x70] sm:$0xff] %v2590
        %2885 = vst [vmem:[%s530 + $0x78] sm:$0xff] %v2595
        %2886 = vst [vmem:[%s530 + $0x80] sm:$0xff] %v2600
        %2887 = vst [vmem:[%s530 + $0x88] sm:$0xff] %v2605
        %2888 = vst [vmem:[%s530 + $0x90] sm:$0xff] %v2610
        %2889 = vst [vmem:[%s530 + $0x98] sm:$0xff] %v2615
        %2890 = vst [vmem:[%s530 + $0xa0] sm:$0xff] %v2620
        %2891 = vst [vmem:[%s530 + $0xa8] sm:$0xff] %v2625
        %2892 = vst [vmem:[%s530 + $0xb0] sm:$0xff] %v2630
        %2893 = vst [vmem:[%s530 + $0xb8] sm:$0xff] %v2635
        %2894 = vst [vmem:[%s530 + $0xc0] sm:$0xff] %v2640
        %2895 = vst [vmem:[%s530 + $0xc8] sm:$0xff] %v2645
        %2896 = vst [vmem:[%s530 + $0xd0] sm:$0xff] %v2650
        %2897 = vst [vmem:[%s530 + $0xd8] sm:$0xff] %v2655
        %2898 = vst [vmem:[%s530 + $0xe0] sm:$0xff] %v2660
        %2899 = vst [vmem:[%s530 + $0xe8] sm:$0xff] %v2665
        %2900 = vst [vmem:[%s530 + $0xf0] sm:$0xff] %v2670
        %2901 = vst [vmem:[%s530 + $0xf8] sm:$0xff] %v2675
        %v2902 = vsub.f32 %v2273, %v556
        %v2903 = vsub.f32 %v2278, %v557
        %v2904 = vsub.f32 %v2283, %v558
        %v2905 = vsub.f32 %v2288, %v559
        %v2906 = vsub.f32 %v2293, %v560
        %v2907 = vsub.f32 %v2298, %v561
        %v2908 = vsub.f32 %v2303, %v562
        %v2909 = vsub.f32 %v2308, %v563
        %v2910 = vsub.f32 %v2313, %v564
        %v2911 = vsub.f32 %v2318, %v565
        %v2912 = vsub.f32 %v2323, %v566
        %v2913 = vsub.f32 %v2328, %v567
        %v2914 = vsub.f32 %v2333, %v568
        %v2915 = vsub.f32 %v2338, %v569
        %v2916 = vsub.f32 %v2343, %v570
        %v2917 = vsub.f32 %v2348, %v571
        %v2918 = vsub.f32 %v2353, %v572
        %v2919 = vsub.f32 %v2358, %v573
        %v2920 = vsub.f32 %v2363, %v574
        %v2921 = vsub.f32 %v2368, %v575
        %v2922 = vsub.f32 %v2373, %v576
        %v2923 = vsub.f32 %v2378, %v577
        %v2924 = vsub.f32 %v2383, %v578
        %v2925 = vsub.f32 %v2388, %v579
        %v2926 = vsub.f32 %v2393, %v580
        %v2927 = vsub.f32 %v2398, %v581
        %v2928 = vsub.f32 %v2403, %v582
        %v2929 = vsub.f32 %v2408, %v583
        %v2930 = vsub.f32 %v2413, %v584
        %v2931 = vsub.f32 %v2418, %v585
        %v2932 = vsub.f32 %v2423, %v586
        %v2933 = vsub.f32 %v2428, %v587
        %v2934 = vmul.f32 %v2902, %v2902
        %v2935 = vmul.f32 %v2903, %v2903
        %v2936 = vmul.f32 %v2904, %v2904
        %v2937 = vmul.f32 %v2905, %v2905
        %v2938 = vmul.f32 %v2906, %v2906
        %v2939 = vmul.f32 %v2907, %v2907
        %v2940 = vmul.f32 %v2908, %v2908
        %v2941 = vmul.f32 %v2909, %v2909
        %v2942 = vmul.f32 %v2910, %v2910
        %v2943 = vmul.f32 %v2911, %v2911
        %v2944 = vmul.f32 %v2912, %v2912
        %v2945 = vmul.f32 %v2913, %v2913
        %v2946 = vmul.f32 %v2914, %v2914
        %v2947 = vmul.f32 %v2915, %v2915
        %v2948 = vmul.f32 %v2916, %v2916
        %v2949 = vmul.f32 %v2917, %v2917
        %v2950 = vmul.f32 %v2918, %v2918
        %v2951 = vmul.f32 %v2919, %v2919
        %v2952 = vmul.f32 %v2920, %v2920
        %v2953 = vmul.f32 %v2921, %v2921
        %v2954 = vmul.f32 %v2922, %v2922
        %v2955 = vmul.f32 %v2923, %v2923
        %v2956 = vmul.f32 %v2924, %v2924
        %v2957 = vmul.f32 %v2925, %v2925
        %v2958 = vmul.f32 %v2926, %v2926
        %v2959 = vmul.f32 %v2927, %v2927
        %v2960 = vmul.f32 %v2928, %v2928
        %v2961 = vmul.f32 %v2929, %v2929
        %v2962 = vmul.f32 %v2930, %v2930
        %v2963 = vmul.f32 %v2931, %v2931
        %v2964 = vmul.f32 %v2932, %v2932
        %v2965 = vmul.f32 %v2933, %v2933
        %v2966 = vadd.f32 %v2934, %v2935
        %v2967 = vadd.f32 %v2966, %v2936
        %v2968 = vadd.f32 %v2967, %v2937
        %v2969 = vadd.f32 %v2968, %v2938
        %v2970 = vadd.f32 %v2969, %v2939
        %v2971 = vadd.f32 %v2970, %v2940
        %v2972 = vadd.f32 %v2971, %v2941
        %v2973 = vadd.f32 %v2972, %v2942
        %v2974 = vadd.f32 %v2973, %v2943
        %v2975 = vadd.f32 %v2974, %v2944
        %v2976 = vadd.f32 %v2975, %v2945
        %v2977 = vadd.f32 %v2976, %v2946
        %v2978 = vadd.f32 %v2977, %v2947
        %v2979 = vadd.f32 %v2978, %v2948
        %v2980 = vadd.f32 %v2979, %v2949
        %v2981 = vadd.f32 %v2980, %v2950
        %v2982 = vadd.f32 %v2981, %v2951
        %v2983 = vadd.f32 %v2982, %v2952
        %v2984 = vadd.f32 %v2983, %v2953
        %v2985 = vadd.f32 %v2984, %v2954
        %v2986 = vadd.f32 %v2985, %v2955
        %v2987 = vadd.f32 %v2986, %v2956
        %v2988 = vadd.f32 %v2987, %v2957
        %v2989 = vadd.f32 %v2988, %v2958
        %v2990 = vadd.f32 %v2989, %v2959
        %v2991 = vadd.f32 %v2990, %v2960
        %v2992 = vadd.f32 %v2991, %v2961
        %v2993 = vadd.f32 %v2992, %v2962
        %v2994 = vadd.f32 %v2993, %v2963
        %v2995 = vadd.f32 %v2994, %v2964
        %v2996 = vadd.f32 %v2995, %v2965
        %2997 = vadd.xlane.f32.xlu0 %v2996
        %v2998 = vpop.xlane.xlu0 %2997
        %v2999 = vrot.slane %v2998, 4
        %v3000 = vadd.f32 %v2998, %v2999
        %v3001 = vrot.slane %v3000, 2
        %v3002 = vadd.f32 %v3000, %v3001
        %v3003 = vrot.slane %v3002, 1
        %v3004 = vadd.f32 %v3002, %v3003
        %s3005 = vtos %v3004
        %v3006 = vsub.f32 %v2520, %v556
        %v3007 = vsub.f32 %v2525, %v557
        %v3008 = vsub.f32 %v2530, %v558
        %v3009 = vsub.f32 %v2535, %v559
        %v3010 = vsub.f32 %v2540, %v560
        %v3011 = vsub.f32 %v2545, %v561
        %v3012 = vsub.f32 %v2550, %v562
        %v3013 = vsub.f32 %v2555, %v563
        %v3014 = vsub.f32 %v2560, %v564
        %v3015 = vsub.f32 %v2565, %v565
        %v3016 = vsub.f32 %v2570, %v566
        %v3017 = vsub.f32 %v2575, %v567
        %v3018 = vsub.f32 %v2580, %v568
        %v3019 = vsub.f32 %v2585, %v569
        %v3020 = vsub.f32 %v2590, %v570
        %v3021 = vsub.f32 %v2595, %v571
        %v3022 = vsub.f32 %v2600, %v572
        %v3023 = vsub.f32 %v2605, %v573
        %v3024 = vsub.f32 %v2610, %v574
        %v3025 = vsub.f32 %v2615, %v575
        %v3026 = vsub.f32 %v2620, %v576
        %v3027 = vsub.f32 %v2625, %v577
        %v3028 = vsub.f32 %v2630, %v578
        %v3029 = vsub.f32 %v2635, %v579
        %v3030 = vsub.f32 %v2640, %v580
        %v3031 = vsub.f32 %v2645, %v581
        %v3032 = vsub.f32 %v2650, %v582
        %v3033 = vsub.f32 %v2655, %v583
        %v3034 = vsub.f32 %v2660, %v584
        %v3035 = vsub.f32 %v2665, %v585
        %v3036 = vsub.f32 %v2670, %v586
        %v3037 = vsub.f32 %v2675, %v587
        %v3038 = vmul.f32 %v3006, %v3006
        %v3039 = vmul.f32 %v3007, %v3007
        %v3040 = vmul.f32 %v3008, %v3008
        %v3041 = vmul.f32 %v3009, %v3009
        %v3042 = vmul.f32 %v3010, %v3010
        %v3043 = vmul.f32 %v3011, %v3011
        %v3044 = vmul.f32 %v3012, %v3012
        %v3045 = vmul.f32 %v3013, %v3013
        %v3046 = vmul.f32 %v3014, %v3014
        %v3047 = vmul.f32 %v3015, %v3015
        %v3048 = vmul.f32 %v3016, %v3016
        %v3049 = vmul.f32 %v3017, %v3017
        %v3050 = vmul.f32 %v3018, %v3018
        %v3051 = vmul.f32 %v3019, %v3019
        %v3052 = vmul.f32 %v3020, %v3020
        %v3053 = vmul.f32 %v3021, %v3021
        %v3054 = vmul.f32 %v3022, %v3022
        %v3055 = vmul.f32 %v3023, %v3023
        %v3056 = vmul.f32 %v3024, %v3024
        %v3057 = vmul.f32 %v3025, %v3025
        %v3058 = vmul.f32 %v3026, %v3026
        %v3059 = vmul.f32 %v3027, %v3027
        %v3060 = vmul.f32 %v3028, %v3028
        %v3061 = vmul.f32 %v3029, %v3029
        %v3062 = vmul.f32 %v3030, %v3030
        %v3063 = vmul.f32 %v3031, %v3031
        %v3064 = vmul.f32 %v3032, %v3032
        %v3065 = vmul.f32 %v3033, %v3033
        %v3066 = vmul.f32 %v3034, %v3034
        %v3067 = vmul.f32 %v3035, %v3035
        %v3068 = vmul.f32 %v3036, %v3036
        %v3069 = vmul.f32 %v3037, %v3037
        %v3070 = vadd.f32 %v3038, %v3039
        %v3071 = vadd.f32 %v3070, %v3040
        %v3072 = vadd.f32 %v3071, %v3041
        %v3073 = vadd.f32 %v3072, %v3042
        %v3074 = vadd.f32 %v3073, %v3043
        %v3075 = vadd.f32 %v3074, %v3044
        %v3076 = vadd.f32 %v3075, %v3045
        %v3077 = vadd.f32 %v3076, %v3046
        %v3078 = vadd.f32 %v3077, %v3047
        %v3079 = vadd.f32 %v3078, %v3048
        %v3080 = vadd.f32 %v3079, %v3049
        %v3081 = vadd.f32 %v3080, %v3050
        %v3082 = vadd.f32 %v3081, %v3051
        %v3083 = vadd.f32 %v3082, %v3052
        %v3084 = vadd.f32 %v3083, %v3053
        %v3085 = vadd.f32 %v3084, %v3054
        %v3086 = vadd.f32 %v3085, %v3055
        %v3087 = vadd.f32 %v3086, %v3056
        %v3088 = vadd.f32 %v3087, %v3057
        %v3089 = vadd.f32 %v3088, %v3058
        %v3090 = vadd.f32 %v3089, %v3059
        %v3091 = vadd.f32 %v3090, %v3060
        %v3092 = vadd.f32 %v3091, %v3061
        %v3093 = vadd.f32 %v3092, %v3062
        %v3094 = vadd.f32 %v3093, %v3063
        %v3095 = vadd.f32 %v3094, %v3064
        %v3096 = vadd.f32 %v3095, %v3065
        %v3097 = vadd.f32 %v3096, %v3066
        %v3098 = vadd.f32 %v3097, %v3067
        %v3099 = vadd.f32 %v3098, %v3068
        %v3100 = vadd.f32 %v3099, %v3069
        %3101 = vadd.xlane.f32.xlu0 %v3100
        %v3102 = vpop.xlane.xlu0 %3101
        %v3103 = vrot.slane %v3102, 4
        %v3104 = vadd.f32 %v3102, %v3103
        %v3105 = vrot.slane %v3104, 2
        %v3106 = vadd.f32 %v3104, %v3105
        %v3107 = vrot.slane %v3106, 1
        %v3108 = vadd.f32 %v3106, %v3107
        %s3109 = vtos %v3108
        %v3110 = vand.u32 2147483647, %v1230
        %v3111 = vand.u32 2147483647, %v1231
        %v3112 = vand.u32 2147483647, %v1232
        %v3113 = vand.u32 2147483647, %v1233
        %v3114 = vand.u32 2147483647, %v1234
        %v3115 = vand.u32 2147483647, %v1235
        %v3116 = vand.u32 2147483647, %v1236
        %v3117 = vand.u32 2147483647, %v1237
        %v3118 = vand.u32 2147483647, %v1238
        %v3119 = vand.u32 2147483647, %v1239
        %v3120 = vand.u32 2147483647, %v1240
        %v3121 = vand.u32 2147483647, %v1241
        %v3122 = vand.u32 2147483647, %v1242
        %v3123 = vand.u32 2147483647, %v1243
        %v3124 = vand.u32 2147483647, %v1244
        %v3125 = vand.u32 2147483647, %v1245
        %v3126 = vand.u32 2147483647, %v1246
        %v3127 = vand.u32 2147483647, %v1247
        %v3128 = vand.u32 2147483647, %v1248
        %v3129 = vand.u32 2147483647, %v1249
        %v3130 = vand.u32 2147483647, %v1250
        %v3131 = vand.u32 2147483647, %v1251
        %v3132 = vand.u32 2147483647, %v1252
        %v3133 = vand.u32 2147483647, %v1253
        %v3134 = vand.u32 2147483647, %v1254
        %v3135 = vand.u32 2147483647, %v1255
        %v3136 = vand.u32 2147483647, %v1256
        %v3137 = vand.u32 2147483647, %v1257
        %v3138 = vand.u32 2147483647, %v1258
        %v3139 = vand.u32 2147483647, %v1259
        %v3140 = vand.u32 2147483647, %v1260
        %v3141 = vand.u32 2147483647, %v1261
        %v3142 = vand.u32 2147483647, %v1262
        %v3143 = vand.u32 2147483647, %v1263
        %v3144 = vand.u32 2147483647, %v1264
        %v3145 = vand.u32 2147483647, %v1265
        %v3146 = vand.u32 2147483647, %v1266
        %v3147 = vand.u32 2147483647, %v1267
        %v3148 = vand.u32 2147483647, %v1268
        %v3149 = vand.u32 2147483647, %v1269
        %v3150 = vand.u32 2147483647, %v1270
        %v3151 = vand.u32 2147483647, %v1271
        %v3152 = vand.u32 2147483647, %v1272
        %v3153 = vand.u32 2147483647, %v1273
        %v3154 = vand.u32 2147483647, %v1274
        %v3155 = vand.u32 2147483647, %v1275
        %v3156 = vand.u32 2147483647, %v1276
        %v3157 = vand.u32 2147483647, %v1277
        %v3158 = vand.u32 2147483647, %v1278
        %v3159 = vand.u32 2147483647, %v1279
        %v3160 = vand.u32 2147483647, %v1280
        %v3161 = vand.u32 2147483647, %v1281
        %v3162 = vand.u32 2147483647, %v1282
        %v3163 = vand.u32 2147483647, %v1283
        %v3164 = vand.u32 2147483647, %v1284
        %v3165 = vand.u32 2147483647, %v1285
        %v3166 = vand.u32 2147483647, %v1286
        %v3167 = vand.u32 2147483647, %v1287
        %v3168 = vand.u32 2147483647, %v1288
        %v3169 = vand.u32 2147483647, %v1289
        %v3170 = vand.u32 2147483647, %v1290
        %v3171 = vand.u32 2147483647, %v1291
        %v3172 = vand.u32 2147483647, %v1292
        %v3173 = vand.u32 2147483647, %v1293
        %v3174 = vand.u32 2147483647, %v1294
        %v3175 = vand.u32 2147483647, %v1295
        %v3176 = vand.u32 2147483647, %v1296
        %v3177 = vand.u32 2147483647, %v1297
        %v3178 = vand.u32 2147483647, %v1298
        %v3179 = vand.u32 2147483647, %v1299
        %v3180 = vand.u32 2147483647, %v1300
        %v3181 = vand.u32 2147483647, %v1301
        %v3182 = vand.u32 2147483647, %v1302
        %v3183 = vand.u32 2147483647, %v1303
        %v3184 = vand.u32 2147483647, %v1304
        %v3185 = vand.u32 2147483647, %v1305
        %v3186 = vand.u32 2147483647, %v1306
        %v3187 = vand.u32 2147483647, %v1307
        %v3188 = vand.u32 2147483647, %v1308
        %v3189 = vand.u32 2147483647, %v1309
        %v3190 = vand.u32 2147483647, %v1310
        %v3191 = vand.u32 2147483647, %v1311
        %v3192 = vand.u32 2147483647, %v1312
        %v3193 = vand.u32 2147483647, %v1313
        %v3194 = vand.u32 2147483647, %v1314
        %v3195 = vand.u32 2147483647, %v1315
        %v3196 = vand.u32 2147483647, %v1316
        %v3197 = vand.u32 2147483647, %v1317
        %v3198 = vand.u32 2147483647, %v1318
        %v3199 = vand.u32 2147483647, %v1319
        %v3200 = vand.u32 2147483647, %v1320
        %v3201 = vand.u32 2147483647, %v1321
        %v3202 = vand.u32 2147483647, %v1322
        %v3203 = vand.u32 2147483647, %v1323
        %v3204 = vand.u32 2147483647, %v1324
        %v3205 = vand.u32 2147483647, %v1325
        %v3206 = vand.u32 2147483647, %v1326
        %v3207 = vand.u32 2147483647, %v1327
        %v3208 = vand.u32 2147483647, %v1328
        %v3209 = vand.u32 2147483647, %v1329
        %v3210 = vand.u32 2147483647, %v1330
        %v3211 = vand.u32 2147483647, %v1331
        %v3212 = vand.u32 2147483647, %v1332
        %v3213 = vand.u32 2147483647, %v1333
        %v3214 = vand.u32 2147483647, %v1334
        %v3215 = vand.u32 2147483647, %v1335
        %v3216 = vand.u32 2147483647, %v1336
        %v3217 = vand.u32 2147483647, %v1337
        %v3218 = vand.u32 2147483647, %v1338
        %v3219 = vand.u32 2147483647, %v1339
        %v3220 = vand.u32 2147483647, %v1340
        %v3221 = vand.u32 2147483647, %v1341
        %v3222 = vand.u32 2147483647, %v1342
        %v3223 = vand.u32 2147483647, %v1343
        %v3224 = vand.u32 2147483647, %v1344
        %v3225 = vand.u32 2147483647, %v1345
        %v3226 = vand.u32 2147483647, %v1346
        %v3227 = vand.u32 2147483647, %v1347
        %v3228 = vand.u32 2147483647, %v1348
        %v3229 = vand.u32 2147483647, %v1349
        %v3230 = vand.u32 2147483647, %v1350
        %v3231 = vand.u32 2147483647, %v1351
        %v3232 = vand.u32 2147483647, %v1352
        %v3233 = vand.u32 2147483647, %v1353
        %v3234 = vand.u32 2147483647, %v1354
        %v3235 = vand.u32 2147483647, %v1355
        %v3236 = vand.u32 2147483647, %v1356
        %v3237 = vand.u32 2147483647, %v1357
        %v3238 = vadd.f32 %v3110, %v3111
        %v3239 = vadd.f32 %v3238, %v3112
        %v3240 = vadd.f32 %v3239, %v3113
        %v3241 = vadd.f32 %v3240, %v3114
        %v3242 = vadd.f32 %v3241, %v3115
        %v3243 = vadd.f32 %v3242, %v3116
        %v3244 = vadd.f32 %v3243, %v3117
        %v3245 = vadd.f32 %v3244, %v3118
        %v3246 = vadd.f32 %v3245, %v3119
        %v3247 = vadd.f32 %v3246, %v3120
        %v3248 = vadd.f32 %v3247, %v3121
        %v3249 = vadd.f32 %v3248, %v3122
        %v3250 = vadd.f32 %v3249, %v3123
        %v3251 = vadd.f32 %v3250, %v3124
        %v3252 = vadd.f32 %v3251, %v3125
        %v3253 = vadd.f32 %v3252, %v3126
        %v3254 = vadd.f32 %v3253, %v3127
        %v3255 = vadd.f32 %v3254, %v3128
        %v3256 = vadd.f32 %v3255, %v3129
        %v3257 = vadd.f32 %v3256, %v3130
        %v3258 = vadd.f32 %v3257, %v3131
        %v3259 = vadd.f32 %v3258, %v3132
        %v3260 = vadd.f32 %v3259, %v3133
        %v3261 = vadd.f32 %v3260, %v3134
        %v3262 = vadd.f32 %v3261, %v3135
        %v3263 = vadd.f32 %v3262, %v3136
        %v3264 = vadd.f32 %v3263, %v3137
        %v3265 = vadd.f32 %v3264, %v3138
        %v3266 = vadd.f32 %v3265, %v3139
        %v3267 = vadd.f32 %v3266, %v3140
        %v3268 = vadd.f32 %v3267, %v3141
        %v3269 = vadd.f32 %v3268, %v3142
        %v3270 = vadd.f32 %v3269, %v3143
        %v3271 = vadd.f32 %v3270, %v3144
        %v3272 = vadd.f32 %v3271, %v3145
        %v3273 = vadd.f32 %v3272, %v3146
        %v3274 = vadd.f32 %v3273, %v3147
        %v3275 = vadd.f32 %v3274, %v3148
        %v3276 = vadd.f32 %v3275, %v3149
        %v3277 = vadd.f32 %v3276, %v3150
        %v3278 = vadd.f32 %v3277, %v3151
        %v3279 = vadd.f32 %v3278, %v3152
        %v3280 = vadd.f32 %v3279, %v3153
        %v3281 = vadd.f32 %v3280, %v3154
        %v3282 = vadd.f32 %v3281, %v3155
        %v3283 = vadd.f32 %v3282, %v3156
        %v3284 = vadd.f32 %v3283, %v3157
        %v3285 = vadd.f32 %v3284, %v3158
        %v3286 = vadd.f32 %v3285, %v3159
        %v3287 = vadd.f32 %v3286, %v3160
        %v3288 = vadd.f32 %v3287, %v3161
        %v3289 = vadd.f32 %v3288, %v3162
        %v3290 = vadd.f32 %v3289, %v3163
        %v3291 = vadd.f32 %v3290, %v3164
        %v3292 = vadd.f32 %v3291, %v3165
        %v3293 = vadd.f32 %v3292, %v3166
        %v3294 = vadd.f32 %v3293, %v3167
        %v3295 = vadd.f32 %v3294, %v3168
        %v3296 = vadd.f32 %v3295, %v3169
        %v3297 = vadd.f32 %v3296, %v3170
        %v3298 = vadd.f32 %v3297, %v3171
        %v3299 = vadd.f32 %v3298, %v3172
        %v3300 = vadd.f32 %v3299, %v3173
        %v3301 = vadd.f32 %v3300, %v3174
        %v3302 = vadd.f32 %v3301, %v3175
        %v3303 = vadd.f32 %v3302, %v3176
        %v3304 = vadd.f32 %v3303, %v3177
        %v3305 = vadd.f32 %v3304, %v3178
        %v3306 = vadd.f32 %v3305, %v3179
        %v3307 = vadd.f32 %v3306, %v3180
        %v3308 = vadd.f32 %v3307, %v3181
        %v3309 = vadd.f32 %v3308, %v3182
        %v3310 = vadd.f32 %v3309, %v3183
        %v3311 = vadd.f32 %v3310, %v3184
        %v3312 = vadd.f32 %v3311, %v3185
        %v3313 = vadd.f32 %v3312, %v3186
        %v3314 = vadd.f32 %v3313, %v3187
        %v3315 = vadd.f32 %v3314, %v3188
        %v3316 = vadd.f32 %v3315, %v3189
        %v3317 = vadd.f32 %v3316, %v3190
        %v3318 = vadd.f32 %v3317, %v3191
        %v3319 = vadd.f32 %v3318, %v3192
        %v3320 = vadd.f32 %v3319, %v3193
        %v3321 = vadd.f32 %v3320, %v3194
        %v3322 = vadd.f32 %v3321, %v3195
        %v3323 = vadd.f32 %v3322, %v3196
        %v3324 = vadd.f32 %v3323, %v3197
        %v3325 = vadd.f32 %v3324, %v3198
        %v3326 = vadd.f32 %v3325, %v3199
        %v3327 = vadd.f32 %v3326, %v3200
        %v3328 = vadd.f32 %v3327, %v3201
        %v3329 = vadd.f32 %v3328, %v3202
        %v3330 = vadd.f32 %v3329, %v3203
        %v3331 = vadd.f32 %v3330, %v3204
        %v3332 = vadd.f32 %v3331, %v3205
        %v3333 = vadd.f32 %v3332, %v3206
        %v3334 = vadd.f32 %v3333, %v3207
        %v3335 = vadd.f32 %v3334, %v3208
        %v3336 = vadd.f32 %v3335, %v3209
        %v3337 = vadd.f32 %v3336, %v3210
        %v3338 = vadd.f32 %v3337, %v3211
        %v3339 = vadd.f32 %v3338, %v3212
        %v3340 = vadd.f32 %v3339, %v3213
        %v3341 = vadd.f32 %v3340, %v3214
        %v3342 = vadd.f32 %v3341, %v3215
        %v3343 = vadd.f32 %v3342, %v3216
        %v3344 = vadd.f32 %v3343, %v3217
        %v3345 = vadd.f32 %v3344, %v3218
        %v3346 = vadd.f32 %v3345, %v3219
        %v3347 = vadd.f32 %v3346, %v3220
        %v3348 = vadd.f32 %v3347, %v3221
        %v3349 = vadd.f32 %v3348, %v3222
        %v3350 = vadd.f32 %v3349, %v3223
        %v3351 = vadd.f32 %v3350, %v3224
        %v3352 = vadd.f32 %v3351, %v3225
        %v3353 = vadd.f32 %v3352, %v3226
        %v3354 = vadd.f32 %v3353, %v3227
        %v3355 = vadd.f32 %v3354, %v3228
        %v3356 = vadd.f32 %v3355, %v3229
        %v3357 = vadd.f32 %v3356, %v3230
        %v3358 = vadd.f32 %v3357, %v3231
        %v3359 = vadd.f32 %v3358, %v3232
        %v3360 = vadd.f32 %v3359, %v3233
        %v3361 = vadd.f32 %v3360, %v3234
        %v3362 = vadd.f32 %v3361, %v3235
        %v3363 = vadd.f32 %v3362, %v3236
        %v3364 = vadd.f32 %v3363, %v3237
        %3365 = vadd.xlane.f32.xlu0 %v3364
        %v3366 = vpop.xlane.xlu0 %3365
        %v3367 = vrot.slane %v3366, 4
        %v3368 = vadd.f32 %v3366, %v3367
        %v3369 = vrot.slane %v3368, 2
        %v3370 = vadd.f32 %v3368, %v3369
        %v3371 = vrot.slane %v3370, 1
        %v3372 = vadd.f32 %v3370, %v3371
        %s3373 = vtos %v3372
        %v3374 = vand.u32 2147483647, %v1879
        %v3375 = vand.u32 2147483647, %v1880
        %v3376 = vand.u32 2147483647, %v1881
        %v3377 = vand.u32 2147483647, %v1882
        %v3378 = vand.u32 2147483647, %v1883
        %v3379 = vand.u32 2147483647, %v1884
        %v3380 = vand.u32 2147483647, %v1885
        %v3381 = vand.u32 2147483647, %v1886
        %v3382 = vand.u32 2147483647, %v1887
        %v3383 = vand.u32 2147483647, %v1888
        %v3384 = vand.u32 2147483647, %v1889
        %v3385 = vand.u32 2147483647, %v1890
        %v3386 = vand.u32 2147483647, %v1891
        %v3387 = vand.u32 2147483647, %v1892
        %v3388 = vand.u32 2147483647, %v1893
        %v3389 = vand.u32 2147483647, %v1894
        %v3390 = vand.u32 2147483647, %v1895
        %v3391 = vand.u32 2147483647, %v1896
        %v3392 = vand.u32 2147483647, %v1897
        %v3393 = vand.u32 2147483647, %v1898
        %v3394 = vand.u32 2147483647, %v1899
        %v3395 = vand.u32 2147483647, %v1900
        %v3396 = vand.u32 2147483647, %v1901
        %v3397 = vand.u32 2147483647, %v1902
        %v3398 = vand.u32 2147483647, %v1903
        %v3399 = vand.u32 2147483647, %v1904
        %v3400 = vand.u32 2147483647, %v1905
        %v3401 = vand.u32 2147483647, %v1906
        %v3402 = vand.u32 2147483647, %v1907
        %v3403 = vand.u32 2147483647, %v1908
        %v3404 = vand.u32 2147483647, %v1909
        %v3405 = vand.u32 2147483647, %v1910
        %v3406 = vadd.f32 %v3374, %v3375
        %v3407 = vadd.f32 %v3406, %v3376
        %v3408 = vadd.f32 %v3407, %v3377
        %v3409 = vadd.f32 %v3408, %v3378
        %v3410 = vadd.f32 %v3409, %v3379
        %v3411 = vadd.f32 %v3410, %v3380
        %v3412 = vadd.f32 %v3411, %v3381
        %v3413 = vadd.f32 %v3412, %v3382
        %v3414 = vadd.f32 %v3413, %v3383
        %v3415 = vadd.f32 %v3414, %v3384
        %v3416 = vadd.f32 %v3415, %v3385
        %v3417 = vadd.f32 %v3416, %v3386
        %v3418 = vadd.f32 %v3417, %v3387
        %v3419 = vadd.f32 %v3418, %v3388
        %v3420 = vadd.f32 %v3419, %v3389
        %v3421 = vadd.f32 %v3420, %v3390
        %v3422 = vadd.f32 %v3421, %v3391
        %v3423 = vadd.f32 %v3422, %v3392
        %v3424 = vadd.f32 %v3423, %v3393
        %v3425 = vadd.f32 %v3424, %v3394
        %v3426 = vadd.f32 %v3425, %v3395
        %v3427 = vadd.f32 %v3426, %v3396
        %v3428 = vadd.f32 %v3427, %v3397
        %v3429 = vadd.f32 %v3428, %v3398
        %v3430 = vadd.f32 %v3429, %v3399
        %v3431 = vadd.f32 %v3430, %v3400
        %v3432 = vadd.f32 %v3431, %v3401
        %v3433 = vadd.f32 %v3432, %v3402
        %v3434 = vadd.f32 %v3433, %v3403
        %v3435 = vadd.f32 %v3434, %v3404
        %v3436 = vadd.f32 %v3435, %v3405
        %3437 = vadd.xlane.f32.xlu0 %v3436
        %v3438 = vpop.xlane.xlu0 %3437
        %v3439 = vrot.slane %v3438, 4
        %v3440 = vadd.f32 %v3438, %v3439
        %v3441 = vrot.slane %v3440, 2
        %v3442 = vadd.f32 %v3440, %v3441
        %v3443 = vrot.slane %v3442, 1
        %v3444 = vadd.f32 %v3442, %v3443
        %s3445 = vtos %v3444
        %vm3446 = vcmp.gt.f32.partialorder %v1230, 0.0
        %vm3447 = vcmp.gt.f32.partialorder %v1231, 0.0
        %vm3448 = vcmp.gt.f32.partialorder %v1232, 0.0
        %vm3449 = vcmp.gt.f32.partialorder %v1233, 0.0
        %vm3450 = vcmp.gt.f32.partialorder %v1234, 0.0
        %vm3451 = vcmp.gt.f32.partialorder %v1235, 0.0
        %vm3452 = vcmp.gt.f32.partialorder %v1236, 0.0
        %vm3453 = vcmp.gt.f32.partialorder %v1237, 0.0
        %vm3454 = vcmp.gt.f32.partialorder %v1238, 0.0
        %vm3455 = vcmp.gt.f32.partialorder %v1239, 0.0
        %vm3456 = vcmp.gt.f32.partialorder %v1240, 0.0
        %vm3457 = vcmp.gt.f32.partialorder %v1241, 0.0
        %vm3458 = vcmp.gt.f32.partialorder %v1242, 0.0
        %vm3459 = vcmp.gt.f32.partialorder %v1243, 0.0
        %vm3460 = vcmp.gt.f32.partialorder %v1244, 0.0
        %vm3461 = vcmp.gt.f32.partialorder %v1245, 0.0
        %vm3462 = vcmp.gt.f32.partialorder %v1246, 0.0
        %vm3463 = vcmp.gt.f32.partialorder %v1247, 0.0
        %vm3464 = vcmp.gt.f32.partialorder %v1248, 0.0
        %vm3465 = vcmp.gt.f32.partialorder %v1249, 0.0
        %vm3466 = vcmp.gt.f32.partialorder %v1250, 0.0
        %vm3467 = vcmp.gt.f32.partialorder %v1251, 0.0
        %vm3468 = vcmp.gt.f32.partialorder %v1252, 0.0
        %vm3469 = vcmp.gt.f32.partialorder %v1253, 0.0
        %vm3470 = vcmp.gt.f32.partialorder %v1254, 0.0
        %vm3471 = vcmp.gt.f32.partialorder %v1255, 0.0
        %vm3472 = vcmp.gt.f32.partialorder %v1256, 0.0
        %vm3473 = vcmp.gt.f32.partialorder %v1257, 0.0
        %vm3474 = vcmp.gt.f32.partialorder %v1258, 0.0
        %vm3475 = vcmp.gt.f32.partialorder %v1259, 0.0
        %vm3476 = vcmp.gt.f32.partialorder %v1260, 0.0
        %vm3477 = vcmp.gt.f32.partialorder %v1261, 0.0
        %vm3478 = vcmp.gt.f32.partialorder %v1262, 0.0
        %vm3479 = vcmp.gt.f32.partialorder %v1263, 0.0
        %vm3480 = vcmp.gt.f32.partialorder %v1264, 0.0
        %vm3481 = vcmp.gt.f32.partialorder %v1265, 0.0
        %vm3482 = vcmp.gt.f32.partialorder %v1266, 0.0
        %vm3483 = vcmp.gt.f32.partialorder %v1267, 0.0
        %vm3484 = vcmp.gt.f32.partialorder %v1268, 0.0
        %vm3485 = vcmp.gt.f32.partialorder %v1269, 0.0
        %vm3486 = vcmp.gt.f32.partialorder %v1270, 0.0
        %vm3487 = vcmp.gt.f32.partialorder %v1271, 0.0
        %vm3488 = vcmp.gt.f32.partialorder %v1272, 0.0
        %vm3489 = vcmp.gt.f32.partialorder %v1273, 0.0
        %vm3490 = vcmp.gt.f32.partialorder %v1274, 0.0
        %vm3491 = vcmp.gt.f32.partialorder %v1275, 0.0
        %vm3492 = vcmp.gt.f32.partialorder %v1276, 0.0
        %vm3493 = vcmp.gt.f32.partialorder %v1277, 0.0
        %vm3494 = vcmp.gt.f32.partialorder %v1278, 0.0
        %vm3495 = vcmp.gt.f32.partialorder %v1279, 0.0
        %vm3496 = vcmp.gt.f32.partialorder %v1280, 0.0
        %vm3497 = vcmp.gt.f32.partialorder %v1281, 0.0
        %vm3498 = vcmp.gt.f32.partialorder %v1282, 0.0
        %vm3499 = vcmp.gt.f32.partialorder %v1283, 0.0
        %vm3500 = vcmp.gt.f32.partialorder %v1284, 0.0
        %vm3501 = vcmp.gt.f32.partialorder %v1285, 0.0
        %vm3502 = vcmp.gt.f32.partialorder %v1286, 0.0
        %vm3503 = vcmp.gt.f32.partialorder %v1287, 0.0
        %vm3504 = vcmp.gt.f32.partialorder %v1288, 0.0
        %vm3505 = vcmp.gt.f32.partialorder %v1289, 0.0
        %vm3506 = vcmp.gt.f32.partialorder %v1290, 0.0
        %vm3507 = vcmp.gt.f32.partialorder %v1291, 0.0
        %vm3508 = vcmp.gt.f32.partialorder %v1292, 0.0
        %vm3509 = vcmp.gt.f32.partialorder %v1293, 0.0
        %vm3510 = vcmp.gt.f32.partialorder %v1294, 0.0
        %vm3511 = vcmp.gt.f32.partialorder %v1295, 0.0
        %vm3512 = vcmp.gt.f32.partialorder %v1296, 0.0
        %vm3513 = vcmp.gt.f32.partialorder %v1297, 0.0
        %vm3514 = vcmp.gt.f32.partialorder %v1298, 0.0
        %vm3515 = vcmp.gt.f32.partialorder %v1299, 0.0
        %vm3516 = vcmp.gt.f32.partialorder %v1300, 0.0
        %vm3517 = vcmp.gt.f32.partialorder %v1301, 0.0
        %vm3518 = vcmp.gt.f32.partialorder %v1302, 0.0
        %vm3519 = vcmp.gt.f32.partialorder %v1303, 0.0
        %vm3520 = vcmp.gt.f32.partialorder %v1304, 0.0
        %vm3521 = vcmp.gt.f32.partialorder %v1305, 0.0
        %vm3522 = vcmp.gt.f32.partialorder %v1306, 0.0
        %vm3523 = vcmp.gt.f32.partialorder %v1307, 0.0
        %vm3524 = vcmp.gt.f32.partialorder %v1308, 0.0
        %vm3525 = vcmp.gt.f32.partialorder %v1309, 0.0
        %vm3526 = vcmp.gt.f32.partialorder %v1310, 0.0
        %vm3527 = vcmp.gt.f32.partialorder %v1311, 0.0
        %vm3528 = vcmp.gt.f32.partialorder %v1312, 0.0
        %vm3529 = vcmp.gt.f32.partialorder %v1313, 0.0
        %vm3530 = vcmp.gt.f32.partialorder %v1314, 0.0
        %vm3531 = vcmp.gt.f32.partialorder %v1315, 0.0
        %vm3532 = vcmp.gt.f32.partialorder %v1316, 0.0
        %vm3533 = vcmp.gt.f32.partialorder %v1317, 0.0
        %vm3534 = vcmp.gt.f32.partialorder %v1318, 0.0
        %vm3535 = vcmp.gt.f32.partialorder %v1319, 0.0
        %vm3536 = vcmp.gt.f32.partialorder %v1320, 0.0
        %vm3537 = vcmp.gt.f32.partialorder %v1321, 0.0
        %vm3538 = vcmp.gt.f32.partialorder %v1322, 0.0
        %vm3539 = vcmp.gt.f32.partialorder %v1323, 0.0
        %vm3540 = vcmp.gt.f32.partialorder %v1324, 0.0
        %vm3541 = vcmp.gt.f32.partialorder %v1325, 0.0
        %vm3542 = vcmp.gt.f32.partialorder %v1326, 0.0
        %vm3543 = vcmp.gt.f32.partialorder %v1327, 0.0
        %vm3544 = vcmp.gt.f32.partialorder %v1328, 0.0
        %vm3545 = vcmp.gt.f32.partialorder %v1329, 0.0
        %vm3546 = vcmp.gt.f32.partialorder %v1330, 0.0
        %vm3547 = vcmp.gt.f32.partialorder %v1331, 0.0
        %vm3548 = vcmp.gt.f32.partialorder %v1332, 0.0
        %vm3549 = vcmp.gt.f32.partialorder %v1333, 0.0
        %vm3550 = vcmp.gt.f32.partialorder %v1334, 0.0
        %vm3551 = vcmp.gt.f32.partialorder %v1335, 0.0
        %vm3552 = vcmp.gt.f32.partialorder %v1336, 0.0
        %vm3553 = vcmp.gt.f32.partialorder %v1337, 0.0
        %vm3554 = vcmp.gt.f32.partialorder %v1338, 0.0
        %vm3555 = vcmp.gt.f32.partialorder %v1339, 0.0
        %vm3556 = vcmp.gt.f32.partialorder %v1340, 0.0
        %vm3557 = vcmp.gt.f32.partialorder %v1341, 0.0
        %vm3558 = vcmp.gt.f32.partialorder %v1342, 0.0
        %vm3559 = vcmp.gt.f32.partialorder %v1343, 0.0
        %vm3560 = vcmp.gt.f32.partialorder %v1344, 0.0
        %vm3561 = vcmp.gt.f32.partialorder %v1345, 0.0
        %vm3562 = vcmp.gt.f32.partialorder %v1346, 0.0
        %vm3563 = vcmp.gt.f32.partialorder %v1347, 0.0
        %vm3564 = vcmp.gt.f32.partialorder %v1348, 0.0
        %vm3565 = vcmp.gt.f32.partialorder %v1349, 0.0
        %vm3566 = vcmp.gt.f32.partialorder %v1350, 0.0
        %vm3567 = vcmp.gt.f32.partialorder %v1351, 0.0
        %vm3568 = vcmp.gt.f32.partialorder %v1352, 0.0
        %vm3569 = vcmp.gt.f32.partialorder %v1353, 0.0
        %vm3570 = vcmp.gt.f32.partialorder %v1354, 0.0
        %vm3571 = vcmp.gt.f32.partialorder %v1355, 0.0
        %vm3572 = vcmp.gt.f32.partialorder %v1356, 0.0
        %vm3573 = vcmp.gt.f32.partialorder %v1357, 0.0
        %v3574 = vsel %vm3446, 1, 0
        %v3575 = vsel %vm3447, 1, 0
        %v3576 = vsel %vm3448, 1, 0
        %v3577 = vsel %vm3449, 1, 0
        %v3578 = vsel %vm3450, 1, 0
        %v3579 = vsel %vm3451, 1, 0
        %v3580 = vsel %vm3452, 1, 0
        %v3581 = vsel %vm3453, 1, 0
        %v3582 = vsel %vm3454, 1, 0
        %v3583 = vsel %vm3455, 1, 0
        %v3584 = vsel %vm3456, 1, 0
        %v3585 = vsel %vm3457, 1, 0
        %v3586 = vsel %vm3458, 1, 0
        %v3587 = vsel %vm3459, 1, 0
        %v3588 = vsel %vm3460, 1, 0
        %v3589 = vsel %vm3461, 1, 0
        %v3590 = vsel %vm3462, 1, 0
        %v3591 = vsel %vm3463, 1, 0
        %v3592 = vsel %vm3464, 1, 0
        %v3593 = vsel %vm3465, 1, 0
        %v3594 = vsel %vm3466, 1, 0
        %v3595 = vsel %vm3467, 1, 0
        %v3596 = vsel %vm3468, 1, 0
        %v3597 = vsel %vm3469, 1, 0
        %v3598 = vsel %vm3470, 1, 0
        %v3599 = vsel %vm3471, 1, 0
        %v3600 = vsel %vm3472, 1, 0
        %v3601 = vsel %vm3473, 1, 0
        %v3602 = vsel %vm3474, 1, 0
        %v3603 = vsel %vm3475, 1, 0
        %v3604 = vsel %vm3476, 1, 0
        %v3605 = vsel %vm3477, 1, 0
        %v3606 = vsel %vm3478, 1, 0
        %v3607 = vsel %vm3479, 1, 0
        %v3608 = vsel %vm3480, 1, 0
        %v3609 = vsel %vm3481, 1, 0
        %v3610 = vsel %vm3482, 1, 0
        %v3611 = vsel %vm3483, 1, 0
        %v3612 = vsel %vm3484, 1, 0
        %v3613 = vsel %vm3485, 1, 0
        %v3614 = vsel %vm3486, 1, 0
        %v3615 = vsel %vm3487, 1, 0
        %v3616 = vsel %vm3488, 1, 0
        %v3617 = vsel %vm3489, 1, 0
        %v3618 = vsel %vm3490, 1, 0
        %v3619 = vsel %vm3491, 1, 0
        %v3620 = vsel %vm3492, 1, 0
        %v3621 = vsel %vm3493, 1, 0
        %v3622 = vsel %vm3494, 1, 0
        %v3623 = vsel %vm3495, 1, 0
        %v3624 = vsel %vm3496, 1, 0
        %v3625 = vsel %vm3497, 1, 0
        %v3626 = vsel %vm3498, 1, 0
        %v3627 = vsel %vm3499, 1, 0
        %v3628 = vsel %vm3500, 1, 0
        %v3629 = vsel %vm3501, 1, 0
        %v3630 = vsel %vm3502, 1, 0
        %v3631 = vsel %vm3503, 1, 0
        %v3632 = vsel %vm3504, 1, 0
        %v3633 = vsel %vm3505, 1, 0
        %v3634 = vsel %vm3506, 1, 0
        %v3635 = vsel %vm3507, 1, 0
        %v3636 = vsel %vm3508, 1, 0
        %v3637 = vsel %vm3509, 1, 0
        %v3638 = vsel %vm3510, 1, 0
        %v3639 = vsel %vm3511, 1, 0
        %v3640 = vsel %vm3512, 1, 0
        %v3641 = vsel %vm3513, 1, 0
        %v3642 = vsel %vm3514, 1, 0
        %v3643 = vsel %vm3515, 1, 0
        %v3644 = vsel %vm3516, 1, 0
        %v3645 = vsel %vm3517, 1, 0
        %v3646 = vsel %vm3518, 1, 0
        %v3647 = vsel %vm3519, 1, 0
        %v3648 = vsel %vm3520, 1, 0
        %v3649 = vsel %vm3521, 1, 0
        %v3650 = vsel %vm3522, 1, 0
        %v3651 = vsel %vm3523, 1, 0
        %v3652 = vsel %vm3524, 1, 0
        %v3653 = vsel %vm3525, 1, 0
        %v3654 = vsel %vm3526, 1, 0
        %v3655 = vsel %vm3527, 1, 0
        %v3656 = vsel %vm3528, 1, 0
        %v3657 = vsel %vm3529, 1, 0
        %v3658 = vsel %vm3530, 1, 0
        %v3659 = vsel %vm3531, 1, 0
        %v3660 = vsel %vm3532, 1, 0
        %v3661 = vsel %vm3533, 1, 0
        %v3662 = vsel %vm3534, 1, 0
        %v3663 = vsel %vm3535, 1, 0
        %v3664 = vsel %vm3536, 1, 0
        %v3665 = vsel %vm3537, 1, 0
        %v3666 = vsel %vm3538, 1, 0
        %v3667 = vsel %vm3539, 1, 0
        %v3668 = vsel %vm3540, 1, 0
        %v3669 = vsel %vm3541, 1, 0
        %v3670 = vsel %vm3542, 1, 0
        %v3671 = vsel %vm3543, 1, 0
        %v3672 = vsel %vm3544, 1, 0
        %v3673 = vsel %vm3545, 1, 0
        %v3674 = vsel %vm3546, 1, 0
        %v3675 = vsel %vm3547, 1, 0
        %v3676 = vsel %vm3548, 1, 0
        %v3677 = vsel %vm3549, 1, 0
        %v3678 = vsel %vm3550, 1, 0
        %v3679 = vsel %vm3551, 1, 0
        %v3680 = vsel %vm3552, 1, 0
        %v3681 = vsel %vm3553, 1, 0
        %v3682 = vsel %vm3554, 1, 0
        %v3683 = vsel %vm3555, 1, 0
        %v3684 = vsel %vm3556, 1, 0
        %v3685 = vsel %vm3557, 1, 0
        %v3686 = vsel %vm3558, 1, 0
        %v3687 = vsel %vm3559, 1, 0
        %v3688 = vsel %vm3560, 1, 0
        %v3689 = vsel %vm3561, 1, 0
        %v3690 = vsel %vm3562, 1, 0
        %v3691 = vsel %vm3563, 1, 0
        %v3692 = vsel %vm3564, 1, 0
        %v3693 = vsel %vm3565, 1, 0
        %v3694 = vsel %vm3566, 1, 0
        %v3695 = vsel %vm3567, 1, 0
        %v3696 = vsel %vm3568, 1, 0
        %v3697 = vsel %vm3569, 1, 0
        %v3698 = vsel %vm3570, 1, 0
        %v3699 = vsel %vm3571, 1, 0
        %v3700 = vsel %vm3572, 1, 0
        %v3701 = vsel %vm3573, 1, 0
        %v3702 = vcvt.s32.f32 %v3574
        %v3703 = vcvt.s32.f32 %v3575
        %v3704 = vcvt.s32.f32 %v3576
        %v3705 = vcvt.s32.f32 %v3577
        %v3706 = vcvt.s32.f32 %v3578
        %v3707 = vcvt.s32.f32 %v3579
        %v3708 = vcvt.s32.f32 %v3580
        %v3709 = vcvt.s32.f32 %v3581
        %v3710 = vcvt.s32.f32 %v3582
        %v3711 = vcvt.s32.f32 %v3583
        %v3712 = vcvt.s32.f32 %v3584
        %v3713 = vcvt.s32.f32 %v3585
        %v3714 = vcvt.s32.f32 %v3586
        %v3715 = vcvt.s32.f32 %v3587
        %v3716 = vcvt.s32.f32 %v3588
        %v3717 = vcvt.s32.f32 %v3589
        %v3718 = vcvt.s32.f32 %v3590
        %v3719 = vcvt.s32.f32 %v3591
        %v3720 = vcvt.s32.f32 %v3592
        %v3721 = vcvt.s32.f32 %v3593
        %v3722 = vcvt.s32.f32 %v3594
        %v3723 = vcvt.s32.f32 %v3595
        %v3724 = vcvt.s32.f32 %v3596
        %v3725 = vcvt.s32.f32 %v3597
        %v3726 = vcvt.s32.f32 %v3598
        %v3727 = vcvt.s32.f32 %v3599
        %v3728 = vcvt.s32.f32 %v3600
        %v3729 = vcvt.s32.f32 %v3601
        %v3730 = vcvt.s32.f32 %v3602
        %v3731 = vcvt.s32.f32 %v3603
        %v3732 = vcvt.s32.f32 %v3604
        %v3733 = vcvt.s32.f32 %v3605
        %v3734 = vcvt.s32.f32 %v3606
        %v3735 = vcvt.s32.f32 %v3607
        %v3736 = vcvt.s32.f32 %v3608
        %v3737 = vcvt.s32.f32 %v3609
        %v3738 = vcvt.s32.f32 %v3610
        %v3739 = vcvt.s32.f32 %v3611
        %v3740 = vcvt.s32.f32 %v3612
        %v3741 = vcvt.s32.f32 %v3613
        %v3742 = vcvt.s32.f32 %v3614
        %v3743 = vcvt.s32.f32 %v3615
        %v3744 = vcvt.s32.f32 %v3616
        %v3745 = vcvt.s32.f32 %v3617
        %v3746 = vcvt.s32.f32 %v3618
        %v3747 = vcvt.s32.f32 %v3619
        %v3748 = vcvt.s32.f32 %v3620
        %v3749 = vcvt.s32.f32 %v3621
        %v3750 = vcvt.s32.f32 %v3622
        %v3751 = vcvt.s32.f32 %v3623
        %v3752 = vcvt.s32.f32 %v3624
        %v3753 = vcvt.s32.f32 %v3625
        %v3754 = vcvt.s32.f32 %v3626
        %v3755 = vcvt.s32.f32 %v3627
        %v3756 = vcvt.s32.f32 %v3628
        %v3757 = vcvt.s32.f32 %v3629
        %v3758 = vcvt.s32.f32 %v3630
        %v3759 = vcvt.s32.f32 %v3631
        %v3760 = vcvt.s32.f32 %v3632
        %v3761 = vcvt.s32.f32 %v3633
        %v3762 = vcvt.s32.f32 %v3634
        %v3763 = vcvt.s32.f32 %v3635
        %v3764 = vcvt.s32.f32 %v3636
        %v3765 = vcvt.s32.f32 %v3637
        %v3766 = vcvt.s32.f32 %v3638
        %v3767 = vcvt.s32.f32 %v3639
        %v3768 = vcvt.s32.f32 %v3640
        %v3769 = vcvt.s32.f32 %v3641
        %v3770 = vcvt.s32.f32 %v3642
        %v3771 = vcvt.s32.f32 %v3643
        %v3772 = vcvt.s32.f32 %v3644
        %v3773 = vcvt.s32.f32 %v3645
        %v3774 = vcvt.s32.f32 %v3646
        %v3775 = vcvt.s32.f32 %v3647
        %v3776 = vcvt.s32.f32 %v3648
        %v3777 = vcvt.s32.f32 %v3649
        %v3778 = vcvt.s32.f32 %v3650
        %v3779 = vcvt.s32.f32 %v3651
        %v3780 = vcvt.s32.f32 %v3652
        %v3781 = vcvt.s32.f32 %v3653
        %v3782 = vcvt.s32.f32 %v3654
        %v3783 = vcvt.s32.f32 %v3655
        %v3784 = vcvt.s32.f32 %v3656
        %v3785 = vcvt.s32.f32 %v3657
        %v3786 = vcvt.s32.f32 %v3658
        %v3787 = vcvt.s32.f32 %v3659
        %v3788 = vcvt.s32.f32 %v3660
        %v3789 = vcvt.s32.f32 %v3661
        %v3790 = vcvt.s32.f32 %v3662
        %v3791 = vcvt.s32.f32 %v3663
        %v3792 = vcvt.s32.f32 %v3664
        %v3793 = vcvt.s32.f32 %v3665
        %v3794 = vcvt.s32.f32 %v3666
        %v3795 = vcvt.s32.f32 %v3667
        %v3796 = vcvt.s32.f32 %v3668
        %v3797 = vcvt.s32.f32 %v3669
        %v3798 = vcvt.s32.f32 %v3670
        %v3799 = vcvt.s32.f32 %v3671
        %v3800 = vcvt.s32.f32 %v3672
        %v3801 = vcvt.s32.f32 %v3673
        %v3802 = vcvt.s32.f32 %v3674
        %v3803 = vcvt.s32.f32 %v3675
        %v3804 = vcvt.s32.f32 %v3676
        %v3805 = vcvt.s32.f32 %v3677
        %v3806 = vcvt.s32.f32 %v3678
        %v3807 = vcvt.s32.f32 %v3679
        %v3808 = vcvt.s32.f32 %v3680
        %v3809 = vcvt.s32.f32 %v3681
        %v3810 = vcvt.s32.f32 %v3682
        %v3811 = vcvt.s32.f32 %v3683
        %v3812 = vcvt.s32.f32 %v3684
        %v3813 = vcvt.s32.f32 %v3685
        %v3814 = vcvt.s32.f32 %v3686
        %v3815 = vcvt.s32.f32 %v3687
        %v3816 = vcvt.s32.f32 %v3688
        %v3817 = vcvt.s32.f32 %v3689
        %v3818 = vcvt.s32.f32 %v3690
        %v3819 = vcvt.s32.f32 %v3691
        %v3820 = vcvt.s32.f32 %v3692
        %v3821 = vcvt.s32.f32 %v3693
        %v3822 = vcvt.s32.f32 %v3694
        %v3823 = vcvt.s32.f32 %v3695
        %v3824 = vcvt.s32.f32 %v3696
        %v3825 = vcvt.s32.f32 %v3697
        %v3826 = vcvt.s32.f32 %v3698
        %v3827 = vcvt.s32.f32 %v3699
        %v3828 = vcvt.s32.f32 %v3700
        %v3829 = vcvt.s32.f32 %v3701
        %v3830 = vadd.f32 %v3702, %v3703
        %v3831 = vadd.f32 %v3830, %v3704
        %v3832 = vadd.f32 %v3831, %v3705
        %v3833 = vadd.f32 %v3832, %v3706
        %v3834 = vadd.f32 %v3833, %v3707
        %v3835 = vadd.f32 %v3834, %v3708
        %v3836 = vadd.f32 %v3835, %v3709
        %v3837 = vadd.f32 %v3836, %v3710
        %v3838 = vadd.f32 %v3837, %v3711
        %v3839 = vadd.f32 %v3838, %v3712
        %v3840 = vadd.f32 %v3839, %v3713
        %v3841 = vadd.f32 %v3840, %v3714
        %v3842 = vadd.f32 %v3841, %v3715
        %v3843 = vadd.f32 %v3842, %v3716
        %v3844 = vadd.f32 %v3843, %v3717
        %v3845 = vadd.f32 %v3844, %v3718
        %v3846 = vadd.f32 %v3845, %v3719
        %v3847 = vadd.f32 %v3846, %v3720
        %v3848 = vadd.f32 %v3847, %v3721
        %v3849 = vadd.f32 %v3848, %v3722
        %v3850 = vadd.f32 %v3849, %v3723
        %v3851 = vadd.f32 %v3850, %v3724
        %v3852 = vadd.f32 %v3851, %v3725
        %v3853 = vadd.f32 %v3852, %v3726
        %v3854 = vadd.f32 %v3853, %v3727
        %v3855 = vadd.f32 %v3854, %v3728
        %v3856 = vadd.f32 %v3855, %v3729
        %v3857 = vadd.f32 %v3856, %v3730
        %v3858 = vadd.f32 %v3857, %v3731
        %v3859 = vadd.f32 %v3858, %v3732
        %v3860 = vadd.f32 %v3859, %v3733
        %v3861 = vadd.f32 %v3860, %v3734
        %v3862 = vadd.f32 %v3861, %v3735
        %v3863 = vadd.f32 %v3862, %v3736
        %v3864 = vadd.f32 %v3863, %v3737
        %v3865 = vadd.f32 %v3864, %v3738
        %v3866 = vadd.f32 %v3865, %v3739
        %v3867 = vadd.f32 %v3866, %v3740
        %v3868 = vadd.f32 %v3867, %v3741
        %v3869 = vadd.f32 %v3868, %v3742
        %v3870 = vadd.f32 %v3869, %v3743
        %v3871 = vadd.f32 %v3870, %v3744
        %v3872 = vadd.f32 %v3871, %v3745
        %v3873 = vadd.f32 %v3872, %v3746
        %v3874 = vadd.f32 %v3873, %v3747
        %v3875 = vadd.f32 %v3874, %v3748
        %v3876 = vadd.f32 %v3875, %v3749
        %v3877 = vadd.f32 %v3876, %v3750
        %v3878 = vadd.f32 %v3877, %v3751
        %v3879 = vadd.f32 %v3878, %v3752
        %v3880 = vadd.f32 %v3879, %v3753
        %v3881 = vadd.f32 %v3880, %v3754
        %v3882 = vadd.f32 %v3881, %v3755
        %v3883 = vadd.f32 %v3882, %v3756
        %v3884 = vadd.f32 %v3883, %v3757
        %v3885 = vadd.f32 %v3884, %v3758
        %v3886 = vadd.f32 %v3885, %v3759
        %v3887 = vadd.f32 %v3886, %v3760
        %v3888 = vadd.f32 %v3887, %v3761
        %v3889 = vadd.f32 %v3888, %v3762
        %v3890 = vadd.f32 %v3889, %v3763
        %v3891 = vadd.f32 %v3890, %v3764
        %v3892 = vadd.f32 %v3891, %v3765
        %v3893 = vadd.f32 %v3892, %v3766
        %v3894 = vadd.f32 %v3893, %v3767
        %v3895 = vadd.f32 %v3894, %v3768
        %v3896 = vadd.f32 %v3895, %v3769
        %v3897 = vadd.f32 %v3896, %v3770
        %v3898 = vadd.f32 %v3897, %v3771
        %v3899 = vadd.f32 %v3898, %v3772
        %v3900 = vadd.f32 %v3899, %v3773
        %v3901 = vadd.f32 %v3900, %v3774
        %v3902 = vadd.f32 %v3901, %v3775
        %v3903 = vadd.f32 %v3902, %v3776
        %v3904 = vadd.f32 %v3903, %v3777
        %v3905 = vadd.f32 %v3904, %v3778
        %v3906 = vadd.f32 %v3905, %v3779
        %v3907 = vadd.f32 %v3906, %v3780
        %v3908 = vadd.f32 %v3907, %v3781
        %v3909 = vadd.f32 %v3908, %v3782
        %v3910 = vadd.f32 %v3909, %v3783
        %v3911 = vadd.f32 %v3910, %v3784
        %v3912 = vadd.f32 %v3911, %v3785
        %v3913 = vadd.f32 %v3912, %v3786
        %v3914 = vadd.f32 %v3913, %v3787
        %v3915 = vadd.f32 %v3914, %v3788
        %v3916 = vadd.f32 %v3915, %v3789
        %v3917 = vadd.f32 %v3916, %v3790
        %v3918 = vadd.f32 %v3917, %v3791
        %v3919 = vadd.f32 %v3918, %v3792
        %v3920 = vadd.f32 %v3919, %v3793
        %v3921 = vadd.f32 %v3920, %v3794
        %v3922 = vadd.f32 %v3921, %v3795
        %v3923 = vadd.f32 %v3922, %v3796
        %v3924 = vadd.f32 %v3923, %v3797
        %v3925 = vadd.f32 %v3924, %v3798
        %v3926 = vadd.f32 %v3925, %v3799
        %v3927 = vadd.f32 %v3926, %v3800
        %v3928 = vadd.f32 %v3927, %v3801
        %v3929 = vadd.f32 %v3928, %v3802
        %v3930 = vadd.f32 %v3929, %v3803
        %v3931 = vadd.f32 %v3930, %v3804
        %v3932 = vadd.f32 %v3931, %v3805
        %v3933 = vadd.f32 %v3932, %v3806
        %v3934 = vadd.f32 %v3933, %v3807
        %v3935 = vadd.f32 %v3934, %v3808
        %v3936 = vadd.f32 %v3935, %v3809
        %v3937 = vadd.f32 %v3936, %v3810
        %v3938 = vadd.f32 %v3937, %v3811
        %v3939 = vadd.f32 %v3938, %v3812
        %v3940 = vadd.f32 %v3939, %v3813
        %v3941 = vadd.f32 %v3940, %v3814
        %v3942 = vadd.f32 %v3941, %v3815
        %v3943 = vadd.f32 %v3942, %v3816
        %v3944 = vadd.f32 %v3943, %v3817
        %v3945 = vadd.f32 %v3944, %v3818
        %v3946 = vadd.f32 %v3945, %v3819
        %v3947 = vadd.f32 %v3946, %v3820
        %v3948 = vadd.f32 %v3947, %v3821
        %v3949 = vadd.f32 %v3948, %v3822
        %v3950 = vadd.f32 %v3949, %v3823
        %v3951 = vadd.f32 %v3950, %v3824
        %v3952 = vadd.f32 %v3951, %v3825
        %v3953 = vadd.f32 %v3952, %v3826
        %v3954 = vadd.f32 %v3953, %v3827
        %v3955 = vadd.f32 %v3954, %v3828
        %v3956 = vadd.f32 %v3955, %v3829
        %3957 = vadd.xlane.f32.xlu0 %v3956
        %v3958 = vpop.xlane.xlu0 %3957
        %v3959 = vrot.slane %v3958, 4
        %v3960 = vadd.f32 %v3958, %v3959
        %v3961 = vrot.slane %v3960, 2
        %v3962 = vadd.f32 %v3960, %v3961
        %v3963 = vrot.slane %v3962, 1
        %v3964 = vadd.f32 %v3962, %v3963
        %s3965 = vtos %v3964
        %vm3966 = vcmp.gt.f32.partialorder %v1879, 0.0
        %vm3967 = vcmp.gt.f32.partialorder %v1880, 0.0
        %vm3968 = vcmp.gt.f32.partialorder %v1881, 0.0
        %vm3969 = vcmp.gt.f32.partialorder %v1882, 0.0
        %vm3970 = vcmp.gt.f32.partialorder %v1883, 0.0
        %vm3971 = vcmp.gt.f32.partialorder %v1884, 0.0
        %vm3972 = vcmp.gt.f32.partialorder %v1885, 0.0
        %vm3973 = vcmp.gt.f32.partialorder %v1886, 0.0
        %vm3974 = vcmp.gt.f32.partialorder %v1887, 0.0
        %vm3975 = vcmp.gt.f32.partialorder %v1888, 0.0
        %vm3976 = vcmp.gt.f32.partialorder %v1889, 0.0
        %vm3977 = vcmp.gt.f32.partialorder %v1890, 0.0
        %vm3978 = vcmp.gt.f32.partialorder %v1891, 0.0
        %vm3979 = vcmp.gt.f32.partialorder %v1892, 0.0
        %vm3980 = vcmp.gt.f32.partialorder %v1893, 0.0
        %vm3981 = vcmp.gt.f32.partialorder %v1894, 0.0
        %vm3982 = vcmp.gt.f32.partialorder %v1895, 0.0
        %vm3983 = vcmp.gt.f32.partialorder %v1896, 0.0
        %vm3984 = vcmp.gt.f32.partialorder %v1897, 0.0
        %vm3985 = vcmp.gt.f32.partialorder %v1898, 0.0
        %vm3986 = vcmp.gt.f32.partialorder %v1899, 0.0
        %vm3987 = vcmp.gt.f32.partialorder %v1900, 0.0
        %vm3988 = vcmp.gt.f32.partialorder %v1901, 0.0
        %vm3989 = vcmp.gt.f32.partialorder %v1902, 0.0
        %vm3990 = vcmp.gt.f32.partialorder %v1903, 0.0
        %vm3991 = vcmp.gt.f32.partialorder %v1904, 0.0
        %vm3992 = vcmp.gt.f32.partialorder %v1905, 0.0
        %vm3993 = vcmp.gt.f32.partialorder %v1906, 0.0
        %vm3994 = vcmp.gt.f32.partialorder %v1907, 0.0
        %vm3995 = vcmp.gt.f32.partialorder %v1908, 0.0
        %vm3996 = vcmp.gt.f32.partialorder %v1909, 0.0
        %vm3997 = vcmp.gt.f32.partialorder %v1910, 0.0
        %v3998 = vsel %vm3966, 1, 0
        %v3999 = vsel %vm3967, 1, 0
        %v4000 = vsel %vm3968, 1, 0
        %v4001 = vsel %vm3969, 1, 0
        %v4002 = vsel %vm3970, 1, 0
        %v4003 = vsel %vm3971, 1, 0
        %v4004 = vsel %vm3972, 1, 0
        %v4005 = vsel %vm3973, 1, 0
        %v4006 = vsel %vm3974, 1, 0
        %v4007 = vsel %vm3975, 1, 0
        %v4008 = vsel %vm3976, 1, 0
        %v4009 = vsel %vm3977, 1, 0
        %v4010 = vsel %vm3978, 1, 0
        %v4011 = vsel %vm3979, 1, 0
        %v4012 = vsel %vm3980, 1, 0
        %v4013 = vsel %vm3981, 1, 0
        %v4014 = vsel %vm3982, 1, 0
        %v4015 = vsel %vm3983, 1, 0
        %v4016 = vsel %vm3984, 1, 0
        %v4017 = vsel %vm3985, 1, 0
        %v4018 = vsel %vm3986, 1, 0
        %v4019 = vsel %vm3987, 1, 0
        %v4020 = vsel %vm3988, 1, 0
        %v4021 = vsel %vm3989, 1, 0
        %v4022 = vsel %vm3990, 1, 0
        %v4023 = vsel %vm3991, 1, 0
        %v4024 = vsel %vm3992, 1, 0
        %v4025 = vsel %vm3993, 1, 0
        %v4026 = vsel %vm3994, 1, 0
        %v4027 = vsel %vm3995, 1, 0
        %v4028 = vsel %vm3996, 1, 0
        %v4029 = vsel %vm3997, 1, 0
        %v4030 = vcvt.s32.f32 %v3998
        %v4031 = vcvt.s32.f32 %v3999
        %v4032 = vcvt.s32.f32 %v4000
        %v4033 = vcvt.s32.f32 %v4001
        %v4034 = vcvt.s32.f32 %v4002
        %v4035 = vcvt.s32.f32 %v4003
        %v4036 = vcvt.s32.f32 %v4004
        %v4037 = vcvt.s32.f32 %v4005
        %v4038 = vcvt.s32.f32 %v4006
        %v4039 = vcvt.s32.f32 %v4007
        %v4040 = vcvt.s32.f32 %v4008
        %v4041 = vcvt.s32.f32 %v4009
        %v4042 = vcvt.s32.f32 %v4010
        %v4043 = vcvt.s32.f32 %v4011
        %v4044 = vcvt.s32.f32 %v4012
        %v4045 = vcvt.s32.f32 %v4013
        %v4046 = vcvt.s32.f32 %v4014
        %v4047 = vcvt.s32.f32 %v4015
        %v4048 = vcvt.s32.f32 %v4016
        %v4049 = vcvt.s32.f32 %v4017
        %v4050 = vcvt.s32.f32 %v4018
        %v4051 = vcvt.s32.f32 %v4019
        %v4052 = vcvt.s32.f32 %v4020
        %v4053 = vcvt.s32.f32 %v4021
        %v4054 = vcvt.s32.f32 %v4022
        %v4055 = vcvt.s32.f32 %v4023
        %v4056 = vcvt.s32.f32 %v4024
        %v4057 = vcvt.s32.f32 %v4025
        %v4058 = vcvt.s32.f32 %v4026
        %v4059 = vcvt.s32.f32 %v4027
        %v4060 = vcvt.s32.f32 %v4028
        %v4061 = vcvt.s32.f32 %v4029
        %v4062 = vadd.f32 %v4030, %v4031
        %v4063 = vadd.f32 %v4062, %v4032
        %v4064 = vadd.f32 %v4063, %v4033
        %v4065 = vadd.f32 %v4064, %v4034
        %v4066 = vadd.f32 %v4065, %v4035
        %v4067 = vadd.f32 %v4066, %v4036
        %v4068 = vadd.f32 %v4067, %v4037
        %v4069 = vadd.f32 %v4068, %v4038
        %v4070 = vadd.f32 %v4069, %v4039
        %v4071 = vadd.f32 %v4070, %v4040
        %v4072 = vadd.f32 %v4071, %v4041
        %v4073 = vadd.f32 %v4072, %v4042
        %v4074 = vadd.f32 %v4073, %v4043
        %v4075 = vadd.f32 %v4074, %v4044
        %v4076 = vadd.f32 %v4075, %v4045
        %v4077 = vadd.f32 %v4076, %v4046
        %v4078 = vadd.f32 %v4077, %v4047
        %v4079 = vadd.f32 %v4078, %v4048
        %v4080 = vadd.f32 %v4079, %v4049
        %v4081 = vadd.f32 %v4080, %v4050
        %v4082 = vadd.f32 %v4081, %v4051
        %v4083 = vadd.f32 %v4082, %v4052
        %v4084 = vadd.f32 %v4083, %v4053
        %v4085 = vadd.f32 %v4084, %v4054
        %v4086 = vadd.f32 %v4085, %v4055
        %v4087 = vadd.f32 %v4086, %v4056
        %v4088 = vadd.f32 %v4087, %v4057
        %v4089 = vadd.f32 %v4088, %v4058
        %v4090 = vadd.f32 %v4089, %v4059
        %v4091 = vadd.f32 %v4090, %v4060
        %v4092 = vadd.f32 %v4091, %v4061
        %4093 = vadd.xlane.f32.xlu0 %v4092
        %v4094 = vpop.xlane.xlu0 %4093
        %v4095 = vrot.slane %v4094, 4
        %v4096 = vadd.f32 %v4094, %v4095
        %v4097 = vrot.slane %v4096, 2
        %v4098 = vadd.f32 %v4096, %v4097
        %v4099 = vrot.slane %v4098, 1
        %v4100 = vadd.f32 %v4098, %v4099
        %s4101 = vtos %v4100
        %v4102 = vlaneseq
        %v4103 = vand.u32 %v4102, 127
        %vm4104 = vcmp.eq.s32.totalorder %v4103, 0
        %v4105 = vstv %s3005
        %v4106 = vsel %vm4104, %v4105, 0.0
        %v4107 = vadd.f32 %v4106, 0.0
        %vm4108 = vcmp.eq.s32.totalorder %v4103, 1
        %v4109 = vstv %s3109
        %v4110 = vsel %vm4108, %v4109, 0.0
        %v4111 = vadd.f32 %v4107, %v4110
        %vm4112 = vcmp.eq.s32.totalorder %v4103, 2
        %v4113 = vstv %s3373
        %v4114 = vsel %vm4112, %v4113, 0.0
        %v4115 = vadd.f32 %v4111, %v4114
        %vm4116 = vcmp.eq.s32.totalorder %v4103, 3
        %v4117 = vstv %s3445
        %v4118 = vsel %vm4116, %v4117, 0.0
        %v4119 = vadd.f32 %v4115, %v4118
        %vm4120 = vcmp.eq.s32.totalorder %v4103, 4
        %v4121 = vstv %s3965
        %v4122 = vsel %vm4120, %v4121, 0.0
        %v4123 = vadd.f32 %v4119, %v4122
        %vm4124 = vcmp.eq.s32.totalorder %v4103, 5
        %v4125 = vstv %s4101
        %v4126 = vsel %vm4124, %v4125, 0.0
        %v4127 = vadd.f32 %v4123, %v4126
        %4128 = vst [vmem:[%s550] sm:$0x1] %v4127
        %s4129 = sand.u32 %s241, 1
        %s4130 = scalar_lea.sflag [#allocation4], %s4129
        %s4131 = sand.u32 %s241, 1
        %s4132 = smul.addr %s4131, 256
        %s4133 = scalar_lea.vmem [#allocation11], %s4132
        %s4134 = sand.u32 %s39, 1
        %s4135 = scalar_lea.sflag [#allocation13], %s4134
        %s4136 = sand.u32 %s267, 1
        %s4137 = smul.addr %s4136, 256
        %s4138 = scalar_lea.vmem [#allocation12], %s4137
        %s4139 = sand.u32 %s39, 1
        %s4140 = scalar_lea.sflag [#allocation13], %s4139
        %s4141 = sand.u32 %s293, 1
        %s4142 = smul.addr %s4141, 1024
        %s4143 = scalar_lea.vmem [#allocation14], %s4142
        %s4144 = sand.u32 %s39, 1
        %s4145 = scalar_lea.sflag [#allocation16], %s4144
        %s4146 = sand.u32 %s319, 1
        %s4147 = smul.addr %s4146, 256
        %s4148 = scalar_lea.vmem [#allocation15], %s4147
        %s4149 = sand.u32 %s39, 1
        %s4150 = scalar_lea.sflag [#allocation16], %s4149
        %s4151 = sand.u32 %s345, 1
        %s4152 = scalar_lea.vmem [#allocation17], %s4151
        // Predicated region
        $region77: #{tpu_custom_call.1} parent=55 // pred_check
          %p4153 = pneg %p251
        $region78: #{tpu_custom_call.1} parent=55 // pred_check_branch
          %4155 = sbr.rel (%p4153) target = $region80
        $region79: #{tpu_custom_call.1} parent=55 // pred_region
          %s4156 = smul.u32 32, %s39
          %s4158 = ssub.s32 4096, 4096
          %4159 = vsyncadd %s4130, %s4158
          %s4160 = smul.addr %s4156, 128
          %s4161 = scalar_lea.hbm %s9, %s4160
          %s4162 = sshll.u32 %s4133, 4
          %s4163 = int_to_ptr.vmem [resolvable:$true] %s4162
          %4168 = dma.vmem_to_hbm [thread:$0]  %s4163, 4096, %s4161, %s4130, 128, 128, 8
        $region80: #{tpu_custom_call.1} parent=55 // pred_fallthru
          _
        // Predicated region
        $region81: #{tpu_custom_call.1} parent=55 // pred_check
          %p4169 = pneg %p277
        $region82: #{tpu_custom_call.1} parent=55 // pred_check_branch
          %4171 = sbr.rel (%p4169) target = $region84
        $region83: #{tpu_custom_call.1} parent=55 // pred_region
          %s4172 = smul.u32 32, %s39
          %s4174 = ssub.s32 4096, 4096
          %4175 = vsyncadd %s4135, %s4174
          %s4176 = smul.addr %s4172, 128
          %s4177 = scalar_lea.hbm %s10, %s4176
          %s4178 = sshll.u32 %s4138, 4
          %s4179 = int_to_ptr.vmem [resolvable:$true] %s4178
          %4184 = dma.vmem_to_hbm [thread:$0]  %s4179, 4096, %s4177, %s4135, 128, 128, 8
        $region84: #{tpu_custom_call.1} parent=55 // pred_fallthru
          _
        // Predicated region
        $region85: #{tpu_custom_call.1} parent=55 // pred_check
          %p4185 = pneg %p303
        $region86: #{tpu_custom_call.1} parent=55 // pred_check_branch
          %4187 = sbr.rel (%p4185) target = $region88
        $region87: #{tpu_custom_call.1} parent=55 // pred_region
          %s4188 = smul.u32 32, %s39
          %s4190 = ssub.s32 16384, 16384
          %4191 = vsyncadd %s4140, %s4190
          %s4192 = smul.addr %s4188, 4
          %s4193 = smul.addr %s4192, 128
          %s4194 = scalar_lea.hbm %s11, %s4193
          %s4195 = sshll.u32 %s4143, 4
          %s4196 = int_to_ptr.vmem [resolvable:$true] %s4195
          %4201 = dma.vmem_to_hbm [thread:$0]  %s4196, 16384, %s4194, %s4140, 512, 512, 32
        $region88: #{tpu_custom_call.1} parent=55 // pred_fallthru
          _
        // Predicated region
        $region89: #{tpu_custom_call.1} parent=55 // pred_check
          %p4202 = pneg %p329
        $region90: #{tpu_custom_call.1} parent=55 // pred_check_branch
          %4204 = sbr.rel (%p4202) target = $region92
        $region91: #{tpu_custom_call.1} parent=55 // pred_region
          %s4205 = smul.u32 32, %s39
          %s4207 = ssub.s32 4096, 4096
          %4208 = vsyncadd %s4145, %s4207
          %s4209 = smul.addr %s4205, 128
          %s4210 = scalar_lea.hbm %s12, %s4209
          %s4211 = sshll.u32 %s4148, 4
          %s4212 = int_to_ptr.vmem [resolvable:$true] %s4211
          %4217 = dma.vmem_to_hbm [thread:$0]  %s4212, 4096, %s4210, %s4145, 128, 128, 8
        $region92: #{tpu_custom_call.1} parent=55 // pred_fallthru
          _
        // Predicated region
        $region93: #{tpu_custom_call.1} parent=55 // pred_check
          %p4218 = pneg %p355
        $region94: #{tpu_custom_call.1} parent=55 // pred_check_branch
          %4220 = sbr.rel (%p4218) target = $region96
        $region95: #{tpu_custom_call.1} parent=55 // pred_region
          %s4222 = ssub.s32 16, 16
          %4223 = vsyncadd %s4150, %s4222
          %s4224 = smul.addr %s39, 16
          %s4225 = scalar_lea.hbm %s13, %s4224
          %s4227 = sshll.u32 %s4152, 4
          %s4228 = int_to_ptr.vmem [resolvable:$true] %s4227
          %4230 = dma.vmem_to_hbm [thread:$0]  %s4228, 16, %s4225, %s4150
        $region96: #{tpu_custom_call.1} parent=55 // pred_fallthru
          _
      $region56: #{tpu_custom_call.1} parent=5 // pred_fallthru
        _
      %p4231 = scmp.le.s32.totalorder 2, %s34
      // Predicated region
      $region97: #{tpu_custom_call.1} parent=5 // pred_check
        %p4232 = pneg %p4231
      $region98: #{tpu_custom_call.1} parent=5 // pred_check_branch
        %4234 = sbr.rel (%p4232) target = $region100
      $region99: #{tpu_custom_call.1} parent=5 // pred_region
        %s4235 = ssub.s32 %s34, 2
        // Predicated region
        $region101: #{tpu_custom_call.1} parent=99 // pred_check
          %p4236 = pneg %p257
        $region102: #{tpu_custom_call.1} parent=99 // pred_check_branch
          %4238 = sbr.rel (%p4236) target = $region104
        $region103: #{tpu_custom_call.1} parent=99 // pred_region
          %s4239 = sand.u32 %s242, 1
          %s4240 = scalar_lea.sflag [#allocation4], %s4239
          %s4241 = sand.u32 %s242, 1
          %s4242 = smul.addr %s4241, 256
          %s4243 = scalar_lea.vmem [#allocation11], %s4242
          %4244 = dma.done %s4240, 4096
        $region104: #{tpu_custom_call.1} parent=99 // pred_fallthru
          _
        // Predicated region
        $region105: #{tpu_custom_call.1} parent=99 // pred_check
          %p4245 = pneg %p283
        $region106: #{tpu_custom_call.1} parent=99 // pred_check_branch
          %4247 = sbr.rel (%p4245) target = $region108
        $region107: #{tpu_custom_call.1} parent=99 // pred_region
          %s4248 = sand.u32 %s40, 1
          %s4249 = scalar_lea.sflag [#allocation13], %s4248
          %s4250 = sand.u32 %s268, 1
          %s4251 = smul.addr %s4250, 256
          %s4252 = scalar_lea.vmem [#allocation12], %s4251
          %4253 = dma.done %s4249, 4096
        $region108: #{tpu_custom_call.1} parent=99 // pred_fallthru
          _
        // Predicated region
        $region109: #{tpu_custom_call.1} parent=99 // pred_check
          %p4254 = pneg %p309
        $region110: #{tpu_custom_call.1} parent=99 // pred_check_branch
          %4256 = sbr.rel (%p4254) target = $region112
        $region111: #{tpu_custom_call.1} parent=99 // pred_region
          %s4257 = sand.u32 %s40, 1
          %s4258 = scalar_lea.sflag [#allocation13], %s4257
          %s4259 = sand.u32 %s294, 1
          %s4260 = smul.addr %s4259, 1024
          %s4261 = scalar_lea.vmem [#allocation14], %s4260
          %4262 = dma.done %s4258, 16384
        $region112: #{tpu_custom_call.1} parent=99 // pred_fallthru
          _
        // Predicated region
        $region113: #{tpu_custom_call.1} parent=99 // pred_check
          %p4263 = pneg %p335
        $region114: #{tpu_custom_call.1} parent=99 // pred_check_branch
          %4265 = sbr.rel (%p4263) target = $region116
        $region115: #{tpu_custom_call.1} parent=99 // pred_region
          %s4266 = sand.u32 %s40, 1
          %s4267 = scalar_lea.sflag [#allocation16], %s4266
          %s4268 = sand.u32 %s320, 1
          %s4269 = smul.addr %s4268, 256
          %s4270 = scalar_lea.vmem [#allocation15], %s4269
          %4271 = dma.done %s4267, 4096
        $region116: #{tpu_custom_call.1} parent=99 // pred_fallthru
          _
        // Predicated region
        $region117: #{tpu_custom_call.1} parent=99 // pred_check
          %p4272 = pneg %p361
        $region118: #{tpu_custom_call.1} parent=99 // pred_check_branch
          %4274 = sbr.rel (%p4272) target = $region120
        $region119: #{tpu_custom_call.1} parent=99 // pred_region
          %s4275 = sand.u32 %s40, 1
          %s4276 = scalar_lea.sflag [#allocation16], %s4275
          %s4277 = sand.u32 %s346, 1
          %s4278 = scalar_lea.vmem [#allocation17], %s4277
          %4279 = dma.done %s4276, 16
        $region120: #{tpu_custom_call.1} parent=99 // pred_fallthru
          _
      $region100: #{tpu_custom_call.1} parent=5 // pred_fallthru
        _
    $region6: #{tpu_custom_call.1} parent=1 // loop_footer
      %s38 = sadd.s32 1, %s34
    $region7: #{tpu_custom_call.1} parent=1 // loop_footer_branch
      %33 = sbr.rel target = $region3
    $region8: #{tpu_custom_call.1} parent=1 // loop_exit
      _
    %4280 = vsyncpa [#allocation3], 1
    %s4281 = scalar_lea.sflag [#allocation3], 1
    %4282 = vsyncpa %s4281, 1
    %4283 = vsyncpa [#allocation6], 1
    %4284 = vsyncpa [#allocation9], 1
    %4285 = vsyncpa [#allocation4], 1
    %s4286 = scalar_lea.sflag [#allocation4], 1
    %4287 = vsyncpa %s4286, 1
    %4288 = vsyncpa [#allocation13], 1
    %s4289 = scalar_lea.sflag [#allocation13], 1
    %4290 = vsyncpa %s4289, 1
    %4291 = vsyncpa [#allocation16], 1
    %s4292 = scalar_lea.sflag [#allocation16], 1
    %4293 = vsyncpa %s4292, 1

</llo_original>
